<compile_context>
chip_gen: v5e
topology: v5e:2x2
jax: 0.10.0
libtpu: 0.0.40
codegen_flags: <defaults>
</compile_context>

<pallas_src>
import functools
import math

import jax
import jax.numpy as jnp
from jax import lax
from jax.experimental import pallas as pl
from jax.experimental.pallas import tpu as pltpu


_INV_SQRT2 = 0.7071067811865476
_NEG_INF = -1e30  # finite negative: NaN-safe vs true -inf (diag always unmasked)


# ------------------------------ in-kernel helpers ----------------------------

def _layernorm(x, gamma, beta, eps=1e-5):
    mu = jnp.mean(x, axis=-1, keepdims=True)
    var = jnp.mean((x - mu) ** 2, axis=-1, keepdims=True)   # biased, like torch
    return (x - mu) * lax.rsqrt(var + eps) * gamma + beta


def _gelu_exact(x):
    # exact erf GELU to bit-match torch.nn.GELU() default.
    # TODO(synk): tanh-approx GELU (EUP) is faster if VALU-bound, but changes
    # numerics vs the PyTorch reference, so keep exact erf.
    return 0.5 * x * (1.0 + lax.erf(x * _INV_SQRT2))


# ----------------------------- Pallas kernels --------------------------------

def _embed_kernel(s_ref, a_ref, b_ref, pe_ref,
                  ws_ref, bs_ref, wa_ref, ba_ref, wb_ref, bb_ref,
                  lng_ref, lnb_ref, o_ref):
    """One batch element per grid step.

    Fuses: 3 modality embeddings (bf16 MXU, f32 accum) + positional encoding +
    token interleave + embed LayerNorm.  Output layout is (1, T, 3, h) so the
    (B, 3T, h) interleaved sequence is a free contiguous reshape outside.
    """
    pe = pe_ref[...]                     # (T, h) f32
    gamma = lng_ref[...]
    beta = lnb_ref[...]

    def embed(x_ref, w_ref, b_ref):
        e = jnp.dot(x_ref[0].astype(jnp.bfloat16), w_ref[...],
                    preferred_element_type=jnp.float32) + b_ref[...] + pe
        return _layernorm(e, gamma, beta)

    # interleave order (state, body, action) -> seq = s0, b0, a0, s1, b1, a1, ...
    o_ref[0, :, 0, :] = embed(s_ref, ws_ref, bs_ref)
    o_ref[0, :, 1, :] = embed(b_ref, wb_ref, bb_ref)
    o_ref[0, :, 2, :] = embed(a_ref, wa_ref, ba_ref)


def _block_kernel(x_ref, wqkv_ref, bqkv_ref, wproj_ref, bproj_ref,
                  ln1g_ref, ln1b_ref, w1_ref, b1_ref, w2_ref, b2_ref,
                  ln2g_ref, ln2b_ref, o_ref, *, n_heads):
    """One full transformer block for one batch element per grid step."""
    x = x_ref[0]                              # (S, H) f32
    S, H = x.shape
    D = H // n_heads

    # fused Q/K/V projection: single (S,H) @ (H,3H) bf16 matmul, f32 accum
    qkv = jnp.dot(x.astype(jnp.bfloat16), wqkv_ref[...],
                  preferred_element_type=jnp.float32) + bqkv_ref[...]
    q = qkv[:, 0:H] * (1.0 / math.sqrt(D))    # pre-scale q (S*D mul, not S*S div)
    k = qkv[:, H:2 * H]
    v = qkv[:, 2 * H:3 * H]

    row = lax.broadcasted_iota(jnp.int32, (S, S), 0)
    col = lax.broadcasted_iota(jnp.int32, (S, S), 1)
    causal = col <= row

    head_outs = []
    for hd in range(n_heads):                 # all heads of this batch in-kernel
        sl = slice(hd * D, (hd + 1) * D)
        qh = q[:, sl].astype(jnp.bfloat16)
        kh_t = k[:, sl].T.astype(jnp.bfloat16)        # (D, S)
        vh = v[:, sl].astype(jnp.bfloat16)
        scores = jnp.dot(qh, kh_t, preferred_element_type=jnp.float32)
        scores = jnp.where(causal, scores, _NEG_INF)
        m = jnp.max(scores, axis=-1, keepdims=True)
        p = jnp.exp(scores - m)
        p = p * pl.reciprocal(jnp.sum(p, axis=-1, keepdims=True), approx=True)
        head_outs.append(jnp.dot(p.astype(jnp.bfloat16), vh,
                                 preferred_element_type=jnp.float32))
    att = jnp.concatenate(head_outs, axis=-1)          # (S, H)

    # output projection + residual + LN1
    x1 = x + jnp.dot(att.astype(jnp.bfloat16), wproj_ref[...],
                     preferred_element_type=jnp.float32) + bproj_ref[...]
    x1 = _layernorm(x1, ln1g_ref[...], ln1b_ref[...])

    # fused MLP: fc1 + GELU + fc2 — 4H intermediate stays in VMEM
    hmid = jnp.dot(x1.astype(jnp.bfloat16), w1_ref[...],
                   preferred_element_type=jnp.float32) + b1_ref[...]
    hmid = _gelu_exact(hmid)
    x2 = x1 + jnp.dot(hmid.astype(jnp.bfloat16), w2_ref[...],
                      preferred_element_type=jnp.float32) + b2_ref[...]
    o_ref[0] = _layernorm(x2, ln2g_ref[...], ln2b_ref[...])


def _heads_kernel(x_ref, ws_ref, bs_ref, wa_ref, ba_ref, wb_ref, bb_ref,
                  sp_ref, ap_ref, bp_ref):
    """Fused prediction heads; de-interleave tokens with in-kernel indexing."""
    s_tok = x_ref[0, :, 0, :]     # state tokens
    b_tok = x_ref[0, :, 1, :]     # body tokens
    a_tok = x_ref[0, :, 2, :]     # action tokens
    # token -> head mapping matches the PyTorch reference:
    #   predict_state(h[:,2]=action tokens), predict_action(h[:,1]=body tokens),
    #   predict_body(h[:,0]=state tokens)
    sp_ref[0] = jnp.dot(a_tok.astype(jnp.bfloat16), ws_ref[...],
                        preferred_element_type=jnp.float32) + bs_ref[...]
    ap_ref[0] = jnp.dot(b_tok.astype(jnp.bfloat16), wa_ref[...],
                        preferred_element_type=jnp.float32) + ba_ref[...]
    bp_ref[0] = jnp.dot(s_tok.astype(jnp.bfloat16), wb_ref[...],
                        preferred_element_type=jnp.float32) + bb_ref[...]


# ----------------------------- kernel wrappers --------------------------------

def _bcast_spec(arr):
    """Full-array block, same block for every grid step (kept VMEM-resident)."""
    zeros = (0,) * arr.ndim
    return pl.BlockSpec(arr.shape, lambda b: zeros)


def embed_call(params, states, actions, bodies, pe):
    B, T, _ = states.shape
    h_dim = params["h_dim"]
    ws, bs = params["embed_state"]
    wa, ba = params["embed_action"]
    wb, bb = params["embed_body"]
    lng, lnb = params["embed_ln"]
    args = (states, actions, bodies, pe, ws, bs, wa, ba, wb, bb, lng, lnb)
    in_specs = [
        pl.BlockSpec((1, T, states.shape[-1]), lambda b: (b, 0, 0)),
        pl.BlockSpec((1, T, actions.shape[-1]), lambda b: (b, 0, 0)),
        pl.BlockSpec((1, T, bodies.shape[-1]), lambda b: (b, 0, 0)),
    ] + [_bcast_spec(a) for a in args[3:]]
    return pl.pallas_call(
        _embed_kernel,
        out_shape=jax.ShapeDtypeStruct((B, T, 3, h_dim), jnp.float32),
        grid=(B,),
        in_specs=in_specs,
        out_specs=pl.BlockSpec((1, T, 3, h_dim), lambda b: (b, 0, 0, 0)),
        compiler_params=pltpu.CompilerParams(
            dimension_semantics=("parallel",)),
    )(*args)


def block_call(blk, h, n_heads):
    B, S, H = h.shape
    kernel = functools.partial(_block_kernel, n_heads=n_heads)
    args = (h, blk["wqkv"], blk["bqkv"], blk["wproj"], blk["bproj"],
            blk["ln1g"], blk["ln1b"], blk["w1"], blk["b1"],
            blk["w2"], blk["b2"], blk["ln2g"], blk["ln2b"])
    in_specs = [pl.BlockSpec((1, S, H), lambda b: (b, 0, 0))]
    in_specs += [_bcast_spec(a) for a in args[1:]]
    return pl.pallas_call(
        kernel,
        out_shape=jax.ShapeDtypeStruct((B, S, H), jnp.float32),
        grid=(B,),
        in_specs=in_specs,
        out_specs=pl.BlockSpec((1, S, H), lambda b: (b, 0, 0)),
        compiler_params=pltpu.CompilerParams(
            dimension_semantics=("parallel",)),
    )(*args)


def heads_call(params, h4):
    B, T, _, H = h4.shape
    ws, bs = params["predict_state"]
    wa, ba = params["predict_action"]
    wb, bb = params["predict_body"]
    args = (h4, ws, bs, wa, ba, wb, bb)
    in_specs = [pl.BlockSpec((1, T, 3, H), lambda b: (b, 0, 0, 0))]
    in_specs += [_bcast_spec(a) for a in args[1:]]
    out_dims = (ws.shape[1], wa.shape[1], wb.shape[1])
    out_shape = tuple(jax.ShapeDtypeStruct((B, T, d), jnp.float32)
                      for d in out_dims)
    out_specs = tuple(pl.BlockSpec((1, T, d), lambda b: (b, 0, 0))
                      for d in out_dims)
    return pl.pallas_call(
        _heads_kernel,
        out_shape=out_shape,
        grid=(B,),
        in_specs=in_specs,
        out_specs=out_specs,
        compiler_params=pltpu.CompilerParams(
            dimension_semantics=("parallel",)),
    )(*args)


# ------------------------------ parameter setup --------------------------------

def positional_table(max_len, d_model):
    pos = jnp.arange(max_len, dtype=jnp.float32)[:, None]
    div = jnp.exp(jnp.arange(0, d_model, 2, dtype=jnp.float32)
                  * (-math.log(10000.0) / d_model))
    pe = jnp.zeros((max_len, d_model), jnp.float32)
    pe = pe.at[:, 0::2].set(jnp.sin(pos * div))
    pe = pe.at[:, 1::2].set(jnp.cos(pos * div))
    return pe


def make_params(key, body_dim, state_dim, act_dim, n_blocks, h_dim,
                n_heads, pe_len):
    assert h_dim % n_heads == 0
    state = {"key": key}

    def nxt():
        state["key"], sub = jax.random.split(state["key"])
        return sub

    def init_linear(in_dim, out_dim):
        # torch.nn.Linear-style init; weights stored bf16 (MXU operand dtype),
        # biases kept f32 for exact accumulation.
        bound = 1.0 / math.sqrt(in_dim)
        w = jax.random.uniform(nxt(), (in_dim, out_dim), jnp.float32,
                               -bound, bound).astype(jnp.bfloat16)
        b = jax.random.uniform(nxt(), (1, out_dim), jnp.float32, -bound, bound)
        return w, b

    def init_ln(dim):
        return (jnp.ones((1, dim), jnp.float32),
                jnp.zeros((1, dim), jnp.float32))

    params = {
        "h_dim": h_dim,
        "n_heads": n_heads,
        "pe": positional_table(pe_len, h_dim),
        "embed_state": init_linear(state_dim, h_dim),
        "embed_action": init_linear(act_dim, h_dim),
        "embed_body": init_linear(body_dim, h_dim),
        "embed_ln": init_ln(h_dim),
        "predict_state": init_linear(h_dim, state_dim),
        "predict_action": init_linear(h_dim, act_dim),
        "predict_body": init_linear(h_dim, body_dim),
        "blocks": [],
    }
    for _ in range(n_blocks):
        wq, bq = init_linear(h_dim, h_dim)
        wk, bk = init_linear(h_dim, h_dim)
        wv, bv = init_linear(h_dim, h_dim)
        wproj, bproj = init_linear(h_dim, h_dim)
        w1, b1 = init_linear(h_dim, 4 * h_dim)
        w2, b2 = init_linear(4 * h_dim, h_dim)
        ln1g, ln1b = init_ln(h_dim)
        ln2g, ln2b = init_ln(h_dim)
        params["blocks"].append({
            # fused QKV projection weight (h, 3h) / bias (1, 3h)
            "wqkv": jnp.concatenate([wq, wk, wv], axis=1),
            "bqkv": jnp.concatenate([bq, bk, bv], axis=1),
            "wproj": wproj, "bproj": bproj,
            "ln1g": ln1g, "ln1b": ln1b,
            "w1": w1, "b1": b1, "w2": w2, "b2": b2,
            "ln2g": ln2g, "ln2b": ln2b,
        })
    return params


# ------------------------------- forward pass ----------------------------------

def adapt_forward(params, states, actions, bodies):
    B, T, _ = states.shape
    h_dim = params["h_dim"]
    n_heads = params["n_heads"]
    S = 3 * T
    pe = params["pe"][:T]

    # fused embed + PE + interleave + embed LayerNorm -> (B, T, 3, h)
    h4 = embed_call(params, states, actions, bodies, pe)
    # interleaved sequence (s_t, b_t, a_t, ...): contiguous reshape, no copy
    h = h4.reshape(B, S, h_dim)

    # one fused pallas_call per transformer block
    for blk in params["blocks"]:
        h = block_call(blk, h, n_heads)

    # fused prediction heads (de-interleave inside the kernel)
    return heads_call(params, h.reshape(B, T, 3, h_dim))


# ----------------------------------- main ---------------------------------------

if __name__ == "__main__":
    body_dim, state_dim, act_dim = 5, 11, 3
    n_blocks, h_dim, context_len, n_heads = 2, 32, 8, 2
    B, T = 2, context_len

    key = jax.random.PRNGKey(0)
    pkey, skey, akey, bkey = jax.random.split(key, 4)

    params = make_params(pkey, body_dim, state_dim, act_dim,
                         n_blocks, h_dim, n_heads, pe_len=64)

    states = jax.random.normal(skey, (B, T, state_dim), jnp.float32)
    actions = jax.random.normal(akey, (B, T, act_dim), jnp.float32)
    bodies = jax.random.normal(bkey, (B, T, body_dim), jnp.float32)

    fwd = jax.jit(functools.partial(adapt_forward, params))
    state_preds, action_preds, body_preds = fwd(states, actions, bodies)
    jax.block_until_ready((state_preds, action_preds, body_preds))

    assert state_preds.shape == (B, T, state_dim)
    assert action_preds.shape == (B, T, act_dim)
    assert body_preds.shape == (B, T, body_dim)
    assert bool(jnp.all(jnp.isfinite(state_preds)))
    assert bool(jnp.all(jnp.isfinite(action_preds)))
    assert bool(jnp.all(jnp.isfinite(body_preds)))
    print("KERNEL_OK")
</pallas_src>

<mosaic_0001>
module attributes {stable_mosaic.version = 11 : i64} {
  func.func @_embed_kernel(%arg0: i32, %arg1: memref<1x8x11xf32, #tpu.memory_space<vmem>>, %arg2: memref<1x8x3xf32, #tpu.memory_space<vmem>>, %arg3: memref<1x8x5xf32, #tpu.memory_space<vmem>>, %arg4: memref<8x32xf32, #tpu.memory_space<vmem>>, %arg5: memref<11x32xbf16, #tpu.memory_space<vmem>>, %arg6: memref<1x32xf32, #tpu.memory_space<vmem>>, %arg7: memref<3x32xbf16, #tpu.memory_space<vmem>>, %arg8: memref<1x32xf32, #tpu.memory_space<vmem>>, %arg9: memref<5x32xbf16, #tpu.memory_space<vmem>>, %arg10: memref<1x32xf32, #tpu.memory_space<vmem>>, %arg11: memref<1x32xf32, #tpu.memory_space<vmem>>, %arg12: memref<1x32xf32, #tpu.memory_space<vmem>>, %arg13: memref<1x8x3x32xf32, #tpu.memory_space<vmem>>) attributes {dimension_semantics = [#tpu.dimension_semantics<parallel>], iteration_bounds = array<i64: 2>, scalar_prefetch = 0 : i64, scratch_operands = 0 : i64, tpu.core_type = #tpu.core_type<tc>, window_params = [{transform_indices = @transform_0, window_bounds = array<i64: 1, 8, 11>}, {transform_indices = @transform_1, window_bounds = array<i64: 1, 8, 3>}, {transform_indices = @transform_2, window_bounds = array<i64: 1, 8, 5>}, {pipeline_mode = #tpu.pipeline_mode<synchronous>, transform_indices = @transform_3, window_bounds = array<i64: 8, 32>}, {pipeline_mode = #tpu.pipeline_mode<synchronous>, transform_indices = @transform_4, window_bounds = array<i64: 11, 32>}, {pipeline_mode = #tpu.pipeline_mode<synchronous>, transform_indices = @transform_5, window_bounds = array<i64: 1, 32>}, {pipeline_mode = #tpu.pipeline_mode<synchronous>, transform_indices = @transform_6, window_bounds = array<i64: 3, 32>}, {pipeline_mode = #tpu.pipeline_mode<synchronous>, transform_indices = @transform_7, window_bounds = array<i64: 1, 32>}, {pipeline_mode = #tpu.pipeline_mode<synchronous>, transform_indices = @transform_8, window_bounds = array<i64: 5, 32>}, {pipeline_mode = #tpu.pipeline_mode<synchronous>, transform_indices = @transform_9, window_bounds = array<i64: 1, 32>}, {pipeline_mode = #tpu.pipeline_mode<synchronous>, transform_indices = @transform_10, window_bounds = array<i64: 1, 32>}, {pipeline_mode = #tpu.pipeline_mode<synchronous>, transform_indices = @transform_11, window_bounds = array<i64: 1, 32>}, {transform_indices = @transform_12, window_bounds = array<i64: 1, 8, 3, 32>}]} {
    %c0 = arith.constant 0 : index
    %c0_0 = arith.constant 0 : index
    %0 = vector.load %arg4[%c0, %c0_0] : memref<8x32xf32, #tpu.memory_space<vmem>>, vector<8x32xf32>
    %c0_1 = arith.constant 0 : index
    %c0_2 = arith.constant 0 : index
    %1 = vector.load %arg11[%c0_1, %c0_2] : memref<1x32xf32, #tpu.memory_space<vmem>>, vector<1x32xf32>
    %c0_3 = arith.constant 0 : index
    %c0_4 = arith.constant 0 : index
    %2 = vector.load %arg12[%c0_3, %c0_4] : memref<1x32xf32, #tpu.memory_space<vmem>>, vector<1x32xf32>
    %c0_5 = arith.constant 0 : index
    %c0_6 = arith.constant 0 : index
    %c0_7 = arith.constant 0 : index
    %3 = vector.load %arg1[%c0_5, %c0_6, %c0_7] : memref<1x8x11xf32, #tpu.memory_space<vmem>>, vector<1x8x11xf32>
    %4 = vector.shape_cast %3 : vector<1x8x11xf32> to vector<8x11xf32>
    %5 = arith.truncf %4 : vector<8x11xf32> to vector<8x11xbf16>
    %c0_8 = arith.constant 0 : index
    %c0_9 = arith.constant 0 : index
    %6 = vector.load %arg5[%c0_8, %c0_9] : memref<11x32xbf16, #tpu.memory_space<vmem>>, vector<11x32xbf16>
    %cst = arith.constant dense<0.000000e+00> : vector<8x32xf32>
    %7 = tpu.matmul %5, %6, %cst {dimension_numbers = #tpu.dot_dimension_numbers<[1], [0], [0], [1], [0, 0, 1, 1], [], []>} : vector<8x11xbf16>, vector<11x32xbf16>, vector<8x32xf32> -> vector<8x32xf32>
    %c0_10 = arith.constant 0 : index
    %c0_11 = arith.constant 0 : index
    %8 = vector.load %arg6[%c0_10, %c0_11] : memref<1x32xf32, #tpu.memory_space<vmem>>, vector<1x32xf32>
    %9 = vector.broadcast %8 : vector<1x32xf32> to vector<8x32xf32>
    %10 = arith.addf %7, %9 : vector<8x32xf32>
    %11 = arith.addf %10, %0 : vector<8x32xf32>
    %cst_12 = arith.constant dense<0.000000e+00> : vector<8xf32>
    %12 = vector.multi_reduction <add>, %11, %cst_12 [1] : vector<8x32xf32> to vector<8xf32>
    %13 = vector.shape_cast %12 : vector<8xf32> to vector<8x1xf32>
    %cst_13 = arith.constant 3.200000e+01 : f32
    %14 = vector.broadcast %cst_13 : f32 to vector<8x1xf32>
    %15 = arith.divf %13, %14 : vector<8x1xf32>
    %16 = vector.broadcast %15 : vector<8x1xf32> to vector<8x32xf32>
    %17 = arith.subf %11, %16 : vector<8x32xf32>
    %18 = arith.mulf %17, %17 : vector<8x32xf32>
    %cst_14 = arith.constant dense<0.000000e+00> : vector<8xf32>
    %19 = vector.multi_reduction <add>, %18, %cst_14 [1] : vector<8x32xf32> to vector<8xf32>
    %20 = vector.shape_cast %19 : vector<8xf32> to vector<8x1xf32>
    %cst_15 = arith.constant 3.200000e+01 : f32
    %21 = vector.broadcast %cst_15 : f32 to vector<8x1xf32>
    %22 = arith.divf %20, %21 : vector<8x1xf32>
    %23 = vector.broadcast %15 : vector<8x1xf32> to vector<8x32xf32>
    %24 = arith.subf %11, %23 : vector<8x32xf32>
    %cst_16 = arith.constant 9.99999974E-6 : f32
    %25 = vector.broadcast %cst_16 : f32 to vector<8x1xf32>
    %26 = arith.addf %22, %25 : vector<8x1xf32>
    %27 = math.rsqrt %26 : vector<8x1xf32>
    %28 = vector.broadcast %27 : vector<8x1xf32> to vector<8x32xf32>
    %29 = arith.mulf %24, %28 : vector<8x32xf32>
    %30 = vector.broadcast %1 : vector<1x32xf32> to vector<8x32xf32>
    %31 = arith.mulf %29, %30 : vector<8x32xf32>
    %32 = vector.broadcast %2 : vector<1x32xf32> to vector<8x32xf32>
    %33 = arith.addf %31, %32 : vector<8x32xf32>
    %c0_17 = arith.constant 0 : index
    %c0_18 = arith.constant 0 : index
    %c0_19 = arith.constant 0 : index
    %c0_20 = arith.constant 0 : index
    %34 = vector.load %arg13[%c0_17, %c0_18, %c0_19, %c0_20] : memref<1x8x3x32xf32, #tpu.memory_space<vmem>>, vector<1x8x1x32xf32>
    %35 = vector.shape_cast %34 : vector<1x8x1x32xf32> to vector<8x32xf32>
    %36 = vector.shape_cast %33 : vector<8x32xf32> to vector<1x8x1x32xf32>
    tpu.vector_store %arg13[%c0_17, %c0_18, %c0_19, %c0_20], %36 {strides = array<i32>} : memref<1x8x3x32xf32, #tpu.memory_space<vmem>>, vector<1x8x1x32xf32>,
    %c0_21 = arith.constant 0 : index
    %c0_22 = arith.constant 0 : index
    %c0_23 = arith.constant 0 : index
    %37 = vector.load %arg3[%c0_21, %c0_22, %c0_23] : memref<1x8x5xf32, #tpu.memory_space<vmem>>, vector<1x8x5xf32>
    %38 = vector.shape_cast %37 : vector<1x8x5xf32> to vector<8x5xf32>
    %39 = arith.truncf %38 : vector<8x5xf32> to vector<8x5xbf16>
    %c0_24 = arith.constant 0 : index
    %c0_25 = arith.constant 0 : index
    %40 = vector.load %arg9[%c0_24, %c0_25] : memref<5x32xbf16, #tpu.memory_space<vmem>>, vector<5x32xbf16>
    %cst_26 = arith.constant dense<0.000000e+00> : vector<8x32xf32>
    %41 = tpu.matmul %39, %40, %cst_26 {dimension_numbers = #tpu.dot_dimension_numbers<[1], [0], [0], [1], [0, 0, 1, 1], [], []>} : vector<8x5xbf16>, vector<5x32xbf16>, vector<8x32xf32> -> vector<8x32xf32>
    %c0_27 = arith.constant 0 : index
    %c0_28 = arith.constant 0 : index
    %42 = vector.load %arg10[%c0_27, %c0_28] : memref<1x32xf32, #tpu.memory_space<vmem>>, vector<1x32xf32>
    %43 = vector.broadcast %42 : vector<1x32xf32> to vector<8x32xf32>
    %44 = arith.addf %41, %43 : vector<8x32xf32>
    %45 = arith.addf %44, %0 : vector<8x32xf32>
    %cst_29 = arith.constant dense<0.000000e+00> : vector<8xf32>
    %46 = vector.multi_reduction <add>, %45, %cst_29 [1] : vector<8x32xf32> to vector<8xf32>
    %47 = vector.shape_cast %46 : vector<8xf32> to vector<8x1xf32>
    %cst_30 = arith.constant 3.200000e+01 : f32
    %48 = vector.broadcast %cst_30 : f32 to vector<8x1xf32>
    %49 = arith.divf %47, %48 : vector<8x1xf32>
    %50 = vector.broadcast %49 : vector<8x1xf32> to vector<8x32xf32>
    %51 = arith.subf %45, %50 : vector<8x32xf32>
    %52 = arith.mulf %51, %51 : vector<8x32xf32>
    %cst_31 = arith.constant dense<0.000000e+00> : vector<8xf32>
    %53 = vector.multi_reduction <add>, %52, %cst_31 [1] : vector<8x32xf32> to vector<8xf32>
    %54 = vector.shape_cast %53 : vector<8xf32> to vector<8x1xf32>
    %cst_32 = arith.constant 3.200000e+01 : f32
    %55 = vector.broadcast %cst_32 : f32 to vector<8x1xf32>
    %56 = arith.divf %54, %55 : vector<8x1xf32>
    %57 = vector.broadcast %49 : vector<8x1xf32> to vector<8x32xf32>
    %58 = arith.subf %45, %57 : vector<8x32xf32>
    %cst_33 = arith.constant 9.99999974E-6 : f32
    %59 = vector.broadcast %cst_33 : f32 to vector<8x1xf32>
    %60 = arith.addf %56, %59 : vector<8x1xf32>
    %61 = math.rsqrt %60 : vector<8x1xf32>
    %62 = vector.broadcast %61 : vector<8x1xf32> to vector<8x32xf32>
    %63 = arith.mulf %58, %62 : vector<8x32xf32>
    %64 = vector.broadcast %1 : vector<1x32xf32> to vector<8x32xf32>
    %65 = arith.mulf %63, %64 : vector<8x32xf32>
    %66 = vector.broadcast %2 : vector<1x32xf32> to vector<8x32xf32>
    %67 = arith.addf %65, %66 : vector<8x32xf32>
    %c0_34 = arith.constant 0 : index
    %c0_35 = arith.constant 0 : index
    %c1 = arith.constant 1 : index
    %c0_36 = arith.constant 0 : index
    %68 = vector.load %arg13[%c0_34, %c0_35, %c1, %c0_36] : memref<1x8x3x32xf32, #tpu.memory_space<vmem>>, vector<1x8x1x32xf32>
    %69 = vector.shape_cast %68 : vector<1x8x1x32xf32> to vector<8x32xf32>
    %70 = vector.shape_cast %67 : vector<8x32xf32> to vector<1x8x1x32xf32>
    tpu.vector_store %arg13[%c0_34, %c0_35, %c1, %c0_36], %70 {strides = array<i32>} : memref<1x8x3x32xf32, #tpu.memory_space<vmem>>, vector<1x8x1x32xf32>,
    %c0_37 = arith.constant 0 : index
    %c0_38 = arith.constant 0 : index
    %c0_39 = arith.constant 0 : index
    %71 = vector.load %arg2[%c0_37, %c0_38, %c0_39] : memref<1x8x3xf32, #tpu.memory_space<vmem>>, vector<1x8x3xf32>
    %72 = vector.shape_cast %71 : vector<1x8x3xf32> to vector<8x3xf32>
    %73 = arith.truncf %72 : vector<8x3xf32> to vector<8x3xbf16>
    %c0_40 = arith.constant 0 : index
    %c0_41 = arith.constant 0 : index
    %74 = vector.load %arg7[%c0_40, %c0_41] : memref<3x32xbf16, #tpu.memory_space<vmem>>, vector<3x32xbf16>
    %cst_42 = arith.constant dense<0.000000e+00> : vector<8x32xf32>
    %75 = tpu.matmul %73, %74, %cst_42 {dimension_numbers = #tpu.dot_dimension_numbers<[1], [0], [0], [1], [0, 0, 1, 1], [], []>} : vector<8x3xbf16>, vector<3x32xbf16>, vector<8x32xf32> -> vector<8x32xf32>
    %c0_43 = arith.constant 0 : index
    %c0_44 = arith.constant 0 : index
    %76 = vector.load %arg8[%c0_43, %c0_44] : memref<1x32xf32, #tpu.memory_space<vmem>>, vector<1x32xf32>
    %77 = vector.broadcast %76 : vector<1x32xf32> to vector<8x32xf32>
    %78 = arith.addf %75, %77 : vector<8x32xf32>
    %79 = arith.addf %78, %0 : vector<8x32xf32>
    %cst_45 = arith.constant dense<0.000000e+00> : vector<8xf32>
    %80 = vector.multi_reduction <add>, %79, %cst_45 [1] : vector<8x32xf32> to vector<8xf32>
    %81 = vector.shape_cast %80 : vector<8xf32> to vector<8x1xf32>
    %cst_46 = arith.constant 3.200000e+01 : f32
    %82 = vector.broadcast %cst_46 : f32 to vector<8x1xf32>
    %83 = arith.divf %81, %82 : vector<8x1xf32>
    %84 = vector.broadcast %83 : vector<8x1xf32> to vector<8x32xf32>
    %85 = arith.subf %79, %84 : vector<8x32xf32>
    %86 = arith.mulf %85, %85 : vector<8x32xf32>
    %cst_47 = arith.constant dense<0.000000e+00> : vector<8xf32>
    %87 = vector.multi_reduction <add>, %86, %cst_47 [1] : vector<8x32xf32> to vector<8xf32>
    %88 = vector.shape_cast %87 : vector<8xf32> to vector<8x1xf32>
    %cst_48 = arith.constant 3.200000e+01 : f32
    %89 = vector.broadcast %cst_48 : f32 to vector<8x1xf32>
    %90 = arith.divf %88, %89 : vector<8x1xf32>
    %91 = vector.broadcast %83 : vector<8x1xf32> to vector<8x32xf32>
    %92 = arith.subf %79, %91 : vector<8x32xf32>
    %cst_49 = arith.constant 9.99999974E-6 : f32
    %93 = vector.broadcast %cst_49 : f32 to vector<8x1xf32>
    %94 = arith.addf %90, %93 : vector<8x1xf32>
    %95 = math.rsqrt %94 : vector<8x1xf32>
    %96 = vector.broadcast %95 : vector<8x1xf32> to vector<8x32xf32>
    %97 = arith.mulf %92, %96 : vector<8x32xf32>
    %98 = vector.broadcast %1 : vector<1x32xf32> to vector<8x32xf32>
    %99 = arith.mulf %97, %98 : vector<8x32xf32>
    %100 = vector.broadcast %2 : vector<1x32xf32> to vector<8x32xf32>
    %101 = arith.addf %99, %100 : vector<8x32xf32>
    %c0_50 = arith.constant 0 : index
    %c0_51 = arith.constant 0 : index
    %c2 = arith.constant 2 : index
    %c0_52 = arith.constant 0 : index
    %102 = vector.load %arg13[%c0_50, %c0_51, %c2, %c0_52] : memref<1x8x3x32xf32, #tpu.memory_space<vmem>>, vector<1x8x1x32xf32>
    %103 = vector.shape_cast %102 : vector<1x8x1x32xf32> to vector<8x32xf32>
    %104 = vector.shape_cast %101 : vector<8x32xf32> to vector<1x8x1x32xf32>
    tpu.vector_store %arg13[%c0_50, %c0_51, %c2, %c0_52], %104 {strides = array<i32>} : memref<1x8x3x32xf32, #tpu.memory_space<vmem>>, vector<1x8x1x32xf32>,
    return
  }
  func.func @transform_0(%arg0: i32) -> (i32, i32, i32) {
    %c0_i32 = arith.constant 0 : i32
    %c0_i32_0 = arith.constant 0 : i32
    %c0_i32_1 = arith.constant 0 : i32
    return %arg0, %c0_i32, %c0_i32_0 : i32, i32, i32
  }
  func.func @transform_1(%arg0: i32) -> (i32, i32, i32) {
    %c0_i32 = arith.constant 0 : i32
    %c0_i32_0 = arith.constant 0 : i32
    %c0_i32_1 = arith.constant 0 : i32
    return %arg0, %c0_i32, %c0_i32_0 : i32, i32, i32
  }
  func.func @transform_2(%arg0: i32) -> (i32, i32, i32) {
    %c0_i32 = arith.constant 0 : i32
    %c0_i32_0 = arith.constant 0 : i32
    %c0_i32_1 = arith.constant 0 : i32
    return %arg0, %c0_i32, %c0_i32_0 : i32, i32, i32
  }
  func.func @transform_3(%arg0: i32) -> (i32, i32) {
    %c0_i32 = arith.constant 0 : i32
    %c0_i32_0 = arith.constant 0 : i32
    %c0_i32_1 = arith.constant 0 : i32
    return %c0_i32, %c0_i32_0 : i32, i32
  }
  func.func @transform_4(%arg0: i32) -> (i32, i32) {
    %c0_i32 = arith.constant 0 : i32
    %c0_i32_0 = arith.constant 0 : i32
    %c0_i32_1 = arith.constant 0 : i32
    return %c0_i32, %c0_i32_0 : i32, i32
  }
  func.func @transform_5(%arg0: i32) -> (i32, i32) {
    %c0_i32 = arith.constant 0 : i32
    %c0_i32_0 = arith.constant 0 : i32
    %c0_i32_1 = arith.constant 0 : i32
    return %c0_i32, %c0_i32_0 : i32, i32
  }
  func.func @transform_6(%arg0: i32) -> (i32, i32) {
    %c0_i32 = arith.constant 0 : i32
    %c0_i32_0 = arith.constant 0 : i32
    %c0_i32_1 = arith.constant 0 : i32
    return %c0_i32, %c0_i32_0 : i32, i32
  }
  func.func @transform_7(%arg0: i32) -> (i32, i32) {
    %c0_i32 = arith.constant 0 : i32
    %c0_i32_0 = arith.constant 0 : i32
    %c0_i32_1 = arith.constant 0 : i32
    return %c0_i32, %c0_i32_0 : i32, i32
  }
  func.func @transform_8(%arg0: i32) -> (i32, i32) {
    %c0_i32 = arith.constant 0 : i32
    %c0_i32_0 = arith.constant 0 : i32
    %c0_i32_1 = arith.constant 0 : i32
    return %c0_i32, %c0_i32_0 : i32, i32
  }
  func.func @transform_9(%arg0: i32) -> (i32, i32) {
    %c0_i32 = arith.constant 0 : i32
    %c0_i32_0 = arith.constant 0 : i32
    %c0_i32_1 = arith.constant 0 : i32
    return %c0_i32, %c0_i32_0 : i32, i32
  }
  func.func @transform_10(%arg0: i32) -> (i32, i32) {
    %c0_i32 = arith.constant 0 : i32
    %c0_i32_0 = arith.constant 0 : i32
    %c0_i32_1 = arith.constant 0 : i32
    return %c0_i32, %c0_i32_0 : i32, i32
  }
  func.func @transform_11(%arg0: i32) -> (i32, i32) {
    %c0_i32 = arith.constant 0 : i32
    %c0_i32_0 = arith.constant 0 : i32
    %c0_i32_1 = arith.constant 0 : i32
    return %c0_i32, %c0_i32_0 : i32, i32
  }
  func.func @transform_12(%arg0: i32) -> (i32, i32, i32, i32) {
    %c0_i32 = arith.constant 0 : i32
    %c0_i32_0 = arith.constant 0 : i32
    %c0_i32_1 = arith.constant 0 : i32
    %c0_i32_2 = arith.constant 0 : i32
    return %arg0, %c0_i32, %c0_i32_0, %c0_i32_1 : i32, i32, i32, i32
  }
}

module attributes {stable_mosaic.version = 11 : i64} {
  func.func @_block_kernel(%arg0: i32, %arg1: memref<1x24x32xf32, #tpu.memory_space<vmem>>, %arg2: memref<32x96xbf16, #tpu.memory_space<vmem>>, %arg3: memref<1x96xf32, #tpu.memory_space<vmem>>, %arg4: memref<32x32xbf16, #tpu.memory_space<vmem>>, %arg5: memref<1x32xf32, #tpu.memory_space<vmem>>, %arg6: memref<1x32xf32, #tpu.memory_space<vmem>>, %arg7: memref<1x32xf32, #tpu.memory_space<vmem>>, %arg8: memref<32x128xbf16, #tpu.memory_space<vmem>>, %arg9: memref<1x128xf32, #tpu.memory_space<vmem>>, %arg10: memref<128x32xbf16, #tpu.memory_space<vmem>>, %arg11: memref<1x32xf32, #tpu.memory_space<vmem>>, %arg12: memref<1x32xf32, #tpu.memory_space<vmem>>, %arg13: memref<1x32xf32, #tpu.memory_space<vmem>>, %arg14: memref<1x24x32xf32, #tpu.memory_space<vmem>>) attributes {dimension_semantics = [#tpu.dimension_semantics<parallel>], iteration_bounds = array<i64: 2>, scalar_prefetch = 0 : i64, scratch_operands = 0 : i64, tpu.core_type = #tpu.core_type<tc>, window_params = [{transform_indices = @transform_0, window_bounds = array<i64: 1, 24, 32>}, {pipeline_mode = #tpu.pipeline_mode<synchronous>, transform_indices = @transform_1, window_bounds = array<i64: 32, 96>}, {pipeline_mode = #tpu.pipeline_mode<synchronous>, transform_indices = @transform_2, window_bounds = array<i64: 1, 96>}, {pipeline_mode = #tpu.pipeline_mode<synchronous>, transform_indices = @transform_3, window_bounds = array<i64: 32, 32>}, {pipeline_mode = #tpu.pipeline_mode<synchronous>, transform_indices = @transform_4, window_bounds = array<i64: 1, 32>}, {pipeline_mode = #tpu.pipeline_mode<synchronous>, transform_indices = @transform_5, window_bounds = array<i64: 1, 32>}, {pipeline_mode = #tpu.pipeline_mode<synchronous>, transform_indices = @transform_6, window_bounds = array<i64: 1, 32>}, {pipeline_mode = #tpu.pipeline_mode<synchronous>, transform_indices = @transform_7, window_bounds = array<i64: 32, 128>}, {pipeline_mode = #tpu.pipeline_mode<synchronous>, transform_indices = @transform_8, window_bounds = array<i64: 1, 128>}, {pipeline_mode = #tpu.pipeline_mode<synchronous>, transform_indices = @transform_9, window_bounds = array<i64: 128, 32>}, {pipeline_mode = #tpu.pipeline_mode<synchronous>, transform_indices = @transform_10, window_bounds = array<i64: 1, 32>}, {pipeline_mode = #tpu.pipeline_mode<synchronous>, transform_indices = @transform_11, window_bounds = array<i64: 1, 32>}, {pipeline_mode = #tpu.pipeline_mode<synchronous>, transform_indices = @transform_12, window_bounds = array<i64: 1, 32>}, {transform_indices = @transform_13, window_bounds = array<i64: 1, 24, 32>}]} {
    %c0 = arith.constant 0 : index
    %c0_0 = arith.constant 0 : index
    %c0_1 = arith.constant 0 : index
    %0 = vector.load %arg1[%c0, %c0_0, %c0_1] : memref<1x24x32xf32, #tpu.memory_space<vmem>>, vector<1x24x32xf32>
    %1 = vector.shape_cast %0 : vector<1x24x32xf32> to vector<24x32xf32>
    %2 = arith.truncf %1 : vector<24x32xf32> to vector<24x32xbf16>
    %c0_2 = arith.constant 0 : index
    %c0_3 = arith.constant 0 : index
    %3 = vector.load %arg2[%c0_2, %c0_3] : memref<32x96xbf16, #tpu.memory_space<vmem>>, vector<32x96xbf16>
    %cst = arith.constant dense<0.000000e+00> : vector<24x96xf32>
    %4 = tpu.matmul %2, %3, %cst {dimension_numbers = #tpu.dot_dimension_numbers<[1], [0], [0], [1], [0, 0, 1, 1], [], []>} : vector<24x32xbf16>, vector<32x96xbf16>, vector<24x96xf32> -> vector<24x96xf32>
    %c0_4 = arith.constant 0 : index
    %c0_5 = arith.constant 0 : index
    %5 = vector.load %arg3[%c0_4, %c0_5] : memref<1x96xf32, #tpu.memory_space<vmem>>, vector<1x96xf32>
    %6 = vector.broadcast %5 : vector<1x96xf32> to vector<24x96xf32>
    %7 = arith.addf %4, %6 : vector<24x96xf32>
    %8 = vector.extract_strided_slice %7 {offsets = [0, 0], sizes = [24, 32], strides = [1, 1]} : vector<24x96xf32> to vector<24x32xf32>
    %cst_6 = arith.constant 2.500000e-01 : f32
    %9 = vector.broadcast %cst_6 : f32 to vector<24x32xf32>
    %10 = arith.mulf %8, %9 : vector<24x32xf32>
    %11 = vector.extract_strided_slice %7 {offsets = [0, 32], sizes = [24, 32], strides = [1, 1]} : vector<24x96xf32> to vector<24x32xf32>
    %12 = vector.extract_strided_slice %7 {offsets = [0, 64], sizes = [24, 32], strides = [1, 1]} : vector<24x96xf32> to vector<24x32xf32>
    %13 = tpu.iota {dimensions = array<i32: 0>} : vector<24x24xi32>
    %14 = tpu.iota {dimensions = array<i32: 1>} : vector<24x24xi32>
    %15 = arith.cmpi sle, %14, %13 : vector<24x24xi32>
    %16 = vector.extract_strided_slice %10 {offsets = [0, 0], sizes = [24, 16], strides = [1, 1]} : vector<24x32xf32> to vector<24x16xf32>
    %17 = arith.truncf %16 : vector<24x16xf32> to vector<24x16xbf16>
    %18 = vector.extract_strided_slice %11 {offsets = [0, 0], sizes = [24, 16], strides = [1, 1]} : vector<24x32xf32> to vector<24x16xf32>
    %19 = tpu.transpose %18, [1, 0] : vector<24x16xf32> -> vector<16x24xf32>
    %20 = arith.truncf %19 : vector<16x24xf32> to vector<16x24xbf16>
    %21 = vector.extract_strided_slice %12 {offsets = [0, 0], sizes = [24, 16], strides = [1, 1]} : vector<24x32xf32> to vector<24x16xf32>
    %22 = arith.truncf %21 : vector<24x16xf32> to vector<24x16xbf16>
    %cst_7 = arith.constant dense<0.000000e+00> : vector<24x24xf32>
    %23 = tpu.matmul %17, %20, %cst_7 {dimension_numbers = #tpu.dot_dimension_numbers<[1], [0], [0], [1], [0, 0, 1, 1], [], []>} : vector<24x16xbf16>, vector<16x24xbf16>, vector<24x24xf32> -> vector<24x24xf32>
    %cst_8 = arith.constant -1.000000e+30 : f32
    %24 = vector.broadcast %cst_8 : f32 to vector<24x24xf32>
    %25 = arith.select %15, %23, %24 : vector<24x24xi1>, vector<24x24xf32>
    %cst_9 = arith.constant dense<0xFF800000> : vector<24xf32>
    %26 = vector.multi_reduction <maximumf>, %25, %cst_9 [1] : vector<24x24xf32> to vector<24xf32>
    %27 = vector.shape_cast %26 : vector<24xf32> to vector<24x1xf32>
    %28 = vector.broadcast %27 : vector<24x1xf32> to vector<24x24xf32>
    %29 = arith.subf %25, %28 : vector<24x24xf32>
    %30 = math.exp %29 : vector<24x24xf32>
    %cst_10 = arith.constant dense<0.000000e+00> : vector<24xf32>
    %31 = vector.multi_reduction <add>, %30, %cst_10 [1] : vector<24x24xf32> to vector<24xf32>
    %32 = vector.shape_cast %31 : vector<24xf32> to vector<24x1xf32>
    %33 = tpu.reciprocal %32 {approx = true} : vector<24x1xf32> -> vector<24x1xf32>
    %34 = vector.broadcast %33 : vector<24x1xf32> to vector<24x24xf32>
    %35 = arith.mulf %30, %34 : vector<24x24xf32>
    %36 = arith.truncf %35 : vector<24x24xf32> to vector<24x24xbf16>
    %cst_11 = arith.constant dense<0.000000e+00> : vector<24x16xf32>
    %37 = tpu.matmul %36, %22, %cst_11 {dimension_numbers = #tpu.dot_dimension_numbers<[1], [0], [0], [1], [0, 0, 1, 1], [], []>} : vector<24x24xbf16>, vector<24x16xbf16>, vector<24x16xf32> -> vector<24x16xf32>
    %38 = vector.extract_strided_slice %10 {offsets = [0, 16], sizes = [24, 16], strides = [1, 1]} : vector<24x32xf32> to vector<24x16xf32>
    %39 = arith.truncf %38 : vector<24x16xf32> to vector<24x16xbf16>
    %40 = vector.extract_strided_slice %11 {offsets = [0, 16], sizes = [24, 16], strides = [1, 1]} : vector<24x32xf32> to vector<24x16xf32>
    %41 = tpu.transpose %40, [1, 0] : vector<24x16xf32> -> vector<16x24xf32>
    %42 = arith.truncf %41 : vector<16x24xf32> to vector<16x24xbf16>
    %43 = vector.extract_strided_slice %12 {offsets = [0, 16], sizes = [24, 16], strides = [1, 1]} : vector<24x32xf32> to vector<24x16xf32>
    %44 = arith.truncf %43 : vector<24x16xf32> to vector<24x16xbf16>
    %cst_12 = arith.constant dense<0.000000e+00> : vector<24x24xf32>
    %45 = tpu.matmul %39, %42, %cst_12 {dimension_numbers = #tpu.dot_dimension_numbers<[1], [0], [0], [1], [0, 0, 1, 1], [], []>} : vector<24x16xbf16>, vector<16x24xbf16>, vector<24x24xf32> -> vector<24x24xf32>
    %cst_13 = arith.constant -1.000000e+30 : f32
    %46 = vector.broadcast %cst_13 : f32 to vector<24x24xf32>
    %47 = arith.select %15, %45, %46 : vector<24x24xi1>, vector<24x24xf32>
    %cst_14 = arith.constant dense<0xFF800000> : vector<24xf32>
    %48 = vector.multi_reduction <maximumf>, %47, %cst_14 [1] : vector<24x24xf32> to vector<24xf32>
    %49 = vector.shape_cast %48 : vector<24xf32> to vector<24x1xf32>
    %50 = vector.broadcast %49 : vector<24x1xf32> to vector<24x24xf32>
    %51 = arith.subf %47, %50 : vector<24x24xf32>
    %52 = math.exp %51 : vector<24x24xf32>
    %cst_15 = arith.constant dense<0.000000e+00> : vector<24xf32>
    %53 = vector.multi_reduction <add>, %52, %cst_15 [1] : vector<24x24xf32> to vector<24xf32>
    %54 = vector.shape_cast %53 : vector<24xf32> to vector<24x1xf32>
    %55 = tpu.reciprocal %54 {approx = true} : vector<24x1xf32> -> vector<24x1xf32>
    %56 = vector.broadcast %55 : vector<24x1xf32> to vector<24x24xf32>
    %57 = arith.mulf %52, %56 : vector<24x24xf32>
    %58 = arith.truncf %57 : vector<24x24xf32> to vector<24x24xbf16>
    %cst_16 = arith.constant dense<0.000000e+00> : vector<24x16xf32>
    %59 = tpu.matmul %58, %44, %cst_16 {dimension_numbers = #tpu.dot_dimension_numbers<[1], [0], [0], [1], [0, 0, 1, 1], [], []>} : vector<24x24xbf16>, vector<24x16xbf16>, vector<24x16xf32> -> vector<24x16xf32>
    %60 = tpu.concatenate %37, %59 in 1 : vector<24x16xf32>, vector<24x16xf32> -> vector<24x32xf32>
    %61 = arith.truncf %60 : vector<24x32xf32> to vector<24x32xbf16>
    %c0_17 = arith.constant 0 : index
    %c0_18 = arith.constant 0 : index
    %62 = vector.load %arg4[%c0_17, %c0_18] : memref<32x32xbf16, #tpu.memory_space<vmem>>, vector<32x32xbf16>
    %cst_19 = arith.constant dense<0.000000e+00> : vector<24x32xf32>
    %63 = tpu.matmul %61, %62, %cst_19 {dimension_numbers = #tpu.dot_dimension_numbers<[1], [0], [0], [1], [0, 0, 1, 1], [], []>} : vector<24x32xbf16>, vector<32x32xbf16>, vector<24x32xf32> -> vector<24x32xf32>
    %64 = arith.addf %1, %63 : vector<24x32xf32>
    %c0_20 = arith.constant 0 : index
    %c0_21 = arith.constant 0 : index
    %65 = vector.load %arg5[%c0_20, %c0_21] : memref<1x32xf32, #tpu.memory_space<vmem>>, vector<1x32xf32>
    %66 = vector.broadcast %65 : vector<1x32xf32> to vector<24x32xf32>
    %67 = arith.addf %64, %66 : vector<24x32xf32>
    %c0_22 = arith.constant 0 : index
    %c0_23 = arith.constant 0 : index
    %68 = vector.load %arg6[%c0_22, %c0_23] : memref<1x32xf32, #tpu.memory_space<vmem>>, vector<1x32xf32>
    %c0_24 = arith.constant 0 : index
    %c0_25 = arith.constant 0 : index
    %69 = vector.load %arg7[%c0_24, %c0_25] : memref<1x32xf32, #tpu.memory_space<vmem>>, vector<1x32xf32>
    %cst_26 = arith.constant dense<0.000000e+00> : vector<24xf32>
    %70 = vector.multi_reduction <add>, %67, %cst_26 [1] : vector<24x32xf32> to vector<24xf32>
    %71 = vector.shape_cast %70 : vector<24xf32> to vector<24x1xf32>
    %cst_27 = arith.constant 3.200000e+01 : f32
    %72 = vector.broadcast %cst_27 : f32 to vector<24x1xf32>
    %73 = arith.divf %71, %72 : vector<24x1xf32>
    %74 = vector.broadcast %73 : vector<24x1xf32> to vector<24x32xf32>
    %75 = arith.subf %67, %74 : vector<24x32xf32>
    %76 = arith.mulf %75, %75 : vector<24x32xf32>
    %cst_28 = arith.constant dense<0.000000e+00> : vector<24xf32>
    %77 = vector.multi_reduction <add>, %76, %cst_28 [1] : vector<24x32xf32> to vector<24xf32>
    %78 = vector.shape_cast %77 : vector<24xf32> to vector<24x1xf32>
    %cst_29 = arith.constant 3.200000e+01 : f32
    %79 = vector.broadcast %cst_29 : f32 to vector<24x1xf32>
    %80 = arith.divf %78, %79 : vector<24x1xf32>
    %81 = vector.broadcast %73 : vector<24x1xf32> to vector<24x32xf32>
    %82 = arith.subf %67, %81 : vector<24x32xf32>
    %cst_30 = arith.constant 9.99999974E-6 : f32
    %83 = vector.broadcast %cst_30 : f32 to vector<24x1xf32>
    %84 = arith.addf %80, %83 : vector<24x1xf32>
    %85 = math.rsqrt %84 : vector<24x1xf32>
    %86 = vector.broadcast %85 : vector<24x1xf32> to vector<24x32xf32>
    %87 = arith.mulf %82, %86 : vector<24x32xf32>
    %88 = vector.broadcast %68 : vector<1x32xf32> to vector<24x32xf32>
    %89 = arith.mulf %87, %88 : vector<24x32xf32>
    %90 = vector.broadcast %69 : vector<1x32xf32> to vector<24x32xf32>
    %91 = arith.addf %89, %90 : vector<24x32xf32>
    %92 = arith.truncf %91 : vector<24x32xf32> to vector<24x32xbf16>
    %c0_31 = arith.constant 0 : index
    %c0_32 = arith.constant 0 : index
    %93 = vector.load %arg8[%c0_31, %c0_32] : memref<32x128xbf16, #tpu.memory_space<vmem>>, vector<32x128xbf16>
    %cst_33 = arith.constant dense<0.000000e+00> : vector<24x128xf32>
    %94 = tpu.matmul %92, %93, %cst_33 {dimension_numbers = #tpu.dot_dimension_numbers<[1], [0], [0], [1], [0, 0, 1, 1], [], []>} : vector<24x32xbf16>, vector<32x128xbf16>, vector<24x128xf32> -> vector<24x128xf32>
    %c0_34 = arith.constant 0 : index
    %c0_35 = arith.constant 0 : index
    %95 = vector.load %arg9[%c0_34, %c0_35] : memref<1x128xf32, #tpu.memory_space<vmem>>, vector<1x128xf32>
    %96 = vector.broadcast %95 : vector<1x128xf32> to vector<24x128xf32>
    %97 = arith.addf %94, %96 : vector<24x128xf32>
    %cst_36 = arith.constant 5.000000e-01 : f32
    %98 = vector.broadcast %cst_36 : f32 to vector<24x128xf32>
    %99 = arith.mulf %98, %97 : vector<24x128xf32>
    %cst_37 = arith.constant 0.707106769 : f32
    %100 = vector.broadcast %cst_37 : f32 to vector<24x128xf32>
    %101 = arith.mulf %97, %100 : vector<24x128xf32>
    %102 = math.erf %101 : vector<24x128xf32>
    %cst_38 = arith.constant 1.000000e+00 : f32
    %103 = vector.broadcast %cst_38 : f32 to vector<24x128xf32>
    %104 = arith.addf %103, %102 : vector<24x128xf32>
    %105 = arith.mulf %99, %104 : vector<24x128xf32>
    %106 = arith.truncf %105 : vector<24x128xf32> to vector<24x128xbf16>
    %c0_39 = arith.constant 0 : index
    %c0_40 = arith.constant 0 : index
    %107 = vector.load %arg10[%c0_39, %c0_40] : memref<128x32xbf16, #tpu.memory_space<vmem>>, vector<128x32xbf16>
    %cst_41 = arith.constant dense<0.000000e+00> : vector<24x32xf32>
    %108 = tpu.matmul %106, %107, %cst_41 {dimension_numbers = #tpu.dot_dimension_numbers<[1], [0], [0], [1], [0, 0, 1, 1], [], []>} : vector<24x128xbf16>, vector<128x32xbf16>, vector<24x32xf32> -> vector<24x32xf32>
    %109 = arith.addf %91, %108 : vector<24x32xf32>
    %c0_42 = arith.constant 0 : index
    %c0_43 = arith.constant 0 : index
    %110 = vector.load %arg11[%c0_42, %c0_43] : memref<1x32xf32, #tpu.memory_space<vmem>>, vector<1x32xf32>
    %111 = vector.broadcast %110 : vector<1x32xf32> to vector<24x32xf32>
    %112 = arith.addf %109, %111 : vector<24x32xf32>
    %c0_44 = arith.constant 0 : index
    %c0_45 = arith.constant 0 : index
    %113 = vector.load %arg12[%c0_44, %c0_45] : memref<1x32xf32, #tpu.memory_space<vmem>>, vector<1x32xf32>
    %c0_46 = arith.constant 0 : index
    %c0_47 = arith.constant 0 : index
    %114 = vector.load %arg13[%c0_46, %c0_47] : memref<1x32xf32, #tpu.memory_space<vmem>>, vector<1x32xf32>
    %cst_48 = arith.constant dense<0.000000e+00> : vector<24xf32>
    %115 = vector.multi_reduction <add>, %112, %cst_48 [1] : vector<24x32xf32> to vector<24xf32>
    %116 = vector.shape_cast %115 : vector<24xf32> to vector<24x1xf32>
    %cst_49 = arith.constant 3.200000e+01 : f32
    %117 = vector.broadcast %cst_49 : f32 to vector<24x1xf32>
    %118 = arith.divf %116, %117 : vector<24x1xf32>
    %119 = vector.broadcast %118 : vector<24x1xf32> to vector<24x32xf32>
    %120 = arith.subf %112, %119 : vector<24x32xf32>
    %121 = arith.mulf %120, %120 : vector<24x32xf32>
    %cst_50 = arith.constant dense<0.000000e+00> : vector<24xf32>
    %122 = vector.multi_reduction <add>, %121, %cst_50 [1] : vector<24x32xf32> to vector<24xf32>
    %123 = vector.shape_cast %122 : vector<24xf32> to vector<24x1xf32>
    %cst_51 = arith.constant 3.200000e+01 : f32
    %124 = vector.broadcast %cst_51 : f32 to vector<24x1xf32>
    %125 = arith.divf %123, %124 : vector<24x1xf32>
    %126 = vector.broadcast %118 : vector<24x1xf32> to vector<24x32xf32>
    %127 = arith.subf %112, %126 : vector<24x32xf32>
    %cst_52 = arith.constant 9.99999974E-6 : f32
    %128 = vector.broadcast %cst_52 : f32 to vector<24x1xf32>
    %129 = arith.addf %125, %128 : vector<24x1xf32>
    %130 = math.rsqrt %129 : vector<24x1xf32>
    %131 = vector.broadcast %130 : vector<24x1xf32> to vector<24x32xf32>
    %132 = arith.mulf %127, %131 : vector<24x32xf32>
    %133 = vector.broadcast %113 : vector<1x32xf32> to vector<24x32xf32>
    %134 = arith.mulf %132, %133 : vector<24x32xf32>
    %135 = vector.broadcast %114 : vector<1x32xf32> to vector<24x32xf32>
    %136 = arith.addf %134, %135 : vector<24x32xf32>
    %c0_53 = arith.constant 0 : index
    %c0_54 = arith.constant 0 : index
    %c0_55 = arith.constant 0 : index
    %137 = vector.load %arg14[%c0_53, %c0_54, %c0_55] : memref<1x24x32xf32, #tpu.memory_space<vmem>>, vector<1x24x32xf32>
    %138 = vector.shape_cast %137 : vector<1x24x32xf32> to vector<24x32xf32>
    %139 = vector.shape_cast %136 : vector<24x32xf32> to vector<1x24x32xf32>
    tpu.vector_store %arg14[%c0_53, %c0_54, %c0_55], %139 {strides = array<i32>} : memref<1x24x32xf32, #tpu.memory_space<vmem>>, vector<1x24x32xf32>,
    return
  }
  func.func @transform_0(%arg0: i32) -> (i32, i32, i32) {
    %c0_i32 = arith.constant 0 : i32
    %c0_i32_0 = arith.constant 0 : i32
    %c0_i32_1 = arith.constant 0 : i32
    return %arg0, %c0_i32, %c0_i32_0 : i32, i32, i32
  }
  func.func @transform_1(%arg0: i32) -> (i32, i32) {
    %c0_i32 = arith.constant 0 : i32
    %c0_i32_0 = arith.constant 0 : i32
    %c0_i32_1 = arith.constant 0 : i32
    return %c0_i32, %c0_i32_0 : i32, i32
  }
  func.func @transform_2(%arg0: i32) -> (i32, i32) {
    %c0_i32 = arith.constant 0 : i32
    %c0_i32_0 = arith.constant 0 : i32
    %c0_i32_1 = arith.constant 0 : i32
    return %c0_i32, %c0_i32_0 : i32, i32
  }
  func.func @transform_3(%arg0: i32) -> (i32, i32) {
    %c0_i32 = arith.constant 0 : i32
    %c0_i32_0 = arith.constant 0 : i32
    %c0_i32_1 = arith.constant 0 : i32
    return %c0_i32, %c0_i32_0 : i32, i32
  }
  func.func @transform_4(%arg0: i32) -> (i32, i32) {
    %c0_i32 = arith.constant 0 : i32
    %c0_i32_0 = arith.constant 0 : i32
    %c0_i32_1 = arith.constant 0 : i32
    return %c0_i32, %c0_i32_0 : i32, i32
  }
  func.func @transform_5(%arg0: i32) -> (i32, i32) {
    %c0_i32 = arith.constant 0 : i32
    %c0_i32_0 = arith.constant 0 : i32
    %c0_i32_1 = arith.constant 0 : i32
    return %c0_i32, %c0_i32_0 : i32, i32
  }
  func.func @transform_6(%arg0: i32) -> (i32, i32) {
    %c0_i32 = arith.constant 0 : i32
    %c0_i32_0 = arith.constant 0 : i32
    %c0_i32_1 = arith.constant 0 : i32
    return %c0_i32, %c0_i32_0 : i32, i32
  }
  func.func @transform_7(%arg0: i32) -> (i32, i32) {
    %c0_i32 = arith.constant 0 : i32
    %c0_i32_0 = arith.constant 0 : i32
    %c0_i32_1 = arith.constant 0 : i32
    return %c0_i32, %c0_i32_0 : i32, i32
  }
  func.func @transform_8(%arg0: i32) -> (i32, i32) {
    %c0_i32 = arith.constant 0 : i32
    %c0_i32_0 = arith.constant 0 : i32
    %c0_i32_1 = arith.constant 0 : i32
    return %c0_i32, %c0_i32_0 : i32, i32
  }
  func.func @transform_9(%arg0: i32) -> (i32, i32) {
    %c0_i32 = arith.constant 0 : i32
    %c0_i32_0 = arith.constant 0 : i32
    %c0_i32_1 = arith.constant 0 : i32
    return %c0_i32, %c0_i32_0 : i32, i32
  }
  func.func @transform_10(%arg0: i32) -> (i32, i32) {
    %c0_i32 = arith.constant 0 : i32
    %c0_i32_0 = arith.constant 0 : i32
    %c0_i32_1 = arith.constant 0 : i32
    return %c0_i32, %c0_i32_0 : i32, i32
  }
  func.func @transform_11(%arg0: i32) -> (i32, i32) {
    %c0_i32 = arith.constant 0 : i32
    %c0_i32_0 = arith.constant 0 : i32
    %c0_i32_1 = arith.constant 0 : i32
    return %c0_i32, %c0_i32_0 : i32, i32
  }
  func.func @transform_12(%arg0: i32) -> (i32, i32) {
    %c0_i32 = arith.constant 0 : i32
    %c0_i32_0 = arith.constant 0 : i32
    %c0_i32_1 = arith.constant 0 : i32
    return %c0_i32, %c0_i32_0 : i32, i32
  }
  func.func @transform_13(%arg0: i32) -> (i32, i32, i32) {
    %c0_i32 = arith.constant 0 : i32
    %c0_i32_0 = arith.constant 0 : i32
    %c0_i32_1 = arith.constant 0 : i32
    return %arg0, %c0_i32, %c0_i32_0 : i32, i32, i32
  }
}

module attributes {stable_mosaic.version = 11 : i64} {
  func.func @_block_kernel(%arg0: i32, %arg1: memref<1x24x32xf32, #tpu.memory_space<vmem>>, %arg2: memref<32x96xbf16, #tpu.memory_space<vmem>>, %arg3: memref<1x96xf32, #tpu.memory_space<vmem>>, %arg4: memref<32x32xbf16, #tpu.memory_space<vmem>>, %arg5: memref<1x32xf32, #tpu.memory_space<vmem>>, %arg6: memref<1x32xf32, #tpu.memory_space<vmem>>, %arg7: memref<1x32xf32, #tpu.memory_space<vmem>>, %arg8: memref<32x128xbf16, #tpu.memory_space<vmem>>, %arg9: memref<1x128xf32, #tpu.memory_space<vmem>>, %arg10: memref<128x32xbf16, #tpu.memory_space<vmem>>, %arg11: memref<1x32xf32, #tpu.memory_space<vmem>>, %arg12: memref<1x32xf32, #tpu.memory_space<vmem>>, %arg13: memref<1x32xf32, #tpu.memory_space<vmem>>, %arg14: memref<1x24x32xf32, #tpu.memory_space<vmem>>) attributes {dimension_semantics = [#tpu.dimension_semantics<parallel>], iteration_bounds = array<i64: 2>, scalar_prefetch = 0 : i64, scratch_operands = 0 : i64, tpu.core_type = #tpu.core_type<tc>, window_params = [{transform_indices = @transform_0, window_bounds = array<i64: 1, 24, 32>}, {pipeline_mode = #tpu.pipeline_mode<synchronous>, transform_indices = @transform_1, window_bounds = array<i64: 32, 96>}, {pipeline_mode = #tpu.pipeline_mode<synchronous>, transform_indices = @transform_2, window_bounds = array<i64: 1, 96>}, {pipeline_mode = #tpu.pipeline_mode<synchronous>, transform_indices = @transform_3, window_bounds = array<i64: 32, 32>}, {pipeline_mode = #tpu.pipeline_mode<synchronous>, transform_indices = @transform_4, window_bounds = array<i64: 1, 32>}, {pipeline_mode = #tpu.pipeline_mode<synchronous>, transform_indices = @transform_5, window_bounds = array<i64: 1, 32>}, {pipeline_mode = #tpu.pipeline_mode<synchronous>, transform_indices = @transform_6, window_bounds = array<i64: 1, 32>}, {pipeline_mode = #tpu.pipeline_mode<synchronous>, transform_indices = @transform_7, window_bounds = array<i64: 32, 128>}, {pipeline_mode = #tpu.pipeline_mode<synchronous>, transform_indices = @transform_8, window_bounds = array<i64: 1, 128>}, {pipeline_mode = #tpu.pipeline_mode<synchronous>, transform_indices = @transform_9, window_bounds = array<i64: 128, 32>}, {pipeline_mode = #tpu.pipeline_mode<synchronous>, transform_indices = @transform_10, window_bounds = array<i64: 1, 32>}, {pipeline_mode = #tpu.pipeline_mode<synchronous>, transform_indices = @transform_11, window_bounds = array<i64: 1, 32>}, {pipeline_mode = #tpu.pipeline_mode<synchronous>, transform_indices = @transform_12, window_bounds = array<i64: 1, 32>}, {transform_indices = @transform_13, window_bounds = array<i64: 1, 24, 32>}]} {
    %c0 = arith.constant 0 : index
    %c0_0 = arith.constant 0 : index
    %c0_1 = arith.constant 0 : index
    %0 = vector.load %arg1[%c0, %c0_0, %c0_1] : memref<1x24x32xf32, #tpu.memory_space<vmem>>, vector<1x24x32xf32>
    %1 = vector.shape_cast %0 : vector<1x24x32xf32> to vector<24x32xf32>
    %2 = arith.truncf %1 : vector<24x32xf32> to vector<24x32xbf16>
    %c0_2 = arith.constant 0 : index
    %c0_3 = arith.constant 0 : index
    %3 = vector.load %arg2[%c0_2, %c0_3] : memref<32x96xbf16, #tpu.memory_space<vmem>>, vector<32x96xbf16>
    %cst = arith.constant dense<0.000000e+00> : vector<24x96xf32>
    %4 = tpu.matmul %2, %3, %cst {dimension_numbers = #tpu.dot_dimension_numbers<[1], [0], [0], [1], [0, 0, 1, 1], [], []>} : vector<24x32xbf16>, vector<32x96xbf16>, vector<24x96xf32> -> vector<24x96xf32>
    %c0_4 = arith.constant 0 : index
    %c0_5 = arith.constant 0 : index
    %5 = vector.load %arg3[%c0_4, %c0_5] : memref<1x96xf32, #tpu.memory_space<vmem>>, vector<1x96xf32>
    %6 = vector.broadcast %5 : vector<1x96xf32> to vector<24x96xf32>
    %7 = arith.addf %4, %6 : vector<24x96xf32>
    %8 = vector.extract_strided_slice %7 {offsets = [0, 0], sizes = [24, 32], strides = [1, 1]} : vector<24x96xf32> to vector<24x32xf32>
    %cst_6 = arith.constant 2.500000e-01 : f32
    %9 = vector.broadcast %cst_6 : f32 to vector<24x32xf32>
    %10 = arith.mulf %8, %9 : vector<24x32xf32>
    %11 = vector.extract_strided_slice %7 {offsets = [0, 32], sizes = [24, 32], strides = [1, 1]} : vector<24x96xf32> to vector<24x32xf32>
    %12 = vector.extract_strided_slice %7 {offsets = [0, 64], sizes = [24, 32], strides = [1, 1]} : vector<24x96xf32> to vector<24x32xf32>
    %13 = tpu.iota {dimensions = array<i32: 0>} : vector<24x24xi32>
    %14 = tpu.iota {dimensions = array<i32: 1>} : vector<24x24xi32>
    %15 = arith.cmpi sle, %14, %13 : vector<24x24xi32>
    %16 = vector.extract_strided_slice %10 {offsets = [0, 0], sizes = [24, 16], strides = [1, 1]} : vector<24x32xf32> to vector<24x16xf32>
    %17 = arith.truncf %16 : vector<24x16xf32> to vector<24x16xbf16>
    %18 = vector.extract_strided_slice %11 {offsets = [0, 0], sizes = [24, 16], strides = [1, 1]} : vector<24x32xf32> to vector<24x16xf32>
    %19 = tpu.transpose %18, [1, 0] : vector<24x16xf32> -> vector<16x24xf32>
    %20 = arith.truncf %19 : vector<16x24xf32> to vector<16x24xbf16>
    %21 = vector.extract_strided_slice %12 {offsets = [0, 0], sizes = [24, 16], strides = [1, 1]} : vector<24x32xf32> to vector<24x16xf32>
    %22 = arith.truncf %21 : vector<24x16xf32> to vector<24x16xbf16>
    %cst_7 = arith.constant dense<0.000000e+00> : vector<24x24xf32>
    %23 = tpu.matmul %17, %20, %cst_7 {dimension_numbers = #tpu.dot_dimension_numbers<[1], [0], [0], [1], [0, 0, 1, 1], [], []>} : vector<24x16xbf16>, vector<16x24xbf16>, vector<24x24xf32> -> vector<24x24xf32>
    %cst_8 = arith.constant -1.000000e+30 : f32
    %24 = vector.broadcast %cst_8 : f32 to vector<24x24xf32>
    %25 = arith.select %15, %23, %24 : vector<24x24xi1>, vector<24x24xf32>
    %cst_9 = arith.constant dense<0xFF800000> : vector<24xf32>
    %26 = vector.multi_reduction <maximumf>, %25, %cst_9 [1] : vector<24x24xf32> to vector<24xf32>
    %27 = vector.shape_cast %26 : vector<24xf32> to vector<24x1xf32>
    %28 = vector.broadcast %27 : vector<24x1xf32> to vector<24x24xf32>
    %29 = arith.subf %25, %28 : vector<24x24xf32>
    %30 = math.exp %29 : vector<24x24xf32>
    %cst_10 = arith.constant dense<0.000000e+00> : vector<24xf32>
    %31 = vector.multi_reduction <add>, %30, %cst_10 [1] : vector<24x24xf32> to vector<24xf32>
    %32 = vector.shape_cast %31 : vector<24xf32> to vector<24x1xf32>
    %33 = tpu.reciprocal %32 {approx = true} : vector<24x1xf32> -> vector<24x1xf32>
    %34 = vector.broadcast %33 : vector<24x1xf32> to vector<24x24xf32>
    %35 = arith.mulf %30, %34 : vector<24x24xf32>
    %36 = arith.truncf %35 : vector<24x24xf32> to vector<24x24xbf16>
    %cst_11 = arith.constant dense<0.000000e+00> : vector<24x16xf32>
    %37 = tpu.matmul %36, %22, %cst_11 {dimension_numbers = #tpu.dot_dimension_numbers<[1], [0], [0], [1], [0, 0, 1, 1], [], []>} : vector<24x24xbf16>, vector<24x16xbf16>, vector<24x16xf32> -> vector<24x16xf32>
    %38 = vector.extract_strided_slice %10 {offsets = [0, 16], sizes = [24, 16], strides = [1, 1]} : vector<24x32xf32> to vector<24x16xf32>
    %39 = arith.truncf %38 : vector<24x16xf32> to vector<24x16xbf16>
    %40 = vector.extract_strided_slice %11 {offsets = [0, 16], sizes = [24, 16], strides = [1, 1]} : vector<24x32xf32> to vector<24x16xf32>
    %41 = tpu.transpose %40, [1, 0] : vector<24x16xf32> -> vector<16x24xf32>
    %42 = arith.truncf %41 : vector<16x24xf32> to vector<16x24xbf16>
    %43 = vector.extract_strided_slice %12 {offsets = [0, 16], sizes = [24, 16], strides = [1, 1]} : vector<24x32xf32> to vector<24x16xf32>
    %44 = arith.truncf %43 : vector<24x16xf32> to vector<24x16xbf16>
    %cst_12 = arith.constant dense<0.000000e+00> : vector<24x24xf32>
    %45 = tpu.matmul %39, %42, %cst_12 {dimension_numbers = #tpu.dot_dimension_numbers<[1], [0], [0], [1], [0, 0, 1, 1], [], []>} : vector<24x16xbf16>, vector<16x24xbf16>, vector<24x24xf32> -> vector<24x24xf32>
    %cst_13 = arith.constant -1.000000e+30 : f32
    %46 = vector.broadcast %cst_13 : f32 to vector<24x24xf32>
    %47 = arith.select %15, %45, %46 : vector<24x24xi1>, vector<24x24xf32>
    %cst_14 = arith.constant dense<0xFF800000> : vector<24xf32>
    %48 = vector.multi_reduction <maximumf>, %47, %cst_14 [1] : vector<24x24xf32> to vector<24xf32>
    %49 = vector.shape_cast %48 : vector<24xf32> to vector<24x1xf32>
    %50 = vector.broadcast %49 : vector<24x1xf32> to vector<24x24xf32>
    %51 = arith.subf %47, %50 : vector<24x24xf32>
    %52 = math.exp %51 : vector<24x24xf32>
    %cst_15 = arith.constant dense<0.000000e+00> : vector<24xf32>
    %53 = vector.multi_reduction <add>, %52, %cst_15 [1] : vector<24x24xf32> to vector<24xf32>
    %54 = vector.shape_cast %53 : vector<24xf32> to vector<24x1xf32>
    %55 = tpu.reciprocal %54 {approx = true} : vector<24x1xf32> -> vector<24x1xf32>
    %56 = vector.broadcast %55 : vector<24x1xf32> to vector<24x24xf32>
    %57 = arith.mulf %52, %56 : vector<24x24xf32>
    %58 = arith.truncf %57 : vector<24x24xf32> to vector<24x24xbf16>
    %cst_16 = arith.constant dense<0.000000e+00> : vector<24x16xf32>
    %59 = tpu.matmul %58, %44, %cst_16 {dimension_numbers = #tpu.dot_dimension_numbers<[1], [0], [0], [1], [0, 0, 1, 1], [], []>} : vector<24x24xbf16>, vector<24x16xbf16>, vector<24x16xf32> -> vector<24x16xf32>
    %60 = tpu.concatenate %37, %59 in 1 : vector<24x16xf32>, vector<24x16xf32> -> vector<24x32xf32>
    %61 = arith.truncf %60 : vector<24x32xf32> to vector<24x32xbf16>
    %c0_17 = arith.constant 0 : index
    %c0_18 = arith.constant 0 : index
    %62 = vector.load %arg4[%c0_17, %c0_18] : memref<32x32xbf16, #tpu.memory_space<vmem>>, vector<32x32xbf16>
    %cst_19 = arith.constant dense<0.000000e+00> : vector<24x32xf32>
    %63 = tpu.matmul %61, %62, %cst_19 {dimension_numbers = #tpu.dot_dimension_numbers<[1], [0], [0], [1], [0, 0, 1, 1], [], []>} : vector<24x32xbf16>, vector<32x32xbf16>, vector<24x32xf32> -> vector<24x32xf32>
    %64 = arith.addf %1, %63 : vector<24x32xf32>
    %c0_20 = arith.constant 0 : index
    %c0_21 = arith.constant 0 : index
    %65 = vector.load %arg5[%c0_20, %c0_21] : memref<1x32xf32, #tpu.memory_space<vmem>>, vector<1x32xf32>
    %66 = vector.broadcast %65 : vector<1x32xf32> to vector<24x32xf32>
    %67 = arith.addf %64, %66 : vector<24x32xf32>
    %c0_22 = arith.constant 0 : index
    %c0_23 = arith.constant 0 : index
    %68 = vector.load %arg6[%c0_22, %c0_23] : memref<1x32xf32, #tpu.memory_space<vmem>>, vector<1x32xf32>
    %c0_24 = arith.constant 0 : index
    %c0_25 = arith.constant 0 : index
    %69 = vector.load %arg7[%c0_24, %c0_25] : memref<1x32xf32, #tpu.memory_space<vmem>>, vector<1x32xf32>
    %cst_26 = arith.constant dense<0.000000e+00> : vector<24xf32>
    %70 = vector.multi_reduction <add>, %67, %cst_26 [1] : vector<24x32xf32> to vector<24xf32>
    %71 = vector.shape_cast %70 : vector<24xf32> to vector<24x1xf32>
    %cst_27 = arith.constant 3.200000e+01 : f32
    %72 = vector.broadcast %cst_27 : f32 to vector<24x1xf32>
    %73 = arith.divf %71, %72 : vector<24x1xf32>
    %74 = vector.broadcast %73 : vector<24x1xf32> to vector<24x32xf32>
    %75 = arith.subf %67, %74 : vector<24x32xf32>
    %76 = arith.mulf %75, %75 : vector<24x32xf32>
    %cst_28 = arith.constant dense<0.000000e+00> : vector<24xf32>
    %77 = vector.multi_reduction <add>, %76, %cst_28 [1] : vector<24x32xf32> to vector<24xf32>
    %78 = vector.shape_cast %77 : vector<24xf32> to vector<24x1xf32>
    %cst_29 = arith.constant 3.200000e+01 : f32
    %79 = vector.broadcast %cst_29 : f32 to vector<24x1xf32>
    %80 = arith.divf %78, %79 : vector<24x1xf32>
    %81 = vector.broadcast %73 : vector<24x1xf32> to vector<24x32xf32>
    %82 = arith.subf %67, %81 : vector<24x32xf32>
    %cst_30 = arith.constant 9.99999974E-6 : f32
    %83 = vector.broadcast %cst_30 : f32 to vector<24x1xf32>
    %84 = arith.addf %80, %83 : vector<24x1xf32>
    %85 = math.rsqrt %84 : vector<24x1xf32>
    %86 = vector.broadcast %85 : vector<24x1xf32> to vector<24x32xf32>
    %87 = arith.mulf %82, %86 : vector<24x32xf32>
    %88 = vector.broadcast %68 : vector<1x32xf32> to vector<24x32xf32>
    %89 = arith.mulf %87, %88 : vector<24x32xf32>
    %90 = vector.broadcast %69 : vector<1x32xf32> to vector<24x32xf32>
    %91 = arith.addf %89, %90 : vector<24x32xf32>
    %92 = arith.truncf %91 : vector<24x32xf32> to vector<24x32xbf16>
    %c0_31 = arith.constant 0 : index
    %c0_32 = arith.constant 0 : index
    %93 = vector.load %arg8[%c0_31, %c0_32] : memref<32x128xbf16, #tpu.memory_space<vmem>>, vector<32x128xbf16>
    %cst_33 = arith.constant dense<0.000000e+00> : vector<24x128xf32>
    %94 = tpu.matmul %92, %93, %cst_33 {dimension_numbers = #tpu.dot_dimension_numbers<[1], [0], [0], [1], [0, 0, 1, 1], [], []>} : vector<24x32xbf16>, vector<32x128xbf16>, vector<24x128xf32> -> vector<24x128xf32>
    %c0_34 = arith.constant 0 : index
    %c0_35 = arith.constant 0 : index
    %95 = vector.load %arg9[%c0_34, %c0_35] : memref<1x128xf32, #tpu.memory_space<vmem>>, vector<1x128xf32>
    %96 = vector.broadcast %95 : vector<1x128xf32> to vector<24x128xf32>
    %97 = arith.addf %94, %96 : vector<24x128xf32>
    %cst_36 = arith.constant 5.000000e-01 : f32
    %98 = vector.broadcast %cst_36 : f32 to vector<24x128xf32>
    %99 = arith.mulf %98, %97 : vector<24x128xf32>
    %cst_37 = arith.constant 0.707106769 : f32
    %100 = vector.broadcast %cst_37 : f32 to vector<24x128xf32>
    %101 = arith.mulf %97, %100 : vector<24x128xf32>
    %102 = math.erf %101 : vector<24x128xf32>
    %cst_38 = arith.constant 1.000000e+00 : f32
    %103 = vector.broadcast %cst_38 : f32 to vector<24x128xf32>
    %104 = arith.addf %103, %102 : vector<24x128xf32>
    %105 = arith.mulf %99, %104 : vector<24x128xf32>
    %106 = arith.truncf %105 : vector<24x128xf32> to vector<24x128xbf16>
    %c0_39 = arith.constant 0 : index
    %c0_40 = arith.constant 0 : index
    %107 = vector.load %arg10[%c0_39, %c0_40] : memref<128x32xbf16, #tpu.memory_space<vmem>>, vector<128x32xbf16>
    %cst_41 = arith.constant dense<0.000000e+00> : vector<24x32xf32>
    %108 = tpu.matmul %106, %107, %cst_41 {dimension_numbers = #tpu.dot_dimension_numbers<[1], [0], [0], [1], [0, 0, 1, 1], [], []>} : vector<24x128xbf16>, vector<128x32xbf16>, vector<24x32xf32> -> vector<24x32xf32>
    %109 = arith.addf %91, %108 : vector<24x32xf32>
    %c0_42 = arith.constant 0 : index
    %c0_43 = arith.constant 0 : index
    %110 = vector.load %arg11[%c0_42, %c0_43] : memref<1x32xf32, #tpu.memory_space<vmem>>, vector<1x32xf32>
    %111 = vector.broadcast %110 : vector<1x32xf32> to vector<24x32xf32>
    %112 = arith.addf %109, %111 : vector<24x32xf32>
    %c0_44 = arith.constant 0 : index
    %c0_45 = arith.constant 0 : index
    %113 = vector.load %arg12[%c0_44, %c0_45] : memref<1x32xf32, #tpu.memory_space<vmem>>, vector<1x32xf32>
    %c0_46 = arith.constant 0 : index
    %c0_47 = arith.constant 0 : index
    %114 = vector.load %arg13[%c0_46, %c0_47] : memref<1x32xf32, #tpu.memory_space<vmem>>, vector<1x32xf32>
    %cst_48 = arith.constant dense<0.000000e+00> : vector<24xf32>
    %115 = vector.multi_reduction <add>, %112, %cst_48 [1] : vector<24x32xf32> to vector<24xf32>
    %116 = vector.shape_cast %115 : vector<24xf32> to vector<24x1xf32>
    %cst_49 = arith.constant 3.200000e+01 : f32
    %117 = vector.broadcast %cst_49 : f32 to vector<24x1xf32>
    %118 = arith.divf %116, %117 : vector<24x1xf32>
    %119 = vector.broadcast %118 : vector<24x1xf32> to vector<24x32xf32>
    %120 = arith.subf %112, %119 : vector<24x32xf32>
    %121 = arith.mulf %120, %120 : vector<24x32xf32>
    %cst_50 = arith.constant dense<0.000000e+00> : vector<24xf32>
    %122 = vector.multi_reduction <add>, %121, %cst_50 [1] : vector<24x32xf32> to vector<24xf32>
    %123 = vector.shape_cast %122 : vector<24xf32> to vector<24x1xf32>
    %cst_51 = arith.constant 3.200000e+01 : f32
    %124 = vector.broadcast %cst_51 : f32 to vector<24x1xf32>
    %125 = arith.divf %123, %124 : vector<24x1xf32>
    %126 = vector.broadcast %118 : vector<24x1xf32> to vector<24x32xf32>
    %127 = arith.subf %112, %126 : vector<24x32xf32>
    %cst_52 = arith.constant 9.99999974E-6 : f32
    %128 = vector.broadcast %cst_52 : f32 to vector<24x1xf32>
    %129 = arith.addf %125, %128 : vector<24x1xf32>
    %130 = math.rsqrt %129 : vector<24x1xf32>
    %131 = vector.broadcast %130 : vector<24x1xf32> to vector<24x32xf32>
    %132 = arith.mulf %127, %131 : vector<24x32xf32>
    %133 = vector.broadcast %113 : vector<1x32xf32> to vector<24x32xf32>
    %134 = arith.mulf %132, %133 : vector<24x32xf32>
    %135 = vector.broadcast %114 : vector<1x32xf32> to vector<24x32xf32>
    %136 = arith.addf %134, %135 : vector<24x32xf32>
    %c0_53 = arith.constant 0 : index
    %c0_54 = arith.constant 0 : index
    %c0_55 = arith.constant 0 : index
    %137 = vector.load %arg14[%c0_53, %c0_54, %c0_55] : memref<1x24x32xf32, #tpu.memory_space<vmem>>, vector<1x24x32xf32>
    %138 = vector.shape_cast %137 : vector<1x24x32xf32> to vector<24x32xf32>
    %139 = vector.shape_cast %136 : vector<24x32xf32> to vector<1x24x32xf32>
    tpu.vector_store %arg14[%c0_53, %c0_54, %c0_55], %139 {strides = array<i32>} : memref<1x24x32xf32, #tpu.memory_space<vmem>>, vector<1x24x32xf32>,
    return
  }
  func.func @transform_0(%arg0: i32) -> (i32, i32, i32) {
    %c0_i32 = arith.constant 0 : i32
    %c0_i32_0 = arith.constant 0 : i32
    %c0_i32_1 = arith.constant 0 : i32
    return %arg0, %c0_i32, %c0_i32_0 : i32, i32, i32
  }
  func.func @transform_1(%arg0: i32) -> (i32, i32) {
    %c0_i32 = arith.constant 0 : i32
    %c0_i32_0 = arith.constant 0 : i32
    %c0_i32_1 = arith.constant 0 : i32
    return %c0_i32, %c0_i32_0 : i32, i32
  }
  func.func @transform_2(%arg0: i32) -> (i32, i32) {
    %c0_i32 = arith.constant 0 : i32
    %c0_i32_0 = arith.constant 0 : i32
    %c0_i32_1 = arith.constant 0 : i32
    return %c0_i32, %c0_i32_0 : i32, i32
  }
  func.func @transform_3(%arg0: i32) -> (i32, i32) {
    %c0_i32 = arith.constant 0 : i32
    %c0_i32_0 = arith.constant 0 : i32
    %c0_i32_1 = arith.constant 0 : i32
    return %c0_i32, %c0_i32_0 : i32, i32
  }
  func.func @transform_4(%arg0: i32) -> (i32, i32) {
    %c0_i32 = arith.constant 0 : i32
    %c0_i32_0 = arith.constant 0 : i32
    %c0_i32_1 = arith.constant 0 : i32
    return %c0_i32, %c0_i32_0 : i32, i32
  }
  func.func @transform_5(%arg0: i32) -> (i32, i32) {
    %c0_i32 = arith.constant 0 : i32
    %c0_i32_0 = arith.constant 0 : i32
    %c0_i32_1 = arith.constant 0 : i32
    return %c0_i32, %c0_i32_0 : i32, i32
  }
  func.func @transform_6(%arg0: i32) -> (i32, i32) {
    %c0_i32 = arith.constant 0 : i32
    %c0_i32_0 = arith.constant 0 : i32
    %c0_i32_1 = arith.constant 0 : i32
    return %c0_i32, %c0_i32_0 : i32, i32
  }
  func.func @transform_7(%arg0: i32) -> (i32, i32) {
    %c0_i32 = arith.constant 0 : i32
    %c0_i32_0 = arith.constant 0 : i32
    %c0_i32_1 = arith.constant 0 : i32
    return %c0_i32, %c0_i32_0 : i32, i32
  }
  func.func @transform_8(%arg0: i32) -> (i32, i32) {
    %c0_i32 = arith.constant 0 : i32
    %c0_i32_0 = arith.constant 0 : i32
    %c0_i32_1 = arith.constant 0 : i32
    return %c0_i32, %c0_i32_0 : i32, i32
  }
  func.func @transform_9(%arg0: i32) -> (i32, i32) {
    %c0_i32 = arith.constant 0 : i32
    %c0_i32_0 = arith.constant 0 : i32
    %c0_i32_1 = arith.constant 0 : i32
    return %c0_i32, %c0_i32_0 : i32, i32
  }
  func.func @transform_10(%arg0: i32) -> (i32, i32) {
    %c0_i32 = arith.constant 0 : i32
    %c0_i32_0 = arith.constant 0 : i32
    %c0_i32_1 = arith.constant 0 : i32
    return %c0_i32, %c0_i32_0 : i32, i32
  }
  func.func @transform_11(%arg0: i32) -> (i32, i32) {
    %c0_i32 = arith.constant 0 : i32
    %c0_i32_0 = arith.constant 0 : i32
    %c0_i32_1 = arith.constant 0 : i32
    return %c0_i32, %c0_i32_0 : i32, i32
  }
  func.func @transform_12(%arg0: i32) -> (i32, i32) {
    %c0_i32 = arith.constant 0 : i32
    %c0_i32_0 = arith.constant 0 : i32
    %c0_i32_1 = arith.constant 0 : i32
    return %c0_i32, %c0_i32_0 : i32, i32
  }
  func.func @transform_13(%arg0: i32) -> (i32, i32, i32) {
    %c0_i32 = arith.constant 0 : i32
    %c0_i32_0 = arith.constant 0 : i32
    %c0_i32_1 = arith.constant 0 : i32
    return %arg0, %c0_i32, %c0_i32_0 : i32, i32, i32
  }
}

module attributes {stable_mosaic.version = 11 : i64} {
  func.func @_heads_kernel(%arg0: i32, %arg1: memref<1x8x3x32xf32, #tpu.memory_space<vmem>>, %arg2: memref<32x11xbf16, #tpu.memory_space<vmem>>, %arg3: memref<1x11xf32, #tpu.memory_space<vmem>>, %arg4: memref<32x3xbf16, #tpu.memory_space<vmem>>, %arg5: memref<1x3xf32, #tpu.memory_space<vmem>>, %arg6: memref<32x5xbf16, #tpu.memory_space<vmem>>, %arg7: memref<1x5xf32, #tpu.memory_space<vmem>>, %arg8: memref<1x8x11xf32, #tpu.memory_space<vmem>>, %arg9: memref<1x8x3xf32, #tpu.memory_space<vmem>>, %arg10: memref<1x8x5xf32, #tpu.memory_space<vmem>>) attributes {dimension_semantics = [#tpu.dimension_semantics<parallel>], iteration_bounds = array<i64: 2>, scalar_prefetch = 0 : i64, scratch_operands = 0 : i64, tpu.core_type = #tpu.core_type<tc>, window_params = [{transform_indices = @transform_0, window_bounds = array<i64: 1, 8, 3, 32>}, {pipeline_mode = #tpu.pipeline_mode<synchronous>, transform_indices = @transform_1, window_bounds = array<i64: 32, 11>}, {pipeline_mode = #tpu.pipeline_mode<synchronous>, transform_indices = @transform_2, window_bounds = array<i64: 1, 11>}, {pipeline_mode = #tpu.pipeline_mode<synchronous>, transform_indices = @transform_3, window_bounds = array<i64: 32, 3>}, {pipeline_mode = #tpu.pipeline_mode<synchronous>, transform_indices = @transform_4, window_bounds = array<i64: 1, 3>}, {pipeline_mode = #tpu.pipeline_mode<synchronous>, transform_indices = @transform_5, window_bounds = array<i64: 32, 5>}, {pipeline_mode = #tpu.pipeline_mode<synchronous>, transform_indices = @transform_6, window_bounds = array<i64: 1, 5>}, {transform_indices = @transform_7, window_bounds = array<i64: 1, 8, 11>}, {transform_indices = @transform_8, window_bounds = array<i64: 1, 8, 3>}, {transform_indices = @transform_9, window_bounds = array<i64: 1, 8, 5>}]} {
    %c0 = arith.constant 0 : index
    %c0_0 = arith.constant 0 : index
    %c0_1 = arith.constant 0 : index
    %c0_2 = arith.constant 0 : index
    %0 = vector.load %arg1[%c0, %c0_0, %c0_1, %c0_2] : memref<1x8x3x32xf32, #tpu.memory_space<vmem>>, vector<1x8x1x32xf32>
    %1 = vector.shape_cast %0 : vector<1x8x1x32xf32> to vector<8x32xf32>
    %c0_3 = arith.constant 0 : index
    %c0_4 = arith.constant 0 : index
    %c1 = arith.constant 1 : index
    %c0_5 = arith.constant 0 : index
    %2 = vector.load %arg1[%c0_3, %c0_4, %c1, %c0_5] : memref<1x8x3x32xf32, #tpu.memory_space<vmem>>, vector<1x8x1x32xf32>
    %3 = vector.shape_cast %2 : vector<1x8x1x32xf32> to vector<8x32xf32>
    %c0_6 = arith.constant 0 : index
    %c0_7 = arith.constant 0 : index
    %c2 = arith.constant 2 : index
    %c0_8 = arith.constant 0 : index
    %4 = vector.load %arg1[%c0_6, %c0_7, %c2, %c0_8] : memref<1x8x3x32xf32, #tpu.memory_space<vmem>>, vector<1x8x1x32xf32>
    %5 = vector.shape_cast %4 : vector<1x8x1x32xf32> to vector<8x32xf32>
    %6 = arith.truncf %5 : vector<8x32xf32> to vector<8x32xbf16>
    %c0_9 = arith.constant 0 : index
    %c0_10 = arith.constant 0 : index
    %7 = vector.load %arg2[%c0_9, %c0_10] : memref<32x11xbf16, #tpu.memory_space<vmem>>, vector<32x11xbf16>
    %cst = arith.constant dense<0.000000e+00> : vector<8x11xf32>
    %8 = tpu.matmul %6, %7, %cst {dimension_numbers = #tpu.dot_dimension_numbers<[1], [0], [0], [1], [0, 0, 1, 1], [], []>} : vector<8x32xbf16>, vector<32x11xbf16>, vector<8x11xf32> -> vector<8x11xf32>
    %c0_11 = arith.constant 0 : index
    %c0_12 = arith.constant 0 : index
    %9 = vector.load %arg3[%c0_11, %c0_12] : memref<1x11xf32, #tpu.memory_space<vmem>>, vector<1x11xf32>
    %10 = vector.broadcast %9 : vector<1x11xf32> to vector<8x11xf32>
    %11 = arith.addf %8, %10 : vector<8x11xf32>
    %c0_13 = arith.constant 0 : index
    %c0_14 = arith.constant 0 : index
    %c0_15 = arith.constant 0 : index
    %12 = vector.load %arg8[%c0_13, %c0_14, %c0_15] : memref<1x8x11xf32, #tpu.memory_space<vmem>>, vector<1x8x11xf32>
    %13 = vector.shape_cast %12 : vector<1x8x11xf32> to vector<8x11xf32>
    %14 = vector.shape_cast %11 : vector<8x11xf32> to vector<1x8x11xf32>
    tpu.vector_store %arg8[%c0_13, %c0_14, %c0_15], %14 {strides = array<i32>} : memref<1x8x11xf32, #tpu.memory_space<vmem>>, vector<1x8x11xf32>,
    %15 = arith.truncf %3 : vector<8x32xf32> to vector<8x32xbf16>
    %c0_16 = arith.constant 0 : index
    %c0_17 = arith.constant 0 : index
    %16 = vector.load %arg4[%c0_16, %c0_17] : memref<32x3xbf16, #tpu.memory_space<vmem>>, vector<32x3xbf16>
    %cst_18 = arith.constant dense<0.000000e+00> : vector<8x3xf32>
    %17 = tpu.matmul %15, %16, %cst_18 {dimension_numbers = #tpu.dot_dimension_numbers<[1], [0], [0], [1], [0, 0, 1, 1], [], []>} : vector<8x32xbf16>, vector<32x3xbf16>, vector<8x3xf32> -> vector<8x3xf32>
    %c0_19 = arith.constant 0 : index
    %c0_20 = arith.constant 0 : index
    %18 = vector.load %arg5[%c0_19, %c0_20] : memref<1x3xf32, #tpu.memory_space<vmem>>, vector<1x3xf32>
    %19 = vector.broadcast %18 : vector<1x3xf32> to vector<8x3xf32>
    %20 = arith.addf %17, %19 : vector<8x3xf32>
    %c0_21 = arith.constant 0 : index
    %c0_22 = arith.constant 0 : index
    %c0_23 = arith.constant 0 : index
    %21 = vector.load %arg9[%c0_21, %c0_22, %c0_23] : memref<1x8x3xf32, #tpu.memory_space<vmem>>, vector<1x8x3xf32>
    %22 = vector.shape_cast %21 : vector<1x8x3xf32> to vector<8x3xf32>
    %23 = vector.shape_cast %20 : vector<8x3xf32> to vector<1x8x3xf32>
    tpu.vector_store %arg9[%c0_21, %c0_22, %c0_23], %23 {strides = array<i32>} : memref<1x8x3xf32, #tpu.memory_space<vmem>>, vector<1x8x3xf32>,
    %24 = arith.truncf %1 : vector<8x32xf32> to vector<8x32xbf16>
    %c0_24 = arith.constant 0 : index
    %c0_25 = arith.constant 0 : index
    %25 = vector.load %arg6[%c0_24, %c0_25] : memref<32x5xbf16, #tpu.memory_space<vmem>>, vector<32x5xbf16>
    %cst_26 = arith.constant dense<0.000000e+00> : vector<8x5xf32>
    %26 = tpu.matmul %24, %25, %cst_26 {dimension_numbers = #tpu.dot_dimension_numbers<[1], [0], [0], [1], [0, 0, 1, 1], [], []>} : vector<8x32xbf16>, vector<32x5xbf16>, vector<8x5xf32> -> vector<8x5xf32>
    %c0_27 = arith.constant 0 : index
    %c0_28 = arith.constant 0 : index
    %27 = vector.load %arg7[%c0_27, %c0_28] : memref<1x5xf32, #tpu.memory_space<vmem>>, vector<1x5xf32>
    %28 = vector.broadcast %27 : vector<1x5xf32> to vector<8x5xf32>
    %29 = arith.addf %26, %28 : vector<8x5xf32>
    %c0_29 = arith.constant 0 : index
    %c0_30 = arith.constant 0 : index
    %c0_31 = arith.constant 0 : index
    %30 = vector.load %arg10[%c0_29, %c0_30, %c0_31] : memref<1x8x5xf32, #tpu.memory_space<vmem>>, vector<1x8x5xf32>
    %31 = vector.shape_cast %30 : vector<1x8x5xf32> to vector<8x5xf32>
    %32 = vector.shape_cast %29 : vector<8x5xf32> to vector<1x8x5xf32>
    tpu.vector_store %arg10[%c0_29, %c0_30, %c0_31], %32 {strides = array<i32>} : memref<1x8x5xf32, #tpu.memory_space<vmem>>, vector<1x8x5xf32>,
    return
  }
  func.func @transform_0(%arg0: i32) -> (i32, i32, i32, i32) {
    %c0_i32 = arith.constant 0 : i32
    %c0_i32_0 = arith.constant 0 : i32
    %c0_i32_1 = arith.constant 0 : i32
    %c0_i32_2 = arith.constant 0 : i32
    return %arg0, %c0_i32, %c0_i32_0, %c0_i32_1 : i32, i32, i32, i32
  }
  func.func @transform_1(%arg0: i32) -> (i32, i32) {
    %c0_i32 = arith.constant 0 : i32
    %c0_i32_0 = arith.constant 0 : i32
    %c0_i32_1 = arith.constant 0 : i32
    return %c0_i32, %c0_i32_0 : i32, i32
  }
  func.func @transform_2(%arg0: i32) -> (i32, i32) {
    %c0_i32 = arith.constant 0 : i32
    %c0_i32_0 = arith.constant 0 : i32
    %c0_i32_1 = arith.constant 0 : i32
    return %c0_i32, %c0_i32_0 : i32, i32
  }
  func.func @transform_3(%arg0: i32) -> (i32, i32) {
    %c0_i32 = arith.constant 0 : i32
    %c0_i32_0 = arith.constant 0 : i32
    %c0_i32_1 = arith.constant 0 : i32
    return %c0_i32, %c0_i32_0 : i32, i32
  }
  func.func @transform_4(%arg0: i32) -> (i32, i32) {
    %c0_i32 = arith.constant 0 : i32
    %c0_i32_0 = arith.constant 0 : i32
    %c0_i32_1 = arith.constant 0 : i32
    return %c0_i32, %c0_i32_0 : i32, i32
  }
  func.func @transform_5(%arg0: i32) -> (i32, i32) {
    %c0_i32 = arith.constant 0 : i32
    %c0_i32_0 = arith.constant 0 : i32
    %c0_i32_1 = arith.constant 0 : i32
    return %c0_i32, %c0_i32_0 : i32, i32
  }
  func.func @transform_6(%arg0: i32) -> (i32, i32) {
    %c0_i32 = arith.constant 0 : i32
    %c0_i32_0 = arith.constant 0 : i32
    %c0_i32_1 = arith.constant 0 : i32
    return %c0_i32, %c0_i32_0 : i32, i32
  }
  func.func @transform_7(%arg0: i32) -> (i32, i32, i32) {
    %c0_i32 = arith.constant 0 : i32
    %c0_i32_0 = arith.constant 0 : i32
    %c0_i32_1 = arith.constant 0 : i32
    return %arg0, %c0_i32, %c0_i32_0 : i32, i32, i32
  }
  func.func @transform_8(%arg0: i32) -> (i32, i32, i32) {
    %c0_i32 = arith.constant 0 : i32
    %c0_i32_0 = arith.constant 0 : i32
    %c0_i32_1 = arith.constant 0 : i32
    return %arg0, %c0_i32, %c0_i32_0 : i32, i32, i32
  }
  func.func @transform_9(%arg0: i32) -> (i32, i32, i32) {
    %c0_i32 = arith.constant 0 : i32
    %c0_i32_0 = arith.constant 0 : i32
    %c0_i32_1 = arith.constant 0 : i32
    return %arg0, %c0_i32, %c0_i32_0 : i32, i32, i32
  }
}

</mosaic_0001>

<llo_original>
// kernel: adapt_forward.5
$region0: #{adapt_forward.5}
  #allocation0 [shape = 'u32[]', space=smem, size = 0x4, offset = 0x4, fixed_abs, tag = 'smem constant byte address 0x4 - core index']
  #allocation1 [shape = 'u32[72,128]{1,0:T(1,128)}', space=vmem, size = 0x9000, scoped, tag = 'internal scratch']
  %s0 = inlined_call_operand.vmem [shape: f32[2,24,32], index: 0, kind: input, shape index: {}]
  %s1 = inlined_call_operand.vmem [shape: bf16[32,96], index: 1, kind: input, shape index: {}]
  %s2 = inlined_call_operand.vmem [shape: f32[1,96], index: 2, kind: input, shape index: {}]
  %s3 = inlined_call_operand.vmem [shape: bf16[32,32], index: 3, kind: input, shape index: {}]
  %s4 = inlined_call_operand.vmem [shape: f32[1,32], index: 4, kind: input, shape index: {}]
  %s5 = inlined_call_operand.vmem [shape: f32[1,32], index: 5, kind: input, shape index: {}, may-alias: {5,11}]
  %s6 = inlined_call_operand.vmem [shape: f32[1,32], index: 6, kind: input, shape index: {}, may-alias: {6,12}]
  %s7 = inlined_call_operand.vmem [shape: bf16[32,128], index: 7, kind: input, shape index: {}]
  %s8 = inlined_call_operand.vmem [shape: f32[1,128], index: 8, kind: input, shape index: {}]
  %s9 = inlined_call_operand.vmem [shape: bf16[128,32], index: 9, kind: input, shape index: {}]
  %s10 = inlined_call_operand.vmem [shape: f32[1,32], index: 10, kind: input, shape index: {}]
  %s11 = inlined_call_operand.vmem [shape: f32[1,32], index: 11, kind: input, shape index: {}, may-alias: {5,11}]
  %s12 = inlined_call_operand.vmem [shape: f32[1,32], index: 12, kind: input, shape index: {}, may-alias: {6,12}]
  %s13 = inlined_call_operand.vmem [shape: f32[2,24,32], index: 13, kind: output, shape index: {}]
  %s14 = sld [smem:[#allocation0]]
  $region85: #{adapt_forward.5} parent=0
    _
  %s16 = ssub.s32 1, %s14
  %s17 = scalar_select 0, %s16, %s14
  loop: start=0, step=1, limit=4
  $region2: #{adapt_forward.5} parent=0 // loop_pre_header
    _
  $region3: #{adapt_forward.5} parent=0 // loop_header
    %s19 = sphi 0, %s23
    %p20 = scmp.ge.s32.totalorder %s19, 4
    %s29 = sphi 0, %s31
    %s32 = sphi 0, %s29
    %s33 = sphi 0, %s32
    %s49 = sphi 0, %s33
    %s53 = sphi 0, %s53
    %s55 = sphi 0, %s53
    %s56 = sphi 0, %s55
    %s70 = sphi 0, %s56
    %s74 = sphi 0, %s74
    %s76 = sphi 0, %s74
    %s77 = sphi 0, %s76
    %s91 = sphi 0, %s77
    %s95 = sphi 0, %s95
    %s97 = sphi 0, %s95
    %s98 = sphi 0, %s97
    %s112 = sphi 0, %s98
    %s116 = sphi 0, %s116
    %s118 = sphi 0, %s116
    %s119 = sphi 0, %s118
    %s133 = sphi 0, %s119
    %s137 = sphi 0, %s137
    %s139 = sphi 0, %s137
    %s140 = sphi 0, %s139
    %s154 = sphi 0, %s140
    %s158 = sphi 0, %s158
    %s160 = sphi 0, %s158
    %s161 = sphi 0, %s160
    %s175 = sphi 0, %s161
    %s179 = sphi 0, %s179
    %s181 = sphi 0, %s179
    %s182 = sphi 0, %s181
    %s196 = sphi 0, %s182
    %s200 = sphi 0, %s200
    %s202 = sphi 0, %s200
    %s203 = sphi 0, %s202
    %s217 = sphi 0, %s203
    %s221 = sphi 0, %s221
    %s223 = sphi 0, %s221
    %s224 = sphi 0, %s223
    %s238 = sphi 0, %s224
    %s242 = sphi 0, %s242
    %s244 = sphi 0, %s242
    %s245 = sphi 0, %s244
    %s259 = sphi 0, %s245
    %s263 = sphi 0, %s263
    %s265 = sphi 0, %s263
    %s266 = sphi 0, %s265
    %s280 = sphi 0, %s266
    %s284 = sphi 0, %s284
    %s286 = sphi 0, %s284
    %s287 = sphi 0, %s286
    %s301 = sphi 0, %s287
    %s307 = sphi 0, %s309
    %s310 = sphi 0, %s307
    %s311 = sphi 0, %s310
    %s327 = sphi 0, %s311
  $region4: #{adapt_forward.5} parent=0 // loop_header_branch
    %22 = sbr.rel (%p20) target = $region8
  $region5: #{adapt_forward.5} parent=0 // loop_body
    %s24 = ssub.s32 %s19, 1
    %s25 = ssub.s32 %s19, 2
    %s26 = sadd.s32 %s19, 1
    %s27 = ssub.s32 %s19, %s26
    %p28 = scmp.eq.s32.totalorder %s27, 0
    %s30 = sadd.s32 %s29, 1
    %s31 = scalar_select %p28, %s29, %s30
    %p34 = pneg %p28
    %p35 = scmp.eq.s32.totalorder %s19, 1
    %p36 = por %p34, %p35
    %p37 = scmp.ne.s32.totalorder %s29, %s32
    %p38 = scmp.eq.s32.totalorder %s19, 0
    %p39 = por %p37, %p38
    %p40 = scmp.ne.s32.totalorder %s29, %s32
    %p41 = scmp.eq.s32.totalorder %s24, 1
    %p42 = por %p40, %p41
    %p43 = scmp.ne.s32.totalorder %s32, %s33
    %p44 = scmp.eq.s32.totalorder %s24, 0
    %p45 = por %p43, %p44
    %p46 = scmp.ne.s32.totalorder %s32, %s33
    %p47 = scmp.eq.s32.totalorder %s25, 1
    %p48 = por %p46, %p47
    %p50 = scmp.ne.s32.totalorder %s33, %s49
    %p51 = scmp.eq.s32.totalorder %s25, 0
    %p52 = por %p50, %p51
    %s54 = sadd.s32 %s53, 1
    %p57 = scmp.eq.s32.totalorder %s19, 1
    %p58 = scmp.ne.s32.totalorder %s53, %s55
    %p59 = scmp.eq.s32.totalorder %s19, 0
    %p60 = por %p58, %p59
    %p61 = scmp.ne.s32.totalorder %s53, %s55
    %p62 = scmp.eq.s32.totalorder %s24, 1
    %p63 = por %p61, %p62
    %p64 = scmp.ne.s32.totalorder %s55, %s56
    %p65 = scmp.eq.s32.totalorder %s24, 0
    %p66 = por %p64, %p65
    %p67 = scmp.ne.s32.totalorder %s55, %s56
    %p68 = scmp.eq.s32.totalorder %s25, 1
    %p69 = por %p67, %p68
    %p71 = scmp.ne.s32.totalorder %s56, %s70
    %p72 = scmp.eq.s32.totalorder %s25, 0
    %p73 = por %p71, %p72
    %s75 = sadd.s32 %s74, 1
    %p78 = scmp.eq.s32.totalorder %s19, 1
    %p79 = scmp.ne.s32.totalorder %s74, %s76
    %p80 = scmp.eq.s32.totalorder %s19, 0
    %p81 = por %p79, %p80
    %p82 = scmp.ne.s32.totalorder %s74, %s76
    %p83 = scmp.eq.s32.totalorder %s24, 1
    %p84 = por %p82, %p83
    %p85 = scmp.ne.s32.totalorder %s76, %s77
    %p86 = scmp.eq.s32.totalorder %s24, 0
    %p87 = por %p85, %p86
    %p88 = scmp.ne.s32.totalorder %s76, %s77
    %p89 = scmp.eq.s32.totalorder %s25, 1
    %p90 = por %p88, %p89
    %p92 = scmp.ne.s32.totalorder %s77, %s91
    %p93 = scmp.eq.s32.totalorder %s25, 0
    %p94 = por %p92, %p93
    %s96 = sadd.s32 %s95, 1
    %p99 = scmp.eq.s32.totalorder %s19, 1
    %p100 = scmp.ne.s32.totalorder %s95, %s97
    %p101 = scmp.eq.s32.totalorder %s19, 0
    %p102 = por %p100, %p101
    %p103 = scmp.ne.s32.totalorder %s95, %s97
    %p104 = scmp.eq.s32.totalorder %s24, 1
    %p105 = por %p103, %p104
    %p106 = scmp.ne.s32.totalorder %s97, %s98
    %p107 = scmp.eq.s32.totalorder %s24, 0
    %p108 = por %p106, %p107
    %p109 = scmp.ne.s32.totalorder %s97, %s98
    %p110 = scmp.eq.s32.totalorder %s25, 1
    %p111 = por %p109, %p110
    %p113 = scmp.ne.s32.totalorder %s98, %s112
    %p114 = scmp.eq.s32.totalorder %s25, 0
    %p115 = por %p113, %p114
    %s117 = sadd.s32 %s116, 1
    %p120 = scmp.eq.s32.totalorder %s19, 1
    %p121 = scmp.ne.s32.totalorder %s116, %s118
    %p122 = scmp.eq.s32.totalorder %s19, 0
    %p123 = por %p121, %p122
    %p124 = scmp.ne.s32.totalorder %s116, %s118
    %p125 = scmp.eq.s32.totalorder %s24, 1
    %p126 = por %p124, %p125
    %p127 = scmp.ne.s32.totalorder %s118, %s119
    %p128 = scmp.eq.s32.totalorder %s24, 0
    %p129 = por %p127, %p128
    %p130 = scmp.ne.s32.totalorder %s118, %s119
    %p131 = scmp.eq.s32.totalorder %s25, 1
    %p132 = por %p130, %p131
    %p134 = scmp.ne.s32.totalorder %s119, %s133
    %p135 = scmp.eq.s32.totalorder %s25, 0
    %p136 = por %p134, %p135
    %s138 = sadd.s32 %s137, 1
    %p141 = scmp.eq.s32.totalorder %s19, 1
    %p142 = scmp.ne.s32.totalorder %s137, %s139
    %p143 = scmp.eq.s32.totalorder %s19, 0
    %p144 = por %p142, %p143
    %p145 = scmp.ne.s32.totalorder %s137, %s139
    %p146 = scmp.eq.s32.totalorder %s24, 1
    %p147 = por %p145, %p146
    %p148 = scmp.ne.s32.totalorder %s139, %s140
    %p149 = scmp.eq.s32.totalorder %s24, 0
    %p150 = por %p148, %p149
    %p151 = scmp.ne.s32.totalorder %s139, %s140
    %p152 = scmp.eq.s32.totalorder %s25, 1
    %p153 = por %p151, %p152
    %p155 = scmp.ne.s32.totalorder %s140, %s154
    %p156 = scmp.eq.s32.totalorder %s25, 0
    %p157 = por %p155, %p156
    %s159 = sadd.s32 %s158, 1
    %p162 = scmp.eq.s32.totalorder %s19, 1
    %p163 = scmp.ne.s32.totalorder %s158, %s160
    %p164 = scmp.eq.s32.totalorder %s19, 0
    %p165 = por %p163, %p164
    %p166 = scmp.ne.s32.totalorder %s158, %s160
    %p167 = scmp.eq.s32.totalorder %s24, 1
    %p168 = por %p166, %p167
    %p169 = scmp.ne.s32.totalorder %s160, %s161
    %p170 = scmp.eq.s32.totalorder %s24, 0
    %p171 = por %p169, %p170
    %p172 = scmp.ne.s32.totalorder %s160, %s161
    %p173 = scmp.eq.s32.totalorder %s25, 1
    %p174 = por %p172, %p173
    %p176 = scmp.ne.s32.totalorder %s161, %s175
    %p177 = scmp.eq.s32.totalorder %s25, 0
    %p178 = por %p176, %p177
    %s180 = sadd.s32 %s179, 1
    %p183 = scmp.eq.s32.totalorder %s19, 1
    %p184 = scmp.ne.s32.totalorder %s179, %s181
    %p185 = scmp.eq.s32.totalorder %s19, 0
    %p186 = por %p184, %p185
    %p187 = scmp.ne.s32.totalorder %s179, %s181
    %p188 = scmp.eq.s32.totalorder %s24, 1
    %p189 = por %p187, %p188
    %p190 = scmp.ne.s32.totalorder %s181, %s182
    %p191 = scmp.eq.s32.totalorder %s24, 0
    %p192 = por %p190, %p191
    %p193 = scmp.ne.s32.totalorder %s181, %s182
    %p194 = scmp.eq.s32.totalorder %s25, 1
    %p195 = por %p193, %p194
    %p197 = scmp.ne.s32.totalorder %s182, %s196
    %p198 = scmp.eq.s32.totalorder %s25, 0
    %p199 = por %p197, %p198
    %s201 = sadd.s32 %s200, 1
    %p204 = scmp.eq.s32.totalorder %s19, 1
    %p205 = scmp.ne.s32.totalorder %s200, %s202
    %p206 = scmp.eq.s32.totalorder %s19, 0
    %p207 = por %p205, %p206
    %p208 = scmp.ne.s32.totalorder %s200, %s202
    %p209 = scmp.eq.s32.totalorder %s24, 1
    %p210 = por %p208, %p209
    %p211 = scmp.ne.s32.totalorder %s202, %s203
    %p212 = scmp.eq.s32.totalorder %s24, 0
    %p213 = por %p211, %p212
    %p214 = scmp.ne.s32.totalorder %s202, %s203
    %p215 = scmp.eq.s32.totalorder %s25, 1
    %p216 = por %p214, %p215
    %p218 = scmp.ne.s32.totalorder %s203, %s217
    %p219 = scmp.eq.s32.totalorder %s25, 0
    %p220 = por %p218, %p219
    %s222 = sadd.s32 %s221, 1
    %p225 = scmp.eq.s32.totalorder %s19, 1
    %p226 = scmp.ne.s32.totalorder %s221, %s223
    %p227 = scmp.eq.s32.totalorder %s19, 0
    %p228 = por %p226, %p227
    %p229 = scmp.ne.s32.totalorder %s221, %s223
    %p230 = scmp.eq.s32.totalorder %s24, 1
    %p231 = por %p229, %p230
    %p232 = scmp.ne.s32.totalorder %s223, %s224
    %p233 = scmp.eq.s32.totalorder %s24, 0
    %p234 = por %p232, %p233
    %p235 = scmp.ne.s32.totalorder %s223, %s224
    %p236 = scmp.eq.s32.totalorder %s25, 1
    %p237 = por %p235, %p236
    %p239 = scmp.ne.s32.totalorder %s224, %s238
    %p240 = scmp.eq.s32.totalorder %s25, 0
    %p241 = por %p239, %p240
    %s243 = sadd.s32 %s242, 1
    %p246 = scmp.eq.s32.totalorder %s19, 1
    %p247 = scmp.ne.s32.totalorder %s242, %s244
    %p248 = scmp.eq.s32.totalorder %s19, 0
    %p249 = por %p247, %p248
    %p250 = scmp.ne.s32.totalorder %s242, %s244
    %p251 = scmp.eq.s32.totalorder %s24, 1
    %p252 = por %p250, %p251
    %p253 = scmp.ne.s32.totalorder %s244, %s245
    %p254 = scmp.eq.s32.totalorder %s24, 0
    %p255 = por %p253, %p254
    %p256 = scmp.ne.s32.totalorder %s244, %s245
    %p257 = scmp.eq.s32.totalorder %s25, 1
    %p258 = por %p256, %p257
    %p260 = scmp.ne.s32.totalorder %s245, %s259
    %p261 = scmp.eq.s32.totalorder %s25, 0
    %p262 = por %p260, %p261
    %s264 = sadd.s32 %s263, 1
    %p267 = scmp.eq.s32.totalorder %s19, 1
    %p268 = scmp.ne.s32.totalorder %s263, %s265
    %p269 = scmp.eq.s32.totalorder %s19, 0
    %p270 = por %p268, %p269
    %p271 = scmp.ne.s32.totalorder %s263, %s265
    %p272 = scmp.eq.s32.totalorder %s24, 1
    %p273 = por %p271, %p272
    %p274 = scmp.ne.s32.totalorder %s265, %s266
    %p275 = scmp.eq.s32.totalorder %s24, 0
    %p276 = por %p274, %p275
    %p277 = scmp.ne.s32.totalorder %s265, %s266
    %p278 = scmp.eq.s32.totalorder %s25, 1
    %p279 = por %p277, %p278
    %p281 = scmp.ne.s32.totalorder %s266, %s280
    %p282 = scmp.eq.s32.totalorder %s25, 0
    %p283 = por %p281, %p282
    %s285 = sadd.s32 %s284, 1
    %p288 = scmp.eq.s32.totalorder %s19, 1
    %p289 = scmp.ne.s32.totalorder %s284, %s286
    %p290 = scmp.eq.s32.totalorder %s19, 0
    %p291 = por %p289, %p290
    %p292 = scmp.ne.s32.totalorder %s284, %s286
    %p293 = scmp.eq.s32.totalorder %s24, 1
    %p294 = por %p292, %p293
    %p295 = scmp.ne.s32.totalorder %s286, %s287
    %p296 = scmp.eq.s32.totalorder %s24, 0
    %p297 = por %p295, %p296
    %p298 = scmp.ne.s32.totalorder %s286, %s287
    %p299 = scmp.eq.s32.totalorder %s25, 1
    %p300 = por %p298, %p299
    %p302 = scmp.ne.s32.totalorder %s287, %s301
    %p303 = scmp.eq.s32.totalorder %s25, 0
    %p304 = por %p302, %p303
    %s305 = ssub.s32 %s19, %s26
    %p306 = scmp.eq.s32.totalorder %s305, 0
    %s308 = sadd.s32 %s307, 1
    %s309 = scalar_select %p306, %s307, %s308
    %p312 = pneg %p306
    %p313 = scmp.eq.s32.totalorder %s19, 1
    %p314 = por %p312, %p313
    %p315 = scmp.ne.s32.totalorder %s307, %s310
    %p316 = scmp.eq.s32.totalorder %s19, 0
    %p317 = por %p315, %p316
    %p318 = scmp.ne.s32.totalorder %s307, %s310
    %p319 = scmp.eq.s32.totalorder %s24, 1
    %p320 = por %p318, %p319
    %p321 = scmp.ne.s32.totalorder %s310, %s311
    %p322 = scmp.eq.s32.totalorder %s24, 0
    %p323 = por %p321, %p322
    %p324 = scmp.ne.s32.totalorder %s310, %s311
    %p325 = scmp.eq.s32.totalorder %s25, 1
    %p326 = por %p324, %p325
    %p328 = scmp.ne.s32.totalorder %s311, %s327
    %p329 = scmp.eq.s32.totalorder %s25, 0
    %p330 = por %p328, %p329
    %p331 = scmp.le.s32.totalorder 1, %s19
    %p332 = scmp.lt.s32.totalorder %s19, 3
    %p333 = pnand %p331, %p332
    %p334 = pneg %p333
    // Predicated region
    $region9: #{adapt_forward.5} parent=5 // pred_check
      _
    $region10: #{adapt_forward.5} parent=5 // pred_check_branch
      %336 = sbr.rel (%p333) target = $region12
    $region11: #{adapt_forward.5} parent=5 // pred_region
      %s337 = ssub.s32 %s19, 1
      // Predicated region
      $region13: #{adapt_forward.5} parent=11 // pred_check
        %p338 = pneg %p66
      $region14: #{adapt_forward.5} parent=11 // pred_check_branch
        %340 = sbr.rel (%p338) target = $region16
      $region15: #{adapt_forward.5} parent=11 // pred_region
        _
      $region16: #{adapt_forward.5} parent=11 // pred_fallthru
        _
      // Predicated region
      $region17: #{adapt_forward.5} parent=11 // pred_check
        %p341 = pneg %p87
      $region18: #{adapt_forward.5} parent=11 // pred_check_branch
        %343 = sbr.rel (%p341) target = $region20
      $region19: #{adapt_forward.5} parent=11 // pred_region
        _
      $region20: #{adapt_forward.5} parent=11 // pred_fallthru
        _
      // Predicated region
      $region21: #{adapt_forward.5} parent=11 // pred_check
        %p344 = pneg %p108
      $region22: #{adapt_forward.5} parent=11 // pred_check_branch
        %346 = sbr.rel (%p344) target = $region24
      $region23: #{adapt_forward.5} parent=11 // pred_region
        _
      $region24: #{adapt_forward.5} parent=11 // pred_fallthru
        _
      // Predicated region
      $region25: #{adapt_forward.5} parent=11 // pred_check
        %p347 = pneg %p129
      $region26: #{adapt_forward.5} parent=11 // pred_check_branch
        %349 = sbr.rel (%p347) target = $region28
      $region27: #{adapt_forward.5} parent=11 // pred_region
        _
      $region28: #{adapt_forward.5} parent=11 // pred_fallthru
        _
      // Predicated region
      $region29: #{adapt_forward.5} parent=11 // pred_check
        %p350 = pneg %p150
      $region30: #{adapt_forward.5} parent=11 // pred_check_branch
        %352 = sbr.rel (%p350) target = $region32
      $region31: #{adapt_forward.5} parent=11 // pred_region
        _
      $region32: #{adapt_forward.5} parent=11 // pred_fallthru
        _
      // Predicated region
      $region33: #{adapt_forward.5} parent=11 // pred_check
        %p353 = pneg %p171
      $region34: #{adapt_forward.5} parent=11 // pred_check_branch
        %355 = sbr.rel (%p353) target = $region36
      $region35: #{adapt_forward.5} parent=11 // pred_region
        _
      $region36: #{adapt_forward.5} parent=11 // pred_fallthru
        _
      // Predicated region
      $region37: #{adapt_forward.5} parent=11 // pred_check
        %p356 = pneg %p192
      $region38: #{adapt_forward.5} parent=11 // pred_check_branch
        %358 = sbr.rel (%p356) target = $region40
      $region39: #{adapt_forward.5} parent=11 // pred_region
        _
      $region40: #{adapt_forward.5} parent=11 // pred_fallthru
        _
      // Predicated region
      $region41: #{adapt_forward.5} parent=11 // pred_check
        %p359 = pneg %p213
      $region42: #{adapt_forward.5} parent=11 // pred_check_branch
        %361 = sbr.rel (%p359) target = $region44
      $region43: #{adapt_forward.5} parent=11 // pred_region
        _
      $region44: #{adapt_forward.5} parent=11 // pred_fallthru
        _
      // Predicated region
      $region45: #{adapt_forward.5} parent=11 // pred_check
        %p362 = pneg %p234
      $region46: #{adapt_forward.5} parent=11 // pred_check_branch
        %364 = sbr.rel (%p362) target = $region48
      $region47: #{adapt_forward.5} parent=11 // pred_region
        _
      $region48: #{adapt_forward.5} parent=11 // pred_fallthru
        _
      // Predicated region
      $region49: #{adapt_forward.5} parent=11 // pred_check
        %p365 = pneg %p255
      $region50: #{adapt_forward.5} parent=11 // pred_check_branch
        %367 = sbr.rel (%p365) target = $region52
      $region51: #{adapt_forward.5} parent=11 // pred_region
        _
      $region52: #{adapt_forward.5} parent=11 // pred_fallthru
        _
      // Predicated region
      $region53: #{adapt_forward.5} parent=11 // pred_check
        %p368 = pneg %p276
      $region54: #{adapt_forward.5} parent=11 // pred_check_branch
        %370 = sbr.rel (%p368) target = $region56
      $region55: #{adapt_forward.5} parent=11 // pred_region
        _
      $region56: #{adapt_forward.5} parent=11 // pred_fallthru
        _
      // Predicated region
      $region57: #{adapt_forward.5} parent=11 // pred_check
        %p371 = pneg %p297
      $region58: #{adapt_forward.5} parent=11 // pred_check_branch
        %373 = sbr.rel (%p371) target = $region60
      $region59: #{adapt_forward.5} parent=11 // pred_region
        _
      $region60: #{adapt_forward.5} parent=11 // pred_fallthru
        _
    $region12: #{adapt_forward.5} parent=5 // pred_fallthru
      _
    %p374 = scmp.lt.s32.totalorder %s19, 2
    // Predicated region
    $region61: #{adapt_forward.5} parent=5 // pred_check
      %p375 = pneg %p374
    $region62: #{adapt_forward.5} parent=5 // pred_check_branch
      %377 = sbr.rel (%p375) target = $region64
    $region63: #{adapt_forward.5} parent=5 // pred_region
      // Predicated region
      $region65: #{adapt_forward.5} parent=63 // pred_check
        %p378 = pneg %p39
      $region66: #{adapt_forward.5} parent=63 // pred_check_branch
        %380 = sbr.rel (%p378) target = $region68
      $region67: #{adapt_forward.5} parent=63 // pred_region
        %p381 = scmp.lt.s32.totalorder %s19, 1
        %s382 = scalar_select %p381, %s19, 1
        %s383 = smul.addr %s382, 3
        %s384 = smul.addr %s383, 8
        %s385 = scalar_lea.vmem %s0, %s384
      $region68: #{adapt_forward.5} parent=63 // pred_fallthru
        _
    $region64: #{adapt_forward.5} parent=5 // pred_fallthru
      _
    %p386 = scmp.le.s32.totalorder 1, %s19
    %p387 = scmp.lt.s32.totalorder %s19, 3
    %p388 = pnand %p386, %p387
    %p389 = pneg %p388
    // Predicated region
    $region69: #{adapt_forward.5} parent=5 // pred_check
      _
    $region70: #{adapt_forward.5} parent=5 // pred_check_branch
      %391 = sbr.rel (%p388) target = $region72
    $region71: #{adapt_forward.5} parent=5 // pred_region
      %s392 = ssub.s32 %s19, 1
      %p393 = scmp.lt.s32.totalorder %s24, 1
      %s394 = scalar_select %p393, %s24, 1
      %s395 = smul.addr %s394, 3
      %s396 = smul.addr %s395, 8
      %s397 = scalar_lea.vmem %s0, %s396
      %p398 = pneg %p45
      %p399 = pneg %p42
      %p400 = pneg %p66
      %p401 = pneg %p63
      %p402 = pneg %p87
      %p403 = pneg %p84
      %p404 = pneg %p108
      %p405 = pneg %p105
      %p406 = pneg %p129
      %p407 = pneg %p126
      %p408 = pneg %p150
      %p409 = pneg %p147
      %p410 = pneg %p171
      %p411 = pneg %p168
      %p412 = pneg %p192
      %p413 = pneg %p189
      %p414 = pneg %p213
      %p415 = pneg %p210
      %p416 = pneg %p234
      %p417 = pneg %p231
      %p418 = pneg %p255
      %p419 = pneg %p252
      %p420 = pneg %p276
      %p421 = pneg %p273
      %p422 = pneg %p297
      %p423 = pneg %p294
      %p424 = pneg %p323
      %p425 = pneg %p320
      %p426 = scmp.lt.s32.totalorder %s24, 1
      %s427 = scalar_select %p426, %s24, 1
      %s428 = smul.addr %s427, 3
      %s429 = smul.addr %s428, 8
      %s430 = scalar_lea.vmem %s13, %s429
      %p431 = scmp.lt.s32.totalorder %s24, 1
      %s432 = scalar_select %p431, %s24, 1
      %s433 = smul.addr %s432, 3
      %s434 = smul.addr %s433, 8
      %s435 = scalar_lea.vmem %s0, %s434
      %p436 = scmp.lt.s32.totalorder %s24, 1
      %s437 = scalar_select %p436, %s24, 1
      %s438 = smul.addr %s437, 3
      %s439 = smul.addr %s438, 8
      %s440 = scalar_lea.vmem %s13, %s439
      %v442 = vld [vmem:[%s435] sm:$0xff]
      %v443 = vld [vmem:[%s435 + $0x8] sm:$0xff]
      %v444 = vld [vmem:[%s435 + $0x10] sm:$0xff]
      %v445 = vpack.c.bf16 %v443, %v442
      %v446 = vpack.c.bf16 %v444, %v444
      %v447 = vld [vmem:[%s1] sm:$0xf]
      %v448 = vld [vmem:[%s1 + $0x4] sm:$0xf]
      %v449 = vld [vmem:[%s1 + $0x8] sm:$0xf]
      %v450 = vld [vmem:[%s1 + $0xc] sm:$0xf]
      %v451 = vld [vmem:[%s2] sm:$0x1]
      %v453 = vperm.slane %v451, 0
      %v459 = vunpack.c.l.b16 %v447
      %v460 = vunpack.c.l.b16 %v448
      %v461 = vunpack.c.l.b16 %v449
      %v462 = vunpack.c.l.b16 %v450
      %v463 = vpack.c.b16 %v460, %v459
      %v464 = vpack.c.b16 %v462, %v461
      %vm467 = vcmask 261120
      %v469 = vsel %vm467, %v445, 0
      %v472 = vsel %vm467, %v446, 0
      %474 = vmatpush.bf16.msra.mxu0 0
      %475 = vmatpush.bf16.msra.mxu0 0
      %476 = vmatpush.bf16.msra.mxu0 0
      %477 = vmatpush.bf16.msra.mxu0 0
      %478 = vmatpush.bf16.msra.mxu0 0
      %479 = vmatpush.bf16.msra.mxu0 0
      %480 = vmatpush.bf16.msra.mxu0 %v464
      %481 = vmatpush.bf16.msra.mxu0 %v463
      %482 = vmatmul.bf16.gmra.mxu0 %v469
      %v483 = vpop.f32.mrf.mxu0
      %v484 = vadd.f32 %v453, %v483
      %v485 = vpop.f32.mrf.mxu0
      %v486 = vadd.f32 %v453, %v485
      %487 = vmatmul.bf16.gmra.mxu0 %v472
      %v488 = vpop.f32.mrf.mxu0
      %v489 = vadd.f32 %v453, %v488
      %v490 = vpop.f32.mrf.mxu0
      %491 = vdwg.mxu0
      %v492 = vmul.f32 %v484, 0.25
      %v493 = vmul.f32 %v486, 0.25
      %v494 = vmul.f32 %v489, 0.25
      %v495 = vlaneseq
      %v496 = vshrl.u32 %v495, 7
      %v497 = vadd.s32 %v496, 8
      %v498 = vadd.s32 %v496, 16
      %v499 = vlaneseq
      %v500 = vand.u32 %v499, 127
      %vm501 = vcmp.le.s32.totalorder %v500, %v496
      %vm502 = vcmp.le.s32.totalorder %v500, %v497
      %vm503 = vcmp.le.s32.totalorder %v500, %v498
      %v504 = vpack.c.bf16 %v493, %v492
      %v505 = vpack.c.bf16 %v494, %v494
      %509 = vrot.lane.b32.xlu0 %v484, 96
      %v510 = vpop.permute.xlu0 %509
      %511 = vrot.lane.b32.xlu0 %v486, 96
      %v512 = vpop.permute.xlu0 %511
      %513 = vrot.lane.b32.xlu0 %v489, 96
      %v514 = vpop.permute.xlu0 %513
      %518 = vxpose.xlu0.b32.start [1/16] %v510, 128
      %519 = vxpose.xlu0.b32.cont [2/16] %v512, 128
      %520 = vxpose.xlu0.b32.cont [3/16] %v514, 128
      %521 = vxpose.xlu0.b32.cont [4/16] 0.0, 128
      %522 = vxpose.xlu0.b32.cont [5/16] 0.0, 128
      %523 = vxpose.xlu0.b32.cont [6/16] 0.0, 128
      %524 = vxpose.xlu0.b32.cont [7/16] 0.0, 128
      %525 = vxpose.xlu0.b32.cont [8/16] 0.0, 128
      %526 = vxpose.xlu0.b32.cont [9/16] 0.0, 128
      %527 = vxpose.xlu0.b32.cont [10/16] 0.0, 128
      %528 = vxpose.xlu0.b32.cont [11/16] 0.0, 128
      %529 = vxpose.xlu0.b32.cont [12/16] 0.0, 128
      %530 = vxpose.xlu0.b32.cont [13/16] 0.0, 128
      %531 = vxpose.xlu0.b32.cont [14/16] 0.0, 128
      %532 = vxpose.xlu0.b32.cont [15/16] 0.0, 128
      %533 = vxpose.xlu0.b32.end [16/16] 0.0, 128
      %v534 = vpop.trf.xlu0
      %v535 = vpop.trf.xlu0
      %v536 = vpop.trf.xlu0
      %v537 = vpop.trf.xlu0
      %v538 = vpop.trf.xlu0
      %v539 = vpop.trf.xlu0
      %v540 = vpop.trf.xlu0
      %v541 = vpop.trf.xlu0
      %v542 = vpop.trf.xlu0
      %v543 = vpop.trf.xlu0
      %v544 = vpop.trf.xlu0
      %v545 = vpop.trf.xlu0
      %v546 = vpop.trf.xlu0
      %v547 = vpop.trf.xlu0
      %v548 = vpop.trf.xlu0
      %v549 = vpop.trf.xlu0
      %v550 = vpack.c.bf16 %v535, %v534
      %v551 = vpack.c.bf16 %v486, %v484
      %v552 = vpack.c.bf16 %v489, %v489
      %vm553 = vcmask 130048
      %v555 = vsel %vm553, %v504, 0
      %v558 = vsel %vm553, %v505, 0
      %560 = vmatpush.bf16.msra.mxu0 0
      %561 = vmatpush.bf16.msra.mxu0 0
      %562 = vmatpush.bf16.msra.mxu0 0
      %563 = vmatpush.bf16.msra.mxu0 0
      %564 = vmatpush.bf16.msra.mxu0 0
      %565 = vmatpush.bf16.msra.mxu0 0
      %566 = vmatpush.bf16.msra.mxu0 0
      %567 = vmatpush.bf16.msra.mxu0 %v550
      %568 = vmatmul.bf16.gmra.mxu0 %v555
      %v569 = vpop.f32.mrf.mxu0
      %v570 = vadd.f32 0.0, %v569
      %v571 = vpop.f32.mrf.mxu0
      %v572 = vadd.f32 0.0, %v571
      %573 = vmatmul.bf16.gmra.mxu0 %v558
      %v574 = vpop.f32.mrf.mxu0
      %v575 = vadd.f32 0.0, %v574
      %v576 = vpop.f32.mrf.mxu0
      %577 = vdwg.mxu0
      %v578 = vsel %vm501, %v570, -1e+30
      %v579 = vsel %vm502, %v572, -1e+30
      %v580 = vsel %vm503, %v575, -1e+30
      %vm581 = vcmask 195584
      %v582 = vsel %vm581, %v578, -inf
      %583 = vmax.xlane.f32.xlu0 %v582
      %v584 = vpop.xlane.xlu0 %583
      %v585 = vsel %vm581, %v579, -inf
      %586 = vmax.xlane.f32.xlu0 %v585
      %v587 = vpop.xlane.xlu0 %586
      %v588 = vsel %vm581, %v580, -inf
      %589 = vmax.xlane.f32.xlu0 %v588
      %v590 = vpop.xlane.xlu0 %589
      %v591 = vsub.f32 %v578, %v584
      %v592 = vsub.f32 %v579, %v587
      %v593 = vsub.f32 %v580, %v590
      %v594 = vmul.f32 %v591, 1.442695
      %v595 = vpow.pop %v594
      %v596 = vmul.f32 %v592, 1.442695
      %v597 = vpow.pop %v596
      %v598 = vmul.f32 %v593, 1.442695
      %v599 = vpow.pop %v598
      %v600 = vsel %vm581, %v595, 0.0
      %601 = vadd.xlane.f32.xlu0 %v600
      %v602 = vpop.xlane.xlu0 %601
      %v603 = vsel %vm581, %v597, 0.0
      %604 = vadd.xlane.f32.xlu0 %v603
      %v605 = vpop.xlane.xlu0 %604
      %v606 = vsel %vm581, %v599, 0.0
      %607 = vadd.xlane.f32.xlu0 %v606
      %v608 = vpop.xlane.xlu0 %607
      %v609 = vrcp.pop %v602
      %v610 = vrcp.pop %v605
      %v611 = vrcp.pop %v608
      %v612 = vmul.f32 %v595, %v609
      %v613 = vmul.f32 %v597, %v610
      %v614 = vmul.f32 %v599, %v611
      %v615 = vpack.c.bf16 %v613, %v612
      %v616 = vpack.c.bf16 %v614, %v614
      %619 = vrot.lane.b32.xlu0 %v551, 64
      %v620 = vpop.permute.xlu0 %619
      %621 = vrot.lane.b32.xlu0 %v552, 64
      %v622 = vpop.permute.xlu0 %621
      %v625 = vsel %vm581, %v615, 0
      %v628 = vsel %vm581, %v616, 0
      %vm630 = vcmask 1043456
      %v632 = vsel %vm630, %v622, 0
      %634 = vmatpush.bf16.msra.mxu0 0
      %635 = vmatpush.bf16.msra.mxu0 0
      %636 = vmatpush.bf16.msra.mxu0 0
      %637 = vmatpush.bf16.msra.mxu0 0
      %638 = vmatpush.bf16.msra.mxu0 0
      %639 = vmatpush.bf16.msra.mxu0 0
      %640 = vmatpush.bf16.msra.mxu0 %v632
      %641 = vmatpush.bf16.msra.mxu0 %v620
      %642 = vmatmul.bf16.gmra.mxu0 %v625
      %v643 = vpop.f32.mrf.mxu0
      %v644 = vadd.f32 0.0, %v643
      %v645 = vpop.f32.mrf.mxu0
      %v646 = vadd.f32 0.0, %v645
      %647 = vmatmul.bf16.gmra.mxu0 %v628
      %v648 = vpop.f32.mrf.mxu0
      %v649 = vadd.f32 0.0, %v648
      %v650 = vpop.f32.mrf.mxu0
      %651 = vdwg.mxu0
      %652 = vrot.lane.b32.xlu0 %v484, 80
      %v653 = vpop.permute.xlu0 %652
      %654 = vrot.lane.b32.xlu0 %v486, 80
      %v655 = vpop.permute.xlu0 %654
      %656 = vrot.lane.b32.xlu0 %v489, 80
      %v657 = vpop.permute.xlu0 %656
      %661 = vxpose.xlu0.b32.start [1/16] %v653, 128
      %662 = vxpose.xlu0.b32.cont [2/16] %v655, 128
      %663 = vxpose.xlu0.b32.cont [3/16] %v657, 128
      %664 = vxpose.xlu0.b32.cont [4/16] 0.0, 128
      %665 = vxpose.xlu0.b32.cont [5/16] 0.0, 128
      %666 = vxpose.xlu0.b32.cont [6/16] 0.0, 128
      %667 = vxpose.xlu0.b32.cont [7/16] 0.0, 128
      %668 = vxpose.xlu0.b32.cont [8/16] 0.0, 128
      %669 = vxpose.xlu0.b32.cont [9/16] 0.0, 128
      %670 = vxpose.xlu0.b32.cont [10/16] 0.0, 128
      %671 = vxpose.xlu0.b32.cont [11/16] 0.0, 128
      %672 = vxpose.xlu0.b32.cont [12/16] 0.0, 128
      %673 = vxpose.xlu0.b32.cont [13/16] 0.0, 128
      %674 = vxpose.xlu0.b32.cont [14/16] 0.0, 128
      %675 = vxpose.xlu0.b32.cont [15/16] 0.0, 128
      %676 = vxpose.xlu0.b32.end [16/16] 0.0, 128
      %v677 = vpop.trf.xlu0
      %v678 = vpop.trf.xlu0
      %v679 = vpop.trf.xlu0
      %v680 = vpop.trf.xlu0
      %v681 = vpop.trf.xlu0
      %v682 = vpop.trf.xlu0
      %v683 = vpop.trf.xlu0
      %v684 = vpop.trf.xlu0
      %v685 = vpop.trf.xlu0
      %v686 = vpop.trf.xlu0
      %v687 = vpop.trf.xlu0
      %v688 = vpop.trf.xlu0
      %v689 = vpop.trf.xlu0
      %v690 = vpop.trf.xlu0
      %v691 = vpop.trf.xlu0
      %v692 = vpop.trf.xlu0
      %v693 = vpack.c.bf16 %v678, %v677
      %696 = vrot.lane.b32.xlu0 %v504, 112
      %v697 = vpop.permute.xlu0 %696
      %698 = vrot.lane.b32.xlu0 %v505, 112
      %v699 = vpop.permute.xlu0 %698
      %v701 = vsel %vm553, %v697, 0
      %v704 = vsel %vm553, %v699, 0
      %706 = vmatpush.bf16.msra.mxu0 0
      %707 = vmatpush.bf16.msra.mxu0 0
      %708 = vmatpush.bf16.msra.mxu0 0
      %709 = vmatpush.bf16.msra.mxu0 0
      %710 = vmatpush.bf16.msra.mxu0 0
      %711 = vmatpush.bf16.msra.mxu0 0
      %712 = vmatpush.bf16.msra.mxu0 0
      %713 = vmatpush.bf16.msra.mxu0 %v693
      %714 = vmatmul.bf16.gmra.mxu0 %v701
      %v715 = vpop.f32.mrf.mxu0
      %v716 = vadd.f32 0.0, %v715
      %v717 = vpop.f32.mrf.mxu0
      %v718 = vadd.f32 0.0, %v717
      %719 = vmatmul.bf16.gmra.mxu0 %v704
      %v720 = vpop.f32.mrf.mxu0
      %v721 = vadd.f32 0.0, %v720
      %v722 = vpop.f32.mrf.mxu0
      %723 = vdwg.mxu0
      %v724 = vsel %vm501, %v716, -1e+30
      %v725 = vsel %vm502, %v718, -1e+30
      %v726 = vsel %vm503, %v721, -1e+30
      %v727 = vsel %vm581, %v724, -inf
      %728 = vmax.xlane.f32.xlu0 %v727
      %v729 = vpop.xlane.xlu0 %728
      %v730 = vsel %vm581, %v725, -inf
      %731 = vmax.xlane.f32.xlu0 %v730
      %v732 = vpop.xlane.xlu0 %731
      %v733 = vsel %vm581, %v726, -inf
      %734 = vmax.xlane.f32.xlu0 %v733
      %v735 = vpop.xlane.xlu0 %734
      %v736 = vsub.f32 %v724, %v729
      %v737 = vsub.f32 %v725, %v732
      %v738 = vsub.f32 %v726, %v735
      %v739 = vmul.f32 %v736, 1.442695
      %v740 = vpow.pop %v739
      %v741 = vmul.f32 %v737, 1.442695
      %v742 = vpow.pop %v741
      %v743 = vmul.f32 %v738, 1.442695
      %v744 = vpow.pop %v743
      %v745 = vsel %vm581, %v740, 0.0
      %746 = vadd.xlane.f32.xlu0 %v745
      %v747 = vpop.xlane.xlu0 %746
      %v748 = vsel %vm581, %v742, 0.0
      %749 = vadd.xlane.f32.xlu0 %v748
      %v750 = vpop.xlane.xlu0 %749
      %v751 = vsel %vm581, %v744, 0.0
      %752 = vadd.xlane.f32.xlu0 %v751
      %v753 = vpop.xlane.xlu0 %752
      %v754 = vrcp.pop %v747
      %v755 = vrcp.pop %v750
      %v756 = vrcp.pop %v753
      %v757 = vmul.f32 %v740, %v754
      %v758 = vmul.f32 %v742, %v755
      %v759 = vmul.f32 %v744, %v756
      %v760 = vpack.c.bf16 %v758, %v757
      %v761 = vpack.c.bf16 %v759, %v759
      %762 = vrot.lane.b32.xlu0 %v551, 48
      %v763 = vpop.permute.xlu0 %762
      %764 = vrot.lane.b32.xlu0 %v552, 48
      %v765 = vpop.permute.xlu0 %764
      %v768 = vsel %vm581, %v760, 0
      %v771 = vsel %vm581, %v761, 0
      %v774 = vsel %vm630, %v765, 0
      %776 = vmatpush.bf16.msra.mxu0 0
      %777 = vmatpush.bf16.msra.mxu0 0
      %778 = vmatpush.bf16.msra.mxu0 0
      %779 = vmatpush.bf16.msra.mxu0 0
      %780 = vmatpush.bf16.msra.mxu0 0
      %781 = vmatpush.bf16.msra.mxu0 0
      %782 = vmatpush.bf16.msra.mxu0 %v774
      %783 = vmatpush.bf16.msra.mxu0 %v763
      %784 = vmatmul.bf16.gmra.mxu0 %v768
      %v785 = vpop.f32.mrf.mxu0
      %v786 = vadd.f32 0.0, %v785
      %v787 = vpop.f32.mrf.mxu0
      %v788 = vadd.f32 0.0, %v787
      %789 = vmatmul.bf16.gmra.mxu0 %v771
      %v790 = vpop.f32.mrf.mxu0
      %v791 = vadd.f32 0.0, %v790
      %v792 = vpop.f32.mrf.mxu0
      %793 = vdwg.mxu0
      %797 = vrot.lane.b32.xlu0 %v786, 16
      %v798 = vpop.permute.xlu0 %797
      %799 = vrot.lane.b32.xlu0 %v788, 16
      %v800 = vpop.permute.xlu0 %799
      %801 = vrot.lane.b32.xlu0 %v791, 16
      %v802 = vpop.permute.xlu0 %801
      %v806 = vsel %vm553, %v644, %v798
      %v807 = vsel %vm553, %v646, %v800
      %v808 = vsel %vm553, %v649, %v802
      %v809 = vpack.c.bf16 %v807, %v806
      %v810 = vpack.c.bf16 %v808, %v808
      %v811 = vld [vmem:[%s3] sm:$0xf]
      %v812 = vld [vmem:[%s3 + $0x4] sm:$0xf]
      %v813 = vld [vmem:[%s3 + $0x8] sm:$0xf]
      %v814 = vld [vmem:[%s3 + $0xc] sm:$0xf]
      %v819 = vunpack.c.l.b16 %v811
      %v820 = vunpack.c.l.b16 %v812
      %v821 = vunpack.c.l.b16 %v813
      %v822 = vunpack.c.l.b16 %v814
      %v823 = vpack.c.b16 %v820, %v819
      %v824 = vpack.c.b16 %v822, %v821
      %v828 = vsel %vm467, %v809, 0
      %v831 = vsel %vm467, %v810, 0
      %833 = vmatpush.bf16.msra.mxu0 0
      %834 = vmatpush.bf16.msra.mxu0 0
      %835 = vmatpush.bf16.msra.mxu0 0
      %836 = vmatpush.bf16.msra.mxu0 0
      %837 = vmatpush.bf16.msra.mxu0 0
      %838 = vmatpush.bf16.msra.mxu0 0
      %839 = vmatpush.bf16.msra.mxu0 %v824
      %840 = vmatpush.bf16.msra.mxu0 %v823
      %841 = vmatmul.bf16.gmra.mxu0 %v828
      %v842 = vpop.f32.mrf.mxu0
      %v843 = vadd.f32 0.0, %v842
      %v844 = vpop.f32.mrf.mxu0
      %v845 = vadd.f32 0.0, %v844
      %846 = vmatmul.bf16.gmra.mxu0 %v831
      %v847 = vpop.f32.mrf.mxu0
      %v848 = vadd.f32 0.0, %v847
      %v849 = vpop.f32.mrf.mxu0
      %850 = vdwg.mxu0
      %v851 = vadd.f32 %v442, %v843
      %v852 = vadd.f32 %v443, %v845
      %v853 = vadd.f32 %v444, %v848
      %v854 = vld [vmem:[%s4] sm:$0x1]
      %v856 = vperm.slane %v854, 0
      %v858 = vadd.f32 %v851, %v856
      %v859 = vadd.f32 %v852, %v856
      %v860 = vadd.f32 %v853, %v856
      %v861 = vld [vmem:[%s5] sm:$0x1]
      %v862 = vld [vmem:[%s6] sm:$0x1]
      %v863 = vsel %vm467, %v858, 0.0
      %864 = vadd.xlane.f32.xlu0 %v863
      %v865 = vpop.xlane.xlu0 %864
      %v866 = vsel %vm467, %v859, 0.0
      %867 = vadd.xlane.f32.xlu0 %v866
      %v868 = vpop.xlane.xlu0 %867
      %v869 = vsel %vm467, %v860, 0.0
      %870 = vadd.xlane.f32.xlu0 %v869
      %v871 = vpop.xlane.xlu0 %870
      %v872 = vrcp.pop 32.0
      %v873 = vmul.f32 32.0, %v872
      %v874 = vsub.f32 1.0, %v873
      %v875 = vmul.f32 %v872, %v874
      %v876 = vadd.f32 %v872, %v875
      %vm877 = vweird.f32 %v872
      %v878 = vsel %vm877, %v872, %v876
      %v879 = vmul.f32 %v865, %v878
      %v880 = vmul.f32 %v868, %v878
      %v881 = vmul.f32 %v871, %v878
      %v882 = vsub.f32 %v858, %v879
      %v883 = vsub.f32 %v859, %v880
      %v884 = vsub.f32 %v860, %v881
      %v885 = vmul.f32 %v882, %v882
      %v886 = vmul.f32 %v883, %v883
      %v887 = vmul.f32 %v884, %v884
      %v888 = vsel %vm467, %v885, 0.0
      %889 = vadd.xlane.f32.xlu0 %v888
      %v890 = vpop.xlane.xlu0 %889
      %v891 = vsel %vm467, %v886, 0.0
      %892 = vadd.xlane.f32.xlu0 %v891
      %v893 = vpop.xlane.xlu0 %892
      %v894 = vsel %vm467, %v887, 0.0
      %895 = vadd.xlane.f32.xlu0 %v894
      %v896 = vpop.xlane.xlu0 %895
      %v897 = vmul.f32 %v890, %v878
      %v898 = vmul.f32 %v893, %v878
      %v899 = vmul.f32 %v896, %v878
      %v900 = vadd.f32 %v897, 1e-05
      %v901 = vadd.f32 %v898, 1e-05
      %v902 = vadd.f32 %v899, 1e-05
      %v903 = vrsqrt.pop %v900
      %v904 = vmul.f32 %v903, %v900
      %v905 = vmul.f32 %v904, %v903
      %v906 = vmul.f32 0.5, %v905
      %v907 = vsub.f32 1.5, %v906
      %v908 = vmul.f32 %v903, %v907
      %vm909 = vweird.f32 %v900
      %vm910 = vweird.f32 %v903
      %vm911 = vmor %vm909, %vm910
      %v912 = vsel %vm911, %v903, %v908
      %v913 = vrsqrt.pop %v901
      %v914 = vmul.f32 %v913, %v901
      %v915 = vmul.f32 %v914, %v913
      %v916 = vmul.f32 0.5, %v915
      %v917 = vsub.f32 1.5, %v916
      %v918 = vmul.f32 %v913, %v917
      %vm919 = vweird.f32 %v901
      %vm920 = vweird.f32 %v913
      %vm921 = vmor %vm919, %vm920
      %v922 = vsel %vm921, %v913, %v918
      %v923 = vrsqrt.pop %v902
      %v924 = vmul.f32 %v923, %v902
      %v925 = vmul.f32 %v924, %v923
      %v926 = vmul.f32 0.5, %v925
      %v927 = vsub.f32 1.5, %v926
      %v928 = vmul.f32 %v923, %v927
      %vm929 = vweird.f32 %v902
      %vm930 = vweird.f32 %v923
      %vm931 = vmor %vm929, %vm930
      %v932 = vsel %vm931, %v923, %v928
      %v933 = vmul.f32 %v882, %v912
      %v934 = vmul.f32 %v883, %v922
      %v935 = vmul.f32 %v884, %v932
      %v937 = vperm.slane %v861, 0
      %v939 = vmul.f32 %v933, %v937
      %v940 = vmul.f32 %v934, %v937
      %v941 = vmul.f32 %v935, %v937
      %v943 = vperm.slane %v862, 0
      %v945 = vadd.f32 %v939, %v943
      %v946 = vadd.f32 %v940, %v943
      %v947 = vadd.f32 %v941, %v943
      %v948 = vpack.c.bf16 %v946, %v945
      %v949 = vpack.c.bf16 %v947, %v947
      %v950 = vld [vmem:[%s7] sm:$0xf]
      %v951 = vld [vmem:[%s7 + $0x4] sm:$0xf]
      %v952 = vld [vmem:[%s7 + $0x8] sm:$0xf]
      %v953 = vld [vmem:[%s7 + $0xc] sm:$0xf]
      %v954 = vld [vmem:[%s8] sm:$0x1]
      %v956 = vperm.slane %v954, 0
      %v962 = vunpack.c.l.b16 %v950
      %v963 = vunpack.c.l.b16 %v951
      %v964 = vunpack.c.l.b16 %v952
      %v965 = vunpack.c.l.b16 %v953
      %v966 = vpack.c.b16 %v963, %v962
      %v967 = vpack.c.b16 %v965, %v964
      %v971 = vsel %vm467, %v948, 0
      %v974 = vsel %vm467, %v949, 0
      %976 = vmatpush.bf16.msra.mxu0 0
      %977 = vmatpush.bf16.msra.mxu0 0
      %978 = vmatpush.bf16.msra.mxu0 0
      %979 = vmatpush.bf16.msra.mxu0 0
      %980 = vmatpush.bf16.msra.mxu0 0
      %981 = vmatpush.bf16.msra.mxu0 0
      %982 = vmatpush.bf16.msra.mxu0 %v967
      %983 = vmatpush.bf16.msra.mxu0 %v966
      %984 = vmatmul.bf16.gmra.mxu0 %v971
      %v985 = vpop.f32.mrf.mxu0
      %v986 = vadd.f32 %v956, %v985
      %v987 = vpop.f32.mrf.mxu0
      %v988 = vadd.f32 %v956, %v987
      %989 = vmatmul.bf16.gmra.mxu0 %v974
      %v990 = vpop.f32.mrf.mxu0
      %v991 = vadd.f32 %v956, %v990
      %v992 = vpop.f32.mrf.mxu0
      %993 = vdwg.mxu0
      %v994 = vmul.f32 %v986, 0.5
      %v995 = vmul.f32 %v988, 0.5
      %v996 = vmul.f32 %v991, 0.5
      %v997 = vmul.f32 %v986, 0.70710677
      %v998 = vmul.f32 %v988, 0.70710677
      %v999 = vmul.f32 %v991, 0.70710677
      %v1000 = vmul.f32 %v997, %v997
      %v1001 = vmin.f32 16.0, %v1000
      %v1002 = vmul.f32 %v1001, 2.1237322e-06
      %v1003 = vadd.f32 %v1002, 0.00028619796
      %v1004 = vmul.f32 %v1001, %v1003
      %v1005 = vadd.f32 %v1004, 0.0036580483
      %v1006 = vmul.f32 %v1001, %v1005
      %v1007 = vadd.f32 %v1006, 0.05243302
      %v1008 = vmul.f32 %v1001, %v1007
      %v1009 = vadd.f32 %v1008, 0.18741608
      %v1010 = vmul.f32 %v1001, %v1009
      %v1011 = vadd.f32 %v1010, 1.1283791
      %v1012 = vmul.f32 %v997, %v1011
      %v1013 = vmul.f32 %v1001, 3.8918573e-05
      %v1014 = vadd.f32 %v1013, 0.001143296
      %v1015 = vmul.f32 %v1001, %v1014
      %v1016 = vadd.f32 %v1015, 0.014752088
      %v1017 = vmul.f32 %v1001, %v1016
      %v1018 = vadd.f32 %v1017, 0.112945676
      %v1019 = vmul.f32 %v1001, %v1018
      %v1020 = vadd.f32 %v1019, 0.4994258
      %v1021 = vmul.f32 %v1001, %v1020
      %v1022 = vadd.f32 %v1021, 1.0
      %v1023 = vrcp.pop %v1022
      %v1024 = vmul.f32 %v1022, %v1023
      %v1025 = vsub.f32 1.0, %v1024
      %v1026 = vmul.f32 %v1023, %v1025
      %v1027 = vadd.f32 %v1023, %v1026
      %vm1028 = vweird.f32 %v1022
      %vm1029 = vweird.f32 %v1023
      %vm1030 = vmor %vm1028, %vm1029
      %v1031 = vsel %vm1030, %v1023, %v1027
      %v1032 = vand.u32 2147483647, %v1022
      %vm1033 = vcmp.eq.f32.partialorder %v1032, 8.507059e+37
      %v1034 = vand.u32 %v1022, 2147483648
      %v1035 = vor.u32 1.1754944e-38, %v1034
      %v1036 = vsel %vm1033, %v1035, %v1031
      %v1037 = vmul.f32 %v1012, %v1036
      %v1038 = vmin.f32 %v1037, 1.0
      %v1039 = vmax.f32 %v1038, -1.0
      %v1040 = vmul.f32 %v998, %v998
      %v1041 = vmin.f32 16.0, %v1040
      %v1042 = vmul.f32 %v1041, 2.1237322e-06
      %v1043 = vadd.f32 %v1042, 0.00028619796
      %v1044 = vmul.f32 %v1041, %v1043
      %v1045 = vadd.f32 %v1044, 0.0036580483
      %v1046 = vmul.f32 %v1041, %v1045
      %v1047 = vadd.f32 %v1046, 0.05243302
      %v1048 = vmul.f32 %v1041, %v1047
      %v1049 = vadd.f32 %v1048, 0.18741608
      %v1050 = vmul.f32 %v1041, %v1049
      %v1051 = vadd.f32 %v1050, 1.1283791
      %v1052 = vmul.f32 %v998, %v1051
      %v1053 = vmul.f32 %v1041, 3.8918573e-05
      %v1054 = vadd.f32 %v1053, 0.001143296
      %v1055 = vmul.f32 %v1041, %v1054
      %v1056 = vadd.f32 %v1055, 0.014752088
      %v1057 = vmul.f32 %v1041, %v1056
      %v1058 = vadd.f32 %v1057, 0.112945676
      %v1059 = vmul.f32 %v1041, %v1058
      %v1060 = vadd.f32 %v1059, 0.4994258
      %v1061 = vmul.f32 %v1041, %v1060
      %v1062 = vadd.f32 %v1061, 1.0
      %v1063 = vrcp.pop %v1062
      %v1064 = vmul.f32 %v1062, %v1063
      %v1065 = vsub.f32 1.0, %v1064
      %v1066 = vmul.f32 %v1063, %v1065
      %v1067 = vadd.f32 %v1063, %v1066
      %vm1068 = vweird.f32 %v1062
      %vm1069 = vweird.f32 %v1063
      %vm1070 = vmor %vm1068, %vm1069
      %v1071 = vsel %vm1070, %v1063, %v1067
      %v1072 = vand.u32 2147483647, %v1062
      %vm1073 = vcmp.eq.f32.partialorder %v1072, 8.507059e+37
      %v1074 = vand.u32 %v1062, 2147483648
      %v1075 = vor.u32 1.1754944e-38, %v1074
      %v1076 = vsel %vm1073, %v1075, %v1071
      %v1077 = vmul.f32 %v1052, %v1076
      %v1078 = vmin.f32 %v1077, 1.0
      %v1079 = vmax.f32 %v1078, -1.0
      %v1080 = vmul.f32 %v999, %v999
      %v1081 = vmin.f32 16.0, %v1080
      %v1082 = vmul.f32 %v1081, 2.1237322e-06
      %v1083 = vadd.f32 %v1082, 0.00028619796
      %v1084 = vmul.f32 %v1081, %v1083
      %v1085 = vadd.f32 %v1084, 0.0036580483
      %v1086 = vmul.f32 %v1081, %v1085
      %v1087 = vadd.f32 %v1086, 0.05243302
      %v1088 = vmul.f32 %v1081, %v1087
      %v1089 = vadd.f32 %v1088, 0.18741608
      %v1090 = vmul.f32 %v1081, %v1089
      %v1091 = vadd.f32 %v1090, 1.1283791
      %v1092 = vmul.f32 %v999, %v1091
      %v1093 = vmul.f32 %v1081, 3.8918573e-05
      %v1094 = vadd.f32 %v1093, 0.001143296
      %v1095 = vmul.f32 %v1081, %v1094
      %v1096 = vadd.f32 %v1095, 0.014752088
      %v1097 = vmul.f32 %v1081, %v1096
      %v1098 = vadd.f32 %v1097, 0.112945676
      %v1099 = vmul.f32 %v1081, %v1098
      %v1100 = vadd.f32 %v1099, 0.4994258
      %v1101 = vmul.f32 %v1081, %v1100
      %v1102 = vadd.f32 %v1101, 1.0
      %v1103 = vrcp.pop %v1102
      %v1104 = vmul.f32 %v1102, %v1103
      %v1105 = vsub.f32 1.0, %v1104
      %v1106 = vmul.f32 %v1103, %v1105
      %v1107 = vadd.f32 %v1103, %v1106
      %vm1108 = vweird.f32 %v1102
      %vm1109 = vweird.f32 %v1103
      %vm1110 = vmor %vm1108, %vm1109
      %v1111 = vsel %vm1110, %v1103, %v1107
      %v1112 = vand.u32 2147483647, %v1102
      %vm1113 = vcmp.eq.f32.partialorder %v1112, 8.507059e+37
      %v1114 = vand.u32 %v1102, 2147483648
      %v1115 = vor.u32 1.1754944e-38, %v1114
      %v1116 = vsel %vm1113, %v1115, %v1111
      %v1117 = vmul.f32 %v1092, %v1116
      %v1118 = vmin.f32 %v1117, 1.0
      %v1119 = vmax.f32 %v1118, -1.0
      %v1120 = vadd.f32 %v1039, 1.0
      %v1121 = vadd.f32 %v1079, 1.0
      %v1122 = vadd.f32 %v1119, 1.0
      %v1123 = vmul.f32 %v994, %v1120
      %v1124 = vmul.f32 %v995, %v1121
      %v1125 = vmul.f32 %v996, %v1122
      %v1126 = vpack.c.bf16 %v1124, %v1123
      %v1127 = vpack.c.bf16 %v1125, %v1125
      %v1128 = vld [vmem:[%s9] sm:$0xf]
      %v1129 = vld [vmem:[%s9 + $0x4] sm:$0xf]
      %v1130 = vld [vmem:[%s9 + $0x8] sm:$0xf]
      %v1131 = vld [vmem:[%s9 + $0xc] sm:$0xf]
      %v1132 = vld [vmem:[%s9 + $0x10] sm:$0xf]
      %v1133 = vld [vmem:[%s9 + $0x14] sm:$0xf]
      %v1134 = vld [vmem:[%s9 + $0x18] sm:$0xf]
      %v1135 = vld [vmem:[%s9 + $0x1c] sm:$0xf]
      %v1136 = vld [vmem:[%s9 + $0x20] sm:$0xf]
      %v1137 = vld [vmem:[%s9 + $0x24] sm:$0xf]
      %v1138 = vld [vmem:[%s9 + $0x28] sm:$0xf]
      %v1139 = vld [vmem:[%s9 + $0x2c] sm:$0xf]
      %v1140 = vld [vmem:[%s9 + $0x30] sm:$0xf]
      %v1141 = vld [vmem:[%s9 + $0x34] sm:$0xf]
      %v1142 = vld [vmem:[%s9 + $0x38] sm:$0xf]
      %v1143 = vld [vmem:[%s9 + $0x3c] sm:$0xf]
      %v1160 = vunpack.c.l.b16 %v1128
      %v1161 = vunpack.c.l.b16 %v1129
      %v1162 = vunpack.c.l.b16 %v1130
      %v1163 = vunpack.c.l.b16 %v1131
      %v1164 = vunpack.c.l.b16 %v1132
      %v1165 = vunpack.c.l.b16 %v1133
      %v1166 = vunpack.c.l.b16 %v1134
      %v1167 = vunpack.c.l.b16 %v1135
      %v1168 = vunpack.c.l.b16 %v1136
      %v1169 = vunpack.c.l.b16 %v1137
      %v1170 = vunpack.c.l.b16 %v1138
      %v1171 = vunpack.c.l.b16 %v1139
      %v1172 = vunpack.c.l.b16 %v1140
      %v1173 = vunpack.c.l.b16 %v1141
      %v1174 = vunpack.c.l.b16 %v1142
      %v1175 = vunpack.c.l.b16 %v1143
      %v1176 = vpack.c.b16 %v1161, %v1160
      %v1177 = vpack.c.b16 %v1163, %v1162
      %v1178 = vpack.c.b16 %v1165, %v1164
      %v1179 = vpack.c.b16 %v1167, %v1166
      %v1180 = vpack.c.b16 %v1169, %v1168
      %v1181 = vpack.c.b16 %v1171, %v1170
      %v1182 = vpack.c.b16 %v1173, %v1172
      %v1183 = vpack.c.b16 %v1175, %v1174
      %1192 = vmatpush.bf16.msra.mxu0 %v1183
      %1193 = vmatpush.bf16.msra.mxu0 %v1182
      %1194 = vmatpush.bf16.msra.mxu0 %v1181
      %1195 = vmatpush.bf16.msra.mxu0 %v1180
      %1196 = vmatpush.bf16.msra.mxu0 %v1179
      %1197 = vmatpush.bf16.msra.mxu0 %v1178
      %1198 = vmatpush.bf16.msra.mxu0 %v1177
      %1199 = vmatpush.bf16.msra.mxu0 %v1176
      %1200 = vmatmul.bf16.gmra.mxu0 %v1126
      %v1201 = vpop.f32.mrf.mxu0
      %v1202 = vadd.f32 0.0, %v1201
      %v1203 = vpop.f32.mrf.mxu0
      %v1204 = vadd.f32 0.0, %v1203
      %1205 = vmatmul.bf16.gmra.mxu0 %v1127
      %v1206 = vpop.f32.mrf.mxu0
      %v1207 = vadd.f32 0.0, %v1206
      %v1208 = vpop.f32.mrf.mxu0
      %1209 = vdwg.mxu0
      %v1210 = vadd.f32 %v945, %v1202
      %v1211 = vadd.f32 %v946, %v1204
      %v1212 = vadd.f32 %v947, %v1207
      %v1213 = vld [vmem:[%s10] sm:$0x1]
      %v1215 = vperm.slane %v1213, 0
      %v1217 = vadd.f32 %v1210, %v1215
      %v1218 = vadd.f32 %v1211, %v1215
      %v1219 = vadd.f32 %v1212, %v1215
      %v1220 = vld [vmem:[%s11] sm:$0x1]
      %v1221 = vld [vmem:[%s12] sm:$0x1]
      %v1222 = vsel %vm467, %v1217, 0.0
      %1223 = vadd.xlane.f32.xlu0 %v1222
      %v1224 = vpop.xlane.xlu0 %1223
      %v1225 = vsel %vm467, %v1218, 0.0
      %1226 = vadd.xlane.f32.xlu0 %v1225
      %v1227 = vpop.xlane.xlu0 %1226
      %v1228 = vsel %vm467, %v1219, 0.0
      %1229 = vadd.xlane.f32.xlu0 %v1228
      %v1230 = vpop.xlane.xlu0 %1229
      %v1231 = vmul.f32 %v1224, %v878
      %v1232 = vmul.f32 %v1227, %v878
      %v1233 = vmul.f32 %v1230, %v878
      %v1234 = vsub.f32 %v1217, %v1231
      %v1235 = vsub.f32 %v1218, %v1232
      %v1236 = vsub.f32 %v1219, %v1233
      %v1237 = vmul.f32 %v1234, %v1234
      %v1238 = vmul.f32 %v1235, %v1235
      %v1239 = vmul.f32 %v1236, %v1236
      %v1240 = vsel %vm467, %v1237, 0.0
      %1241 = vadd.xlane.f32.xlu0 %v1240
      %v1242 = vpop.xlane.xlu0 %1241
      %v1243 = vsel %vm467, %v1238, 0.0
      %1244 = vadd.xlane.f32.xlu0 %v1243
      %v1245 = vpop.xlane.xlu0 %1244
      %v1246 = vsel %vm467, %v1239, 0.0
      %1247 = vadd.xlane.f32.xlu0 %v1246
      %v1248 = vpop.xlane.xlu0 %1247
      %v1249 = vmul.f32 %v1242, %v878
      %v1250 = vmul.f32 %v1245, %v878
      %v1251 = vmul.f32 %v1248, %v878
      %v1252 = vadd.f32 %v1249, 1e-05
      %v1253 = vadd.f32 %v1250, 1e-05
      %v1254 = vadd.f32 %v1251, 1e-05
      %v1255 = vrsqrt.pop %v1252
      %v1256 = vmul.f32 %v1255, %v1252
      %v1257 = vmul.f32 %v1256, %v1255
      %v1258 = vmul.f32 0.5, %v1257
      %v1259 = vsub.f32 1.5, %v1258
      %v1260 = vmul.f32 %v1255, %v1259
      %vm1261 = vweird.f32 %v1252
      %vm1262 = vweird.f32 %v1255
      %vm1263 = vmor %vm1261, %vm1262
      %v1264 = vsel %vm1263, %v1255, %v1260
      %v1265 = vrsqrt.pop %v1253
      %v1266 = vmul.f32 %v1265, %v1253
      %v1267 = vmul.f32 %v1266, %v1265
      %v1268 = vmul.f32 0.5, %v1267
      %v1269 = vsub.f32 1.5, %v1268
      %v1270 = vmul.f32 %v1265, %v1269
      %vm1271 = vweird.f32 %v1253
      %vm1272 = vweird.f32 %v1265
      %vm1273 = vmor %vm1271, %vm1272
      %v1274 = vsel %vm1273, %v1265, %v1270
      %v1275 = vrsqrt.pop %v1254
      %v1276 = vmul.f32 %v1275, %v1254
      %v1277 = vmul.f32 %v1276, %v1275
      %v1278 = vmul.f32 0.5, %v1277
      %v1279 = vsub.f32 1.5, %v1278
      %v1280 = vmul.f32 %v1275, %v1279
      %vm1281 = vweird.f32 %v1254
      %vm1282 = vweird.f32 %v1275
      %vm1283 = vmor %vm1281, %vm1282
      %v1284 = vsel %vm1283, %v1275, %v1280
      %v1285 = vmul.f32 %v1234, %v1264
      %v1286 = vmul.f32 %v1235, %v1274
      %v1287 = vmul.f32 %v1236, %v1284
      %v1289 = vperm.slane %v1220, 0
      %v1291 = vmul.f32 %v1285, %v1289
      %v1292 = vmul.f32 %v1286, %v1289
      %v1293 = vmul.f32 %v1287, %v1289
      %v1295 = vperm.slane %v1221, 0
      %v1297 = vadd.f32 %v1291, %v1295
      %v1298 = vadd.f32 %v1292, %v1295
      %v1299 = vadd.f32 %v1293, %v1295
      %1300 = vst.msk [vmem:[%s440] sm:$0xff] %vm467, %v1297
      %1301 = vst.msk [vmem:[%s440 + $0x8] sm:$0xff] %vm467, %v1298
      %1302 = vst.msk [vmem:[%s440 + $0x10] sm:$0xff] %vm467, %v1299
      %p1303 = scmp.lt.s32.totalorder %s24, 1
      %s1304 = scalar_select %p1303, %s24, 1
      %s1305 = smul.addr %s1304, 3
      %s1306 = smul.addr %s1305, 8
      %s1307 = scalar_lea.vmem %s13, %s1306
      // Predicated region
      $region73: #{adapt_forward.5} parent=71 // pred_check
        %p1308 = pneg %p320
      $region74: #{adapt_forward.5} parent=71 // pred_check_branch
        %1310 = sbr.rel (%p1308) target = $region76
      $region75: #{adapt_forward.5} parent=71 // pred_region
        _
      $region76: #{adapt_forward.5} parent=71 // pred_fallthru
        _
    $region72: #{adapt_forward.5} parent=5 // pred_fallthru
      _
    %p1311 = scmp.le.s32.totalorder 2, %s19
    // Predicated region
    $region77: #{adapt_forward.5} parent=5 // pred_check
      %p1312 = pneg %p1311
    $region78: #{adapt_forward.5} parent=5 // pred_check_branch
      %1314 = sbr.rel (%p1312) target = $region80
    $region79: #{adapt_forward.5} parent=5 // pred_region
      %s1315 = ssub.s32 %s19, 2
      // Predicated region
      $region81: #{adapt_forward.5} parent=79 // pred_check
        %p1316 = pneg %p326
      $region82: #{adapt_forward.5} parent=79 // pred_check_branch
        %1318 = sbr.rel (%p1316) target = $region84
      $region83: #{adapt_forward.5} parent=79 // pred_region
        %p1319 = scmp.lt.s32.totalorder %s25, 1
        %s1320 = scalar_select %p1319, %s25, 1
        %s1321 = smul.addr %s1320, 3
        %s1322 = smul.addr %s1321, 8
        %s1323 = scalar_lea.vmem %s13, %s1322
      $region84: #{adapt_forward.5} parent=79 // pred_fallthru
        _
    $region80: #{adapt_forward.5} parent=5 // pred_fallthru
      _
  $region6: #{adapt_forward.5} parent=0 // loop_footer
    %s23 = sadd.s32 1, %s19
  $region7: #{adapt_forward.5} parent=0 // loop_footer_branch
    %18 = sbr.rel target = $region3
  $region8: #{adapt_forward.5} parent=0 // loop_exit
    _

// kernel: adapt_forward.4
$region0: #{adapt_forward.4}
  #allocation0 [shape = 'u32[]', space=smem, size = 0x4, offset = 0x4, fixed_abs, tag = 'smem constant byte address 0x4 - core index']
  #allocation1 [shape = 'u32[72,128]{1,0:T(1,128)}', space=vmem, size = 0x9000, scoped, tag = 'internal scratch']
  %s0 = inlined_call_operand.vmem [shape: f32[2,8,11], index: 0, kind: input, shape index: {}]
  %s1 = inlined_call_operand.vmem [shape: f32[2,8,3], index: 1, kind: input, shape index: {}]
  %s2 = inlined_call_operand.vmem [shape: f32[2,8,5], index: 2, kind: input, shape index: {}]
  %s3 = inlined_call_operand.vmem [shape: f32[8,32], index: 3, kind: input, shape index: {}]
  %s4 = inlined_call_operand.vmem [shape: bf16[11,32], index: 4, kind: input, shape index: {}]
  %s5 = inlined_call_operand.vmem [shape: f32[1,32], index: 5, kind: input, shape index: {}]
  %s6 = inlined_call_operand.vmem [shape: bf16[3,32], index: 6, kind: input, shape index: {}]
  %s7 = inlined_call_operand.vmem [shape: f32[1,32], index: 7, kind: input, shape index: {}]
  %s8 = inlined_call_operand.vmem [shape: bf16[5,32], index: 8, kind: input, shape index: {}]
  %s9 = inlined_call_operand.vmem [shape: f32[1,32], index: 9, kind: input, shape index: {}]
  %s10 = inlined_call_operand.vmem [shape: f32[1,32], index: 10, kind: input, shape index: {}]
  %s11 = inlined_call_operand.vmem [shape: f32[1,32], index: 11, kind: input, shape index: {}]
  %s12 = inlined_call_operand.vmem [shape: f32[2,8,3,32], index: 12, kind: output, shape index: {}]
  %s13 = sld [smem:[#allocation0]]
  $region81: #{adapt_forward.4} parent=0
    _
  %s15 = ssub.s32 1, %s13
  %s16 = scalar_select 0, %s15, %s13
  loop: start=0, step=1, limit=4
  $region2: #{adapt_forward.4} parent=0 // loop_pre_header
    _
  $region3: #{adapt_forward.4} parent=0 // loop_header
    %s18 = sphi 0, %s22
    %p19 = scmp.ge.s32.totalorder %s18, 4
    %s28 = sphi 0, %s30
    %s31 = sphi 0, %s28
    %s32 = sphi 0, %s31
    %s48 = sphi 0, %s32
    %s54 = sphi 0, %s56
    %s57 = sphi 0, %s54
    %s58 = sphi 0, %s57
    %s74 = sphi 0, %s58
    %s80 = sphi 0, %s82
    %s83 = sphi 0, %s80
    %s84 = sphi 0, %s83
    %s100 = sphi 0, %s84
    %s104 = sphi 0, %s104
    %s106 = sphi 0, %s104
    %s107 = sphi 0, %s106
    %s121 = sphi 0, %s107
    %s125 = sphi 0, %s125
    %s127 = sphi 0, %s125
    %s128 = sphi 0, %s127
    %s142 = sphi 0, %s128
    %s146 = sphi 0, %s146
    %s148 = sphi 0, %s146
    %s149 = sphi 0, %s148
    %s163 = sphi 0, %s149
    %s167 = sphi 0, %s167
    %s169 = sphi 0, %s167
    %s170 = sphi 0, %s169
    %s184 = sphi 0, %s170
    %s188 = sphi 0, %s188
    %s190 = sphi 0, %s188
    %s191 = sphi 0, %s190
    %s205 = sphi 0, %s191
    %s209 = sphi 0, %s209
    %s211 = sphi 0, %s209
    %s212 = sphi 0, %s211
    %s226 = sphi 0, %s212
    %s230 = sphi 0, %s230
    %s232 = sphi 0, %s230
    %s233 = sphi 0, %s232
    %s247 = sphi 0, %s233
    %s251 = sphi 0, %s251
    %s253 = sphi 0, %s251
    %s254 = sphi 0, %s253
    %s268 = sphi 0, %s254
    %s272 = sphi 0, %s272
    %s274 = sphi 0, %s272
    %s275 = sphi 0, %s274
    %s289 = sphi 0, %s275
    %s295 = sphi 0, %s297
    %s298 = sphi 0, %s295
    %s299 = sphi 0, %s298
    %s315 = sphi 0, %s299
  $region4: #{adapt_forward.4} parent=0 // loop_header_branch
    %21 = sbr.rel (%p19) target = $region8
  $region5: #{adapt_forward.4} parent=0 // loop_body
    %s23 = ssub.s32 %s18, 1
    %s24 = ssub.s32 %s18, 2
    %s25 = sadd.s32 %s18, 1
    %s26 = ssub.s32 %s18, %s25
    %p27 = scmp.eq.s32.totalorder %s26, 0
    %s29 = sadd.s32 %s28, 1
    %s30 = scalar_select %p27, %s28, %s29
    %p33 = pneg %p27
    %p34 = scmp.eq.s32.totalorder %s18, 1
    %p35 = por %p33, %p34
    %p36 = scmp.ne.s32.totalorder %s28, %s31
    %p37 = scmp.eq.s32.totalorder %s18, 0
    %p38 = por %p36, %p37
    %p39 = scmp.ne.s32.totalorder %s28, %s31
    %p40 = scmp.eq.s32.totalorder %s23, 1
    %p41 = por %p39, %p40
    %p42 = scmp.ne.s32.totalorder %s31, %s32
    %p43 = scmp.eq.s32.totalorder %s23, 0
    %p44 = por %p42, %p43
    %p45 = scmp.ne.s32.totalorder %s31, %s32
    %p46 = scmp.eq.s32.totalorder %s24, 1
    %p47 = por %p45, %p46
    %p49 = scmp.ne.s32.totalorder %s32, %s48
    %p50 = scmp.eq.s32.totalorder %s24, 0
    %p51 = por %p49, %p50
    %s52 = ssub.s32 %s18, %s25
    %p53 = scmp.eq.s32.totalorder %s52, 0
    %s55 = sadd.s32 %s54, 1
    %s56 = scalar_select %p53, %s54, %s55
    %p59 = pneg %p53
    %p60 = scmp.eq.s32.totalorder %s18, 1
    %p61 = por %p59, %p60
    %p62 = scmp.ne.s32.totalorder %s54, %s57
    %p63 = scmp.eq.s32.totalorder %s18, 0
    %p64 = por %p62, %p63
    %p65 = scmp.ne.s32.totalorder %s54, %s57
    %p66 = scmp.eq.s32.totalorder %s23, 1
    %p67 = por %p65, %p66
    %p68 = scmp.ne.s32.totalorder %s57, %s58
    %p69 = scmp.eq.s32.totalorder %s23, 0
    %p70 = por %p68, %p69
    %p71 = scmp.ne.s32.totalorder %s57, %s58
    %p72 = scmp.eq.s32.totalorder %s24, 1
    %p73 = por %p71, %p72
    %p75 = scmp.ne.s32.totalorder %s58, %s74
    %p76 = scmp.eq.s32.totalorder %s24, 0
    %p77 = por %p75, %p76
    %s78 = ssub.s32 %s18, %s25
    %p79 = scmp.eq.s32.totalorder %s78, 0
    %s81 = sadd.s32 %s80, 1
    %s82 = scalar_select %p79, %s80, %s81
    %p85 = pneg %p79
    %p86 = scmp.eq.s32.totalorder %s18, 1
    %p87 = por %p85, %p86
    %p88 = scmp.ne.s32.totalorder %s80, %s83
    %p89 = scmp.eq.s32.totalorder %s18, 0
    %p90 = por %p88, %p89
    %p91 = scmp.ne.s32.totalorder %s80, %s83
    %p92 = scmp.eq.s32.totalorder %s23, 1
    %p93 = por %p91, %p92
    %p94 = scmp.ne.s32.totalorder %s83, %s84
    %p95 = scmp.eq.s32.totalorder %s23, 0
    %p96 = por %p94, %p95
    %p97 = scmp.ne.s32.totalorder %s83, %s84
    %p98 = scmp.eq.s32.totalorder %s24, 1
    %p99 = por %p97, %p98
    %p101 = scmp.ne.s32.totalorder %s84, %s100
    %p102 = scmp.eq.s32.totalorder %s24, 0
    %p103 = por %p101, %p102
    %s105 = sadd.s32 %s104, 1
    %p108 = scmp.eq.s32.totalorder %s18, 1
    %p109 = scmp.ne.s32.totalorder %s104, %s106
    %p110 = scmp.eq.s32.totalorder %s18, 0
    %p111 = por %p109, %p110
    %p112 = scmp.ne.s32.totalorder %s104, %s106
    %p113 = scmp.eq.s32.totalorder %s23, 1
    %p114 = por %p112, %p113
    %p115 = scmp.ne.s32.totalorder %s106, %s107
    %p116 = scmp.eq.s32.totalorder %s23, 0
    %p117 = por %p115, %p116
    %p118 = scmp.ne.s32.totalorder %s106, %s107
    %p119 = scmp.eq.s32.totalorder %s24, 1
    %p120 = por %p118, %p119
    %p122 = scmp.ne.s32.totalorder %s107, %s121
    %p123 = scmp.eq.s32.totalorder %s24, 0
    %p124 = por %p122, %p123
    %s126 = sadd.s32 %s125, 1
    %p129 = scmp.eq.s32.totalorder %s18, 1
    %p130 = scmp.ne.s32.totalorder %s125, %s127
    %p131 = scmp.eq.s32.totalorder %s18, 0
    %p132 = por %p130, %p131
    %p133 = scmp.ne.s32.totalorder %s125, %s127
    %p134 = scmp.eq.s32.totalorder %s23, 1
    %p135 = por %p133, %p134
    %p136 = scmp.ne.s32.totalorder %s127, %s128
    %p137 = scmp.eq.s32.totalorder %s23, 0
    %p138 = por %p136, %p137
    %p139 = scmp.ne.s32.totalorder %s127, %s128
    %p140 = scmp.eq.s32.totalorder %s24, 1
    %p141 = por %p139, %p140
    %p143 = scmp.ne.s32.totalorder %s128, %s142
    %p144 = scmp.eq.s32.totalorder %s24, 0
    %p145 = por %p143, %p144
    %s147 = sadd.s32 %s146, 1
    %p150 = scmp.eq.s32.totalorder %s18, 1
    %p151 = scmp.ne.s32.totalorder %s146, %s148
    %p152 = scmp.eq.s32.totalorder %s18, 0
    %p153 = por %p151, %p152
    %p154 = scmp.ne.s32.totalorder %s146, %s148
    %p155 = scmp.eq.s32.totalorder %s23, 1
    %p156 = por %p154, %p155
    %p157 = scmp.ne.s32.totalorder %s148, %s149
    %p158 = scmp.eq.s32.totalorder %s23, 0
    %p159 = por %p157, %p158
    %p160 = scmp.ne.s32.totalorder %s148, %s149
    %p161 = scmp.eq.s32.totalorder %s24, 1
    %p162 = por %p160, %p161
    %p164 = scmp.ne.s32.totalorder %s149, %s163
    %p165 = scmp.eq.s32.totalorder %s24, 0
    %p166 = por %p164, %p165
    %s168 = sadd.s32 %s167, 1
    %p171 = scmp.eq.s32.totalorder %s18, 1
    %p172 = scmp.ne.s32.totalorder %s167, %s169
    %p173 = scmp.eq.s32.totalorder %s18, 0
    %p174 = por %p172, %p173
    %p175 = scmp.ne.s32.totalorder %s167, %s169
    %p176 = scmp.eq.s32.totalorder %s23, 1
    %p177 = por %p175, %p176
    %p178 = scmp.ne.s32.totalorder %s169, %s170
    %p179 = scmp.eq.s32.totalorder %s23, 0
    %p180 = por %p178, %p179
    %p181 = scmp.ne.s32.totalorder %s169, %s170
    %p182 = scmp.eq.s32.totalorder %s24, 1
    %p183 = por %p181, %p182
    %p185 = scmp.ne.s32.totalorder %s170, %s184
    %p186 = scmp.eq.s32.totalorder %s24, 0
    %p187 = por %p185, %p186
    %s189 = sadd.s32 %s188, 1
    %p192 = scmp.eq.s32.totalorder %s18, 1
    %p193 = scmp.ne.s32.totalorder %s188, %s190
    %p194 = scmp.eq.s32.totalorder %s18, 0
    %p195 = por %p193, %p194
    %p196 = scmp.ne.s32.totalorder %s188, %s190
    %p197 = scmp.eq.s32.totalorder %s23, 1
    %p198 = por %p196, %p197
    %p199 = scmp.ne.s32.totalorder %s190, %s191
    %p200 = scmp.eq.s32.totalorder %s23, 0
    %p201 = por %p199, %p200
    %p202 = scmp.ne.s32.totalorder %s190, %s191
    %p203 = scmp.eq.s32.totalorder %s24, 1
    %p204 = por %p202, %p203
    %p206 = scmp.ne.s32.totalorder %s191, %s205
    %p207 = scmp.eq.s32.totalorder %s24, 0
    %p208 = por %p206, %p207
    %s210 = sadd.s32 %s209, 1
    %p213 = scmp.eq.s32.totalorder %s18, 1
    %p214 = scmp.ne.s32.totalorder %s209, %s211
    %p215 = scmp.eq.s32.totalorder %s18, 0
    %p216 = por %p214, %p215
    %p217 = scmp.ne.s32.totalorder %s209, %s211
    %p218 = scmp.eq.s32.totalorder %s23, 1
    %p219 = por %p217, %p218
    %p220 = scmp.ne.s32.totalorder %s211, %s212
    %p221 = scmp.eq.s32.totalorder %s23, 0
    %p222 = por %p220, %p221
    %p223 = scmp.ne.s32.totalorder %s211, %s212
    %p224 = scmp.eq.s32.totalorder %s24, 1
    %p225 = por %p223, %p224
    %p227 = scmp.ne.s32.totalorder %s212, %s226
    %p228 = scmp.eq.s32.totalorder %s24, 0
    %p229 = por %p227, %p228
    %s231 = sadd.s32 %s230, 1
    %p234 = scmp.eq.s32.totalorder %s18, 1
    %p235 = scmp.ne.s32.totalorder %s230, %s232
    %p236 = scmp.eq.s32.totalorder %s18, 0
    %p237 = por %p235, %p236
    %p238 = scmp.ne.s32.totalorder %s230, %s232
    %p239 = scmp.eq.s32.totalorder %s23, 1
    %p240 = por %p238, %p239
    %p241 = scmp.ne.s32.totalorder %s232, %s233
    %p242 = scmp.eq.s32.totalorder %s23, 0
    %p243 = por %p241, %p242
    %p244 = scmp.ne.s32.totalorder %s232, %s233
    %p245 = scmp.eq.s32.totalorder %s24, 1
    %p246 = por %p244, %p245
    %p248 = scmp.ne.s32.totalorder %s233, %s247
    %p249 = scmp.eq.s32.totalorder %s24, 0
    %p250 = por %p248, %p249
    %s252 = sadd.s32 %s251, 1
    %p255 = scmp.eq.s32.totalorder %s18, 1
    %p256 = scmp.ne.s32.totalorder %s251, %s253
    %p257 = scmp.eq.s32.totalorder %s18, 0
    %p258 = por %p256, %p257
    %p259 = scmp.ne.s32.totalorder %s251, %s253
    %p260 = scmp.eq.s32.totalorder %s23, 1
    %p261 = por %p259, %p260
    %p262 = scmp.ne.s32.totalorder %s253, %s254
    %p263 = scmp.eq.s32.totalorder %s23, 0
    %p264 = por %p262, %p263
    %p265 = scmp.ne.s32.totalorder %s253, %s254
    %p266 = scmp.eq.s32.totalorder %s24, 1
    %p267 = por %p265, %p266
    %p269 = scmp.ne.s32.totalorder %s254, %s268
    %p270 = scmp.eq.s32.totalorder %s24, 0
    %p271 = por %p269, %p270
    %s273 = sadd.s32 %s272, 1
    %p276 = scmp.eq.s32.totalorder %s18, 1
    %p277 = scmp.ne.s32.totalorder %s272, %s274
    %p278 = scmp.eq.s32.totalorder %s18, 0
    %p279 = por %p277, %p278
    %p280 = scmp.ne.s32.totalorder %s272, %s274
    %p281 = scmp.eq.s32.totalorder %s23, 1
    %p282 = por %p280, %p281
    %p283 = scmp.ne.s32.totalorder %s274, %s275
    %p284 = scmp.eq.s32.totalorder %s23, 0
    %p285 = por %p283, %p284
    %p286 = scmp.ne.s32.totalorder %s274, %s275
    %p287 = scmp.eq.s32.totalorder %s24, 1
    %p288 = por %p286, %p287
    %p290 = scmp.ne.s32.totalorder %s275, %s289
    %p291 = scmp.eq.s32.totalorder %s24, 0
    %p292 = por %p290, %p291
    %s293 = ssub.s32 %s18, %s25
    %p294 = scmp.eq.s32.totalorder %s293, 0
    %s296 = sadd.s32 %s295, 1
    %s297 = scalar_select %p294, %s295, %s296
    %p300 = pneg %p294
    %p301 = scmp.eq.s32.totalorder %s18, 1
    %p302 = por %p300, %p301
    %p303 = scmp.ne.s32.totalorder %s295, %s298
    %p304 = scmp.eq.s32.totalorder %s18, 0
    %p305 = por %p303, %p304
    %p306 = scmp.ne.s32.totalorder %s295, %s298
    %p307 = scmp.eq.s32.totalorder %s23, 1
    %p308 = por %p306, %p307
    %p309 = scmp.ne.s32.totalorder %s298, %s299
    %p310 = scmp.eq.s32.totalorder %s23, 0
    %p311 = por %p309, %p310
    %p312 = scmp.ne.s32.totalorder %s298, %s299
    %p313 = scmp.eq.s32.totalorder %s24, 1
    %p314 = por %p312, %p313
    %p316 = scmp.ne.s32.totalorder %s299, %s315
    %p317 = scmp.eq.s32.totalorder %s24, 0
    %p318 = por %p316, %p317
    %p319 = scmp.le.s32.totalorder 1, %s18
    %p320 = scmp.lt.s32.totalorder %s18, 3
    %p321 = pnand %p319, %p320
    %p322 = pneg %p321
    // Predicated region
    $region9: #{adapt_forward.4} parent=5 // pred_check
      _
    $region10: #{adapt_forward.4} parent=5 // pred_check_branch
      %324 = sbr.rel (%p321) target = $region12
    $region11: #{adapt_forward.4} parent=5 // pred_region
      %s325 = ssub.s32 %s18, 1
      // Predicated region
      $region13: #{adapt_forward.4} parent=11 // pred_check
        %p326 = pneg %p117
      $region14: #{adapt_forward.4} parent=11 // pred_check_branch
        %328 = sbr.rel (%p326) target = $region16
      $region15: #{adapt_forward.4} parent=11 // pred_region
        _
      $region16: #{adapt_forward.4} parent=11 // pred_fallthru
        _
      // Predicated region
      $region17: #{adapt_forward.4} parent=11 // pred_check
        %p329 = pneg %p138
      $region18: #{adapt_forward.4} parent=11 // pred_check_branch
        %331 = sbr.rel (%p329) target = $region20
      $region19: #{adapt_forward.4} parent=11 // pred_region
        _
      $region20: #{adapt_forward.4} parent=11 // pred_fallthru
        _
      // Predicated region
      $region21: #{adapt_forward.4} parent=11 // pred_check
        %p332 = pneg %p159
      $region22: #{adapt_forward.4} parent=11 // pred_check_branch
        %334 = sbr.rel (%p332) target = $region24
      $region23: #{adapt_forward.4} parent=11 // pred_region
        _
      $region24: #{adapt_forward.4} parent=11 // pred_fallthru
        _
      // Predicated region
      $region25: #{adapt_forward.4} parent=11 // pred_check
        %p335 = pneg %p180
      $region26: #{adapt_forward.4} parent=11 // pred_check_branch
        %337 = sbr.rel (%p335) target = $region28
      $region27: #{adapt_forward.4} parent=11 // pred_region
        _
      $region28: #{adapt_forward.4} parent=11 // pred_fallthru
        _
      // Predicated region
      $region29: #{adapt_forward.4} parent=11 // pred_check
        %p338 = pneg %p201
      $region30: #{adapt_forward.4} parent=11 // pred_check_branch
        %340 = sbr.rel (%p338) target = $region32
      $region31: #{adapt_forward.4} parent=11 // pred_region
        _
      $region32: #{adapt_forward.4} parent=11 // pred_fallthru
        _
      // Predicated region
      $region33: #{adapt_forward.4} parent=11 // pred_check
        %p341 = pneg %p222
      $region34: #{adapt_forward.4} parent=11 // pred_check_branch
        %343 = sbr.rel (%p341) target = $region36
      $region35: #{adapt_forward.4} parent=11 // pred_region
        _
      $region36: #{adapt_forward.4} parent=11 // pred_fallthru
        _
      // Predicated region
      $region37: #{adapt_forward.4} parent=11 // pred_check
        %p344 = pneg %p243
      $region38: #{adapt_forward.4} parent=11 // pred_check_branch
        %346 = sbr.rel (%p344) target = $region40
      $region39: #{adapt_forward.4} parent=11 // pred_region
        _
      $region40: #{adapt_forward.4} parent=11 // pred_fallthru
        _
      // Predicated region
      $region41: #{adapt_forward.4} parent=11 // pred_check
        %p347 = pneg %p264
      $region42: #{adapt_forward.4} parent=11 // pred_check_branch
        %349 = sbr.rel (%p347) target = $region44
      $region43: #{adapt_forward.4} parent=11 // pred_region
        _
      $region44: #{adapt_forward.4} parent=11 // pred_fallthru
        _
      // Predicated region
      $region45: #{adapt_forward.4} parent=11 // pred_check
        %p350 = pneg %p285
      $region46: #{adapt_forward.4} parent=11 // pred_check_branch
        %352 = sbr.rel (%p350) target = $region48
      $region47: #{adapt_forward.4} parent=11 // pred_region
        _
      $region48: #{adapt_forward.4} parent=11 // pred_fallthru
        _
    $region12: #{adapt_forward.4} parent=5 // pred_fallthru
      _
    %p353 = scmp.lt.s32.totalorder %s18, 2
    // Predicated region
    $region49: #{adapt_forward.4} parent=5 // pred_check
      %p354 = pneg %p353
    $region50: #{adapt_forward.4} parent=5 // pred_check_branch
      %356 = sbr.rel (%p354) target = $region52
    $region51: #{adapt_forward.4} parent=5 // pred_region
      // Predicated region
      $region53: #{adapt_forward.4} parent=51 // pred_check
        %p357 = pneg %p38
      $region54: #{adapt_forward.4} parent=51 // pred_check_branch
        %359 = sbr.rel (%p357) target = $region56
      $region55: #{adapt_forward.4} parent=51 // pred_region
        %p360 = scmp.lt.s32.totalorder %s18, 1
        %s361 = scalar_select %p360, %s18, 1
        %s362 = smul.addr %s361, 8
        %s363 = scalar_lea.vmem %s0, %s362
      $region56: #{adapt_forward.4} parent=51 // pred_fallthru
        _
      // Predicated region
      $region57: #{adapt_forward.4} parent=51 // pred_check
        %p364 = pneg %p64
      $region58: #{adapt_forward.4} parent=51 // pred_check_branch
        %366 = sbr.rel (%p364) target = $region60
      $region59: #{adapt_forward.4} parent=51 // pred_region
        %p367 = scmp.lt.s32.totalorder %s18, 1
        %s368 = scalar_select %p367, %s18, 1
        %s369 = smul.addr %s368, 8
        %s370 = scalar_lea.vmem %s1, %s369
      $region60: #{adapt_forward.4} parent=51 // pred_fallthru
        _
      // Predicated region
      $region61: #{adapt_forward.4} parent=51 // pred_check
        %p371 = pneg %p90
      $region62: #{adapt_forward.4} parent=51 // pred_check_branch
        %373 = sbr.rel (%p371) target = $region64
      $region63: #{adapt_forward.4} parent=51 // pred_region
        %p374 = scmp.lt.s32.totalorder %s18, 1
        %s375 = scalar_select %p374, %s18, 1
        %s376 = smul.addr %s375, 8
        %s377 = scalar_lea.vmem %s2, %s376
      $region64: #{adapt_forward.4} parent=51 // pred_fallthru
        _
    $region52: #{adapt_forward.4} parent=5 // pred_fallthru
      _
    %p378 = scmp.le.s32.totalorder 1, %s18
    %p379 = scmp.lt.s32.totalorder %s18, 3
    %p380 = pnand %p378, %p379
    %p381 = pneg %p380
    // Predicated region
    $region65: #{adapt_forward.4} parent=5 // pred_check
      _
    $region66: #{adapt_forward.4} parent=5 // pred_check_branch
      %383 = sbr.rel (%p380) target = $region68
    $region67: #{adapt_forward.4} parent=5 // pred_region
      %s384 = ssub.s32 %s18, 1
      %p385 = scmp.lt.s32.totalorder %s23, 1
      %s386 = scalar_select %p385, %s23, 1
      %s387 = smul.addr %s386, 8
      %s388 = scalar_lea.vmem %s0, %s387
      %p389 = pneg %p44
      %p390 = pneg %p41
      %p391 = scmp.lt.s32.totalorder %s23, 1
      %s392 = scalar_select %p391, %s23, 1
      %s393 = smul.addr %s392, 8
      %s394 = scalar_lea.vmem %s1, %s393
      %p395 = pneg %p70
      %p396 = pneg %p67
      %p397 = scmp.lt.s32.totalorder %s23, 1
      %s398 = scalar_select %p397, %s23, 1
      %s399 = smul.addr %s398, 8
      %s400 = scalar_lea.vmem %s2, %s399
      %p401 = pneg %p96
      %p402 = pneg %p93
      %p403 = pneg %p117
      %p404 = pneg %p114
      %p405 = pneg %p138
      %p406 = pneg %p135
      %p407 = pneg %p159
      %p408 = pneg %p156
      %p409 = pneg %p180
      %p410 = pneg %p177
      %p411 = pneg %p201
      %p412 = pneg %p198
      %p413 = pneg %p222
      %p414 = pneg %p219
      %p415 = pneg %p243
      %p416 = pneg %p240
      %p417 = pneg %p264
      %p418 = pneg %p261
      %p419 = pneg %p285
      %p420 = pneg %p282
      %p421 = pneg %p311
      %p422 = pneg %p308
      %p423 = scmp.lt.s32.totalorder %s23, 1
      %s424 = scalar_select %p423, %s23, 1
      %s425 = smul.addr %s424, 8
      %s426 = smul.addr %s425, 4
      %s427 = scalar_lea.vmem %s12, %s426
      %p428 = scmp.lt.s32.totalorder %s23, 1
      %s429 = scalar_select %p428, %s23, 1
      %s430 = smul.addr %s429, 8
      %s431 = scalar_lea.vmem %s0, %s430
      %p432 = scmp.lt.s32.totalorder %s23, 1
      %s433 = scalar_select %p432, %s23, 1
      %s434 = smul.addr %s433, 8
      %s435 = scalar_lea.vmem %s1, %s434
      %p436 = scmp.lt.s32.totalorder %s23, 1
      %s437 = scalar_select %p436, %s23, 1
      %s438 = smul.addr %s437, 8
      %s439 = scalar_lea.vmem %s2, %s438
      %p440 = scmp.lt.s32.totalorder %s23, 1
      %s441 = scalar_select %p440, %s23, 1
      %s442 = smul.addr %s441, 8
      %s443 = smul.addr %s442, 4
      %s444 = scalar_lea.vmem %s12, %s443
      %v446 = vld [vmem:[%s3] sm:$0xff]
      %v447 = vld [vmem:[%s10] sm:$0x1]
      %v448 = vld [vmem:[%s11] sm:$0x1]
      %v449 = vld [vmem:[%s431] sm:$0xff]
      %v450 = vpack.c.bf16 %v449, %v449
      %v451 = vld [vmem:[%s4] sm:$0xf]
      %v452 = vld [vmem:[%s4 + $0x4] sm:$0x3]
      %v453 = vld [vmem:[%s5] sm:$0x1]
      %v455 = vperm.slane %v453, 0
      %v459 = vunpack.c.l.b16 %v451
      %v460 = vunpack.c.l.b16 %v452
      %v461 = vpack.c.b16 %v460, %v459
      %vm462 = vcmask 89088
      %v464 = vsel %vm462, %v450, 0
      %vm466 = vcmask 1044480
      %vm467 = vcmask 1045504
      %v468 = vsel %vm466, 4294967295, 65535
      %v469 = vsel %vm467, %v468, 0
      %v471 = vand.u32 %v461, %v469
      %473 = vmatpush.bf16.msra.mxu0 0
      %474 = vmatpush.bf16.msra.mxu0 0
      %475 = vmatpush.bf16.msra.mxu0 0
      %476 = vmatpush.bf16.msra.mxu0 0
      %477 = vmatpush.bf16.msra.mxu0 0
      %478 = vmatpush.bf16.msra.mxu0 0
      %479 = vmatpush.bf16.msra.mxu0 0
      %480 = vmatpush.bf16.msra.mxu0 %v471
      %481 = vmatmul.bf16.gmra.mxu0 %v464
      %v482 = vpop.f32.mrf.mxu0
      %v483 = vadd.f32 %v455, %v482
      %v484 = vpop.f32.mrf.mxu0
      %485 = vdwg.mxu0
      %v486 = vadd.f32 %v483, %v446
      %vm487 = vcmask 261120
      %v488 = vsel %vm487, %v486, 0.0
      %489 = vadd.xlane.f32.xlu0 %v488
      %v490 = vpop.xlane.xlu0 %489
      %v491 = vrcp.pop 32.0
      %v492 = vmul.f32 32.0, %v491
      %v493 = vsub.f32 1.0, %v492
      %v494 = vmul.f32 %v491, %v493
      %v495 = vadd.f32 %v491, %v494
      %vm496 = vweird.f32 %v491
      %v497 = vsel %vm496, %v491, %v495
      %v498 = vmul.f32 %v490, %v497
      %v499 = vsub.f32 %v486, %v498
      %v500 = vmul.f32 %v499, %v499
      %v501 = vsel %vm487, %v500, 0.0
      %502 = vadd.xlane.f32.xlu0 %v501
      %v503 = vpop.xlane.xlu0 %502
      %v504 = vmul.f32 %v503, %v497
      %v505 = vadd.f32 %v504, 1e-05
      %v506 = vrsqrt.pop %v505
      %v507 = vmul.f32 %v506, %v505
      %v508 = vmul.f32 %v507, %v506
      %v509 = vmul.f32 0.5, %v508
      %v510 = vsub.f32 1.5, %v509
      %v511 = vmul.f32 %v506, %v510
      %vm512 = vweird.f32 %v505
      %vm513 = vweird.f32 %v506
      %vm514 = vmor %vm512, %vm513
      %v515 = vsel %vm514, %v506, %v511
      %v516 = vmul.f32 %v499, %v515
      %v518 = vperm.slane %v447, 0
      %v520 = vmul.f32 %v516, %v518
      %v522 = vperm.slane %v448, 0
      %v524 = vadd.f32 %v520, %v522
      %v526 = vrot.slane %v524, 1
      %v527 = vrot.slane %v524, 2
      %v528 = vrot.slane %v524, 3
      %v529 = vrot.slane %v524, 4
      %v530 = vrot.slane %v524, 5
      %v531 = vrot.slane %v524, 6
      %v532 = vrot.slane %v524, 7
      %vm540 = vcmask 253952
      %541 = vst.msk [vmem:[%s444] sm:$0x1] %vm540, %v524
      %542 = vst.msk [vmem:[%s444 + $0x4] sm:$0x1] %vm540, %v526
      %543 = vst.msk [vmem:[%s444 + $0x8] sm:$0x1] %vm540, %v527
      %544 = vst.msk [vmem:[%s444 + $0xc] sm:$0x1] %vm540, %v528
      %545 = vst.msk [vmem:[%s444 + $0x10] sm:$0x1] %vm540, %v529
      %546 = vst.msk [vmem:[%s444 + $0x14] sm:$0x1] %vm540, %v530
      %547 = vst.msk [vmem:[%s444 + $0x18] sm:$0x1] %vm540, %v531
      %548 = vst.msk [vmem:[%s444 + $0x1c] sm:$0x1] %vm540, %v532
      %v549 = vld [vmem:[%s439] sm:$0xff]
      %v550 = vpack.c.bf16 %v549, %v549
      %v551 = vld [vmem:[%s8] sm:$0x7]
      %v552 = vld [vmem:[%s9] sm:$0x1]
      %v554 = vperm.slane %v552, 0
      %vm556 = vcmask 39936
      %v558 = vsel %vm556, %v550, 0
      %vm560 = vcmask 1041408
      %vm561 = vcmask 1042432
      %v562 = vsel %vm560, 4294967295, 65535
      %v563 = vsel %vm561, %v562, 0
      %v565 = vand.u32 %v551, %v563
      %567 = vmatpush.bf16.msra.mxu0 0
      %568 = vmatpush.bf16.msra.mxu0 0
      %569 = vmatpush.bf16.msra.mxu0 0
      %570 = vmatpush.bf16.msra.mxu0 0
      %571 = vmatpush.bf16.msra.mxu0 0
      %572 = vmatpush.bf16.msra.mxu0 0
      %573 = vmatpush.bf16.msra.mxu0 0
      %574 = vmatpush.bf16.msra.mxu0 %v565
      %575 = vmatmul.bf16.gmra.mxu0 %v558
      %v576 = vpop.f32.mrf.mxu0
      %v577 = vadd.f32 %v554, %v576
      %v578 = vpop.f32.mrf.mxu0
      %579 = vdwg.mxu0
      %v580 = vadd.f32 %v577, %v446
      %v581 = vsel %vm487, %v580, 0.0
      %582 = vadd.xlane.f32.xlu0 %v581
      %v583 = vpop.xlane.xlu0 %582
      %v584 = vmul.f32 %v583, %v497
      %v585 = vsub.f32 %v580, %v584
      %v586 = vmul.f32 %v585, %v585
      %v587 = vsel %vm487, %v586, 0.0
      %588 = vadd.xlane.f32.xlu0 %v587
      %v589 = vpop.xlane.xlu0 %588
      %v590 = vmul.f32 %v589, %v497
      %v591 = vadd.f32 %v590, 1e-05
      %v592 = vrsqrt.pop %v591
      %v593 = vmul.f32 %v592, %v591
      %v594 = vmul.f32 %v593, %v592
      %v595 = vmul.f32 0.5, %v594
      %v596 = vsub.f32 1.5, %v595
      %v597 = vmul.f32 %v592, %v596
      %vm598 = vweird.f32 %v591
      %vm599 = vweird.f32 %v592
      %vm600 = vmor %vm598, %vm599
      %v601 = vsel %vm600, %v592, %v597
      %v602 = vmul.f32 %v585, %v601
      %v603 = vmul.f32 %v602, %v518
      %v604 = vadd.f32 %v603, %v522
      %v606 = vrot.slane %v604, 1
      %v607 = vrot.slane %v604, 2
      %v608 = vrot.slane %v604, 3
      %v609 = vrot.slane %v604, 4
      %v610 = vrot.slane %v604, 5
      %v611 = vrot.slane %v604, 6
      %v612 = vrot.slane %v604, 7
      %620 = vst.msk [vmem:[%s444 + $0x1] sm:$0x1] %vm540, %v604
      %621 = vst.msk [vmem:[%s444 + $0x5] sm:$0x1] %vm540, %v606
      %622 = vst.msk [vmem:[%s444 + $0x9] sm:$0x1] %vm540, %v607
      %623 = vst.msk [vmem:[%s444 + $0xd] sm:$0x1] %vm540, %v608
      %624 = vst.msk [vmem:[%s444 + $0x11] sm:$0x1] %vm540, %v609
      %625 = vst.msk [vmem:[%s444 + $0x15] sm:$0x1] %vm540, %v610
      %626 = vst.msk [vmem:[%s444 + $0x19] sm:$0x1] %vm540, %v611
      %627 = vst.msk [vmem:[%s444 + $0x1d] sm:$0x1] %vm540, %v612
      %v628 = vld [vmem:[%s435] sm:$0xff]
      %v629 = vpack.c.bf16 %v628, %v628
      %v630 = vld [vmem:[%s6] sm:$0x3]
      %v631 = vld [vmem:[%s7] sm:$0x1]
      %v633 = vperm.slane %v631, 0
      %vm635 = vcmask 23552
      %v637 = vsel %vm635, %v629, 0
      %vm639 = vcmask 1040384
      %v640 = vsel %vm639, 4294967295, 65535
      %v641 = vsel %vm560, %v640, 0
      %v643 = vand.u32 %v630, %v641
      %645 = vmatpush.bf16.msra.mxu0 0
      %646 = vmatpush.bf16.msra.mxu0 0
      %647 = vmatpush.bf16.msra.mxu0 0
      %648 = vmatpush.bf16.msra.mxu0 0
      %649 = vmatpush.bf16.msra.mxu0 0
      %650 = vmatpush.bf16.msra.mxu0 0
      %651 = vmatpush.bf16.msra.mxu0 0
      %652 = vmatpush.bf16.msra.mxu0 %v643
      %653 = vmatmul.bf16.gmra.mxu0 %v637
      %v654 = vpop.f32.mrf.mxu0
      %v655 = vadd.f32 %v633, %v654
      %v656 = vpop.f32.mrf.mxu0
      %657 = vdwg.mxu0
      %v658 = vadd.f32 %v655, %v446
      %v659 = vsel %vm487, %v658, 0.0
      %660 = vadd.xlane.f32.xlu0 %v659
      %v661 = vpop.xlane.xlu0 %660
      %v662 = vmul.f32 %v661, %v497
      %v663 = vsub.f32 %v658, %v662
      %v664 = vmul.f32 %v663, %v663
      %v665 = vsel %vm487, %v664, 0.0
      %666 = vadd.xlane.f32.xlu0 %v665
      %v667 = vpop.xlane.xlu0 %666
      %v668 = vmul.f32 %v667, %v497
      %v669 = vadd.f32 %v668, 1e-05
      %v670 = vrsqrt.pop %v669
      %v671 = vmul.f32 %v670, %v669
      %v672 = vmul.f32 %v671, %v670
      %v673 = vmul.f32 0.5, %v672
      %v674 = vsub.f32 1.5, %v673
      %v675 = vmul.f32 %v670, %v674
      %vm676 = vweird.f32 %v669
      %vm677 = vweird.f32 %v670
      %vm678 = vmor %vm676, %vm677
      %v679 = vsel %vm678, %v670, %v675
      %v680 = vmul.f32 %v663, %v679
      %v681 = vmul.f32 %v680, %v518
      %v682 = vadd.f32 %v681, %v522
      %v684 = vrot.slane %v682, 1
      %v685 = vrot.slane %v682, 2
      %v686 = vrot.slane %v682, 3
      %v687 = vrot.slane %v682, 4
      %v688 = vrot.slane %v682, 5
      %v689 = vrot.slane %v682, 6
      %v690 = vrot.slane %v682, 7
      %698 = vst.msk [vmem:[%s444 + $0x2] sm:$0x1] %vm540, %v682
      %699 = vst.msk [vmem:[%s444 + $0x6] sm:$0x1] %vm540, %v684
      %700 = vst.msk [vmem:[%s444 + $0xa] sm:$0x1] %vm540, %v685
      %701 = vst.msk [vmem:[%s444 + $0xe] sm:$0x1] %vm540, %v686
      %702 = vst.msk [vmem:[%s444 + $0x12] sm:$0x1] %vm540, %v687
      %703 = vst.msk [vmem:[%s444 + $0x16] sm:$0x1] %vm540, %v688
      %704 = vst.msk [vmem:[%s444 + $0x1a] sm:$0x1] %vm540, %v689
      %705 = vst.msk [vmem:[%s444 + $0x1e] sm:$0x1] %vm540, %v690
      %p706 = scmp.lt.s32.totalorder %s23, 1
      %s707 = scalar_select %p706, %s23, 1
      %s708 = smul.addr %s707, 8
      %s709 = smul.addr %s708, 4
      %s710 = scalar_lea.vmem %s12, %s709
      // Predicated region
      $region69: #{adapt_forward.4} parent=67 // pred_check
        %p711 = pneg %p308
      $region70: #{adapt_forward.4} parent=67 // pred_check_branch
        %713 = sbr.rel (%p711) target = $region72
      $region71: #{adapt_forward.4} parent=67 // pred_region
        _
      $region72: #{adapt_forward.4} parent=67 // pred_fallthru
        _
    $region68: #{adapt_forward.4} parent=5 // pred_fallthru
      _
    %p714 = scmp.le.s32.totalorder 2, %s18
    // Predicated region
    $region73: #{adapt_forward.4} parent=5 // pred_check
      %p715 = pneg %p714
    $region74: #{adapt_forward.4} parent=5 // pred_check_branch
      %717 = sbr.rel (%p715) target = $region76
    $region75: #{adapt_forward.4} parent=5 // pred_region
      %s718 = ssub.s32 %s18, 2
      // Predicated region
      $region77: #{adapt_forward.4} parent=75 // pred_check
        %p719 = pneg %p314
      $region78: #{adapt_forward.4} parent=75 // pred_check_branch
        %721 = sbr.rel (%p719) target = $region80
      $region79: #{adapt_forward.4} parent=75 // pred_region
        %p722 = scmp.lt.s32.totalorder %s24, 1
        %s723 = scalar_select %p722, %s24, 1
        %s724 = smul.addr %s723, 8
        %s725 = smul.addr %s724, 4
        %s726 = scalar_lea.vmem %s12, %s725
      $region80: #{adapt_forward.4} parent=75 // pred_fallthru
        _
    $region76: #{adapt_forward.4} parent=5 // pred_fallthru
      _
  $region6: #{adapt_forward.4} parent=0 // loop_footer
    %s22 = sadd.s32 1, %s18
  $region7: #{adapt_forward.4} parent=0 // loop_footer_branch
    %17 = sbr.rel target = $region3
  $region8: #{adapt_forward.4} parent=0 // loop_exit
    _

// kernel: adapt_forward.7
$region0: #{adapt_forward.7}
  #allocation0 [shape = 'u32[]', space=smem, size = 0x4, offset = 0x4, fixed_abs, tag = 'smem constant byte address 0x4 - core index']
  #allocation1 [shape = 'u32[72,128]{1,0:T(1,128)}', space=vmem, size = 0x9000, scoped, tag = 'internal scratch']
  %s0 = inlined_call_operand.vmem [shape: f32[2,8,3,32], index: 0, kind: input, shape index: {}]
  %s1 = inlined_call_operand.vmem [shape: bf16[32,11], index: 1, kind: input, shape index: {}]
  %s2 = inlined_call_operand.vmem [shape: f32[1,11], index: 2, kind: input, shape index: {}]
  %s3 = inlined_call_operand.vmem [shape: bf16[32,3], index: 3, kind: input, shape index: {}]
  %s4 = inlined_call_operand.vmem [shape: f32[1,3], index: 4, kind: input, shape index: {}]
  %s5 = inlined_call_operand.vmem [shape: bf16[32,5], index: 5, kind: input, shape index: {}]
  %s6 = inlined_call_operand.vmem [shape: f32[1,5], index: 6, kind: input, shape index: {}]
  %s7 = inlined_call_operand.hbm [shape: f32[2,8,11], index: 7, kind: output, shape index: {0}]
  %s8 = inlined_call_operand.vmem [shape: f32[2,8,3], index: 8, kind: output, shape index: {1}]
  %s9 = inlined_call_operand.vmem [shape: f32[2,8,5], index: 9, kind: output, shape index: {2}]
  %10 = xla_tuple %s7, %s8, %s9
  %s11 = sld [smem:[#allocation0]]
  $region77: #{adapt_forward.7} parent=0
    _
  %s13 = ssub.s32 1, %s11
  %s14 = scalar_select 0, %s13, %s11
  $region1: #{adapt_forward.7} parent=0
    #allocation2 [shape = 'u8[8192]{0}', space=vmem, size = 0x2000, scoped, tag = 'output window, operand 0']
    #allocation3 [shape = 's32[2]{0}', space=sflag, size = 0x8, scoped, tag = 'scoped memory for adapt_forward.7']
    %15 = vsyncpa [#allocation3], 0
    %s16 = scalar_lea.sflag [#allocation3], 1
    %17 = vsyncpa %s16, 0
    loop: start=0, step=1, limit=4
    $region2: #{adapt_forward.7} parent=1 // loop_pre_header
      _
    $region3: #{adapt_forward.7} parent=1 // loop_header
      %s19 = sphi 0, %s23
      %p20 = scmp.ge.s32.totalorder %s19, 4
      %s29 = sphi 0, %s31
      %s32 = sphi 0, %s29
      %s33 = sphi 0, %s32
      %s49 = sphi 0, %s33
      %s53 = sphi 0, %s53
      %s55 = sphi 0, %s53
      %s56 = sphi 0, %s55
      %s70 = sphi 0, %s56
      %s74 = sphi 0, %s74
      %s76 = sphi 0, %s74
      %s77 = sphi 0, %s76
      %s91 = sphi 0, %s77
      %s95 = sphi 0, %s95
      %s97 = sphi 0, %s95
      %s98 = sphi 0, %s97
      %s112 = sphi 0, %s98
      %s116 = sphi 0, %s116
      %s118 = sphi 0, %s116
      %s119 = sphi 0, %s118
      %s133 = sphi 0, %s119
      %s137 = sphi 0, %s137
      %s139 = sphi 0, %s137
      %s140 = sphi 0, %s139
      %s154 = sphi 0, %s140
      %s158 = sphi 0, %s158
      %s160 = sphi 0, %s158
      %s161 = sphi 0, %s160
      %s175 = sphi 0, %s161
      %s181 = sphi 0, %s183
      %s184 = sphi 0, %s181
      %s185 = sphi 0, %s184
      %s201 = sphi 0, %s185
      %s207 = sphi 0, %s209
      %s210 = sphi 0, %s207
      %s211 = sphi 0, %s210
      %s227 = sphi 0, %s211
      %s233 = sphi 0, %s235
      %s236 = sphi 0, %s233
      %s237 = sphi 0, %s236
      %s253 = sphi 0, %s237
    $region4: #{adapt_forward.7} parent=1 // loop_header_branch
      %22 = sbr.rel (%p20) target = $region8
    $region5: #{adapt_forward.7} parent=1 // loop_body
      %s24 = ssub.s32 %s19, 1
      %s25 = ssub.s32 %s19, 2
      %s26 = sadd.s32 %s19, 1
      %s27 = ssub.s32 %s19, %s26
      %p28 = scmp.eq.s32.totalorder %s27, 0
      %s30 = sadd.s32 %s29, 1
      %s31 = scalar_select %p28, %s29, %s30
      %p34 = pneg %p28
      %p35 = scmp.eq.s32.totalorder %s19, 1
      %p36 = por %p34, %p35
      %p37 = scmp.ne.s32.totalorder %s29, %s32
      %p38 = scmp.eq.s32.totalorder %s19, 0
      %p39 = por %p37, %p38
      %p40 = scmp.ne.s32.totalorder %s29, %s32
      %p41 = scmp.eq.s32.totalorder %s24, 1
      %p42 = por %p40, %p41
      %p43 = scmp.ne.s32.totalorder %s32, %s33
      %p44 = scmp.eq.s32.totalorder %s24, 0
      %p45 = por %p43, %p44
      %p46 = scmp.ne.s32.totalorder %s32, %s33
      %p47 = scmp.eq.s32.totalorder %s25, 1
      %p48 = por %p46, %p47
      %p50 = scmp.ne.s32.totalorder %s33, %s49
      %p51 = scmp.eq.s32.totalorder %s25, 0
      %p52 = por %p50, %p51
      %s54 = sadd.s32 %s53, 1
      %p57 = scmp.eq.s32.totalorder %s19, 1
      %p58 = scmp.ne.s32.totalorder %s53, %s55
      %p59 = scmp.eq.s32.totalorder %s19, 0
      %p60 = por %p58, %p59
      %p61 = scmp.ne.s32.totalorder %s53, %s55
      %p62 = scmp.eq.s32.totalorder %s24, 1
      %p63 = por %p61, %p62
      %p64 = scmp.ne.s32.totalorder %s55, %s56
      %p65 = scmp.eq.s32.totalorder %s24, 0
      %p66 = por %p64, %p65
      %p67 = scmp.ne.s32.totalorder %s55, %s56
      %p68 = scmp.eq.s32.totalorder %s25, 1
      %p69 = por %p67, %p68
      %p71 = scmp.ne.s32.totalorder %s56, %s70
      %p72 = scmp.eq.s32.totalorder %s25, 0
      %p73 = por %p71, %p72
      %s75 = sadd.s32 %s74, 1
      %p78 = scmp.eq.s32.totalorder %s19, 1
      %p79 = scmp.ne.s32.totalorder %s74, %s76
      %p80 = scmp.eq.s32.totalorder %s19, 0
      %p81 = por %p79, %p80
      %p82 = scmp.ne.s32.totalorder %s74, %s76
      %p83 = scmp.eq.s32.totalorder %s24, 1
      %p84 = por %p82, %p83
      %p85 = scmp.ne.s32.totalorder %s76, %s77
      %p86 = scmp.eq.s32.totalorder %s24, 0
      %p87 = por %p85, %p86
      %p88 = scmp.ne.s32.totalorder %s76, %s77
      %p89 = scmp.eq.s32.totalorder %s25, 1
      %p90 = por %p88, %p89
      %p92 = scmp.ne.s32.totalorder %s77, %s91
      %p93 = scmp.eq.s32.totalorder %s25, 0
      %p94 = por %p92, %p93
      %s96 = sadd.s32 %s95, 1
      %p99 = scmp.eq.s32.totalorder %s19, 1
      %p100 = scmp.ne.s32.totalorder %s95, %s97
      %p101 = scmp.eq.s32.totalorder %s19, 0
      %p102 = por %p100, %p101
      %p103 = scmp.ne.s32.totalorder %s95, %s97
      %p104 = scmp.eq.s32.totalorder %s24, 1
      %p105 = por %p103, %p104
      %p106 = scmp.ne.s32.totalorder %s97, %s98
      %p107 = scmp.eq.s32.totalorder %s24, 0
      %p108 = por %p106, %p107
      %p109 = scmp.ne.s32.totalorder %s97, %s98
      %p110 = scmp.eq.s32.totalorder %s25, 1
      %p111 = por %p109, %p110
      %p113 = scmp.ne.s32.totalorder %s98, %s112
      %p114 = scmp.eq.s32.totalorder %s25, 0
      %p115 = por %p113, %p114
      %s117 = sadd.s32 %s116, 1
      %p120 = scmp.eq.s32.totalorder %s19, 1
      %p121 = scmp.ne.s32.totalorder %s116, %s118
      %p122 = scmp.eq.s32.totalorder %s19, 0
      %p123 = por %p121, %p122
      %p124 = scmp.ne.s32.totalorder %s116, %s118
      %p125 = scmp.eq.s32.totalorder %s24, 1
      %p126 = por %p124, %p125
      %p127 = scmp.ne.s32.totalorder %s118, %s119
      %p128 = scmp.eq.s32.totalorder %s24, 0
      %p129 = por %p127, %p128
      %p130 = scmp.ne.s32.totalorder %s118, %s119
      %p131 = scmp.eq.s32.totalorder %s25, 1
      %p132 = por %p130, %p131
      %p134 = scmp.ne.s32.totalorder %s119, %s133
      %p135 = scmp.eq.s32.totalorder %s25, 0
      %p136 = por %p134, %p135
      %s138 = sadd.s32 %s137, 1
      %p141 = scmp.eq.s32.totalorder %s19, 1
      %p142 = scmp.ne.s32.totalorder %s137, %s139
      %p143 = scmp.eq.s32.totalorder %s19, 0
      %p144 = por %p142, %p143
      %p145 = scmp.ne.s32.totalorder %s137, %s139
      %p146 = scmp.eq.s32.totalorder %s24, 1
      %p147 = por %p145, %p146
      %p148 = scmp.ne.s32.totalorder %s139, %s140
      %p149 = scmp.eq.s32.totalorder %s24, 0
      %p150 = por %p148, %p149
      %p151 = scmp.ne.s32.totalorder %s139, %s140
      %p152 = scmp.eq.s32.totalorder %s25, 1
      %p153 = por %p151, %p152
      %p155 = scmp.ne.s32.totalorder %s140, %s154
      %p156 = scmp.eq.s32.totalorder %s25, 0
      %p157 = por %p155, %p156
      %s159 = sadd.s32 %s158, 1
      %p162 = scmp.eq.s32.totalorder %s19, 1
      %p163 = scmp.ne.s32.totalorder %s158, %s160
      %p164 = scmp.eq.s32.totalorder %s19, 0
      %p165 = por %p163, %p164
      %p166 = scmp.ne.s32.totalorder %s158, %s160
      %p167 = scmp.eq.s32.totalorder %s24, 1
      %p168 = por %p166, %p167
      %p169 = scmp.ne.s32.totalorder %s160, %s161
      %p170 = scmp.eq.s32.totalorder %s24, 0
      %p171 = por %p169, %p170
      %p172 = scmp.ne.s32.totalorder %s160, %s161
      %p173 = scmp.eq.s32.totalorder %s25, 1
      %p174 = por %p172, %p173
      %p176 = scmp.ne.s32.totalorder %s161, %s175
      %p177 = scmp.eq.s32.totalorder %s25, 0
      %p178 = por %p176, %p177
      %s179 = ssub.s32 %s19, %s26
      %p180 = scmp.eq.s32.totalorder %s179, 0
      %s182 = sadd.s32 %s181, 1
      %s183 = scalar_select %p180, %s181, %s182
      %p186 = pneg %p180
      %p187 = scmp.eq.s32.totalorder %s19, 1
      %p188 = por %p186, %p187
      %p189 = scmp.ne.s32.totalorder %s181, %s184
      %p190 = scmp.eq.s32.totalorder %s19, 0
      %p191 = por %p189, %p190
      %p192 = scmp.ne.s32.totalorder %s181, %s184
      %p193 = scmp.eq.s32.totalorder %s24, 1
      %p194 = por %p192, %p193
      %p195 = scmp.ne.s32.totalorder %s184, %s185
      %p196 = scmp.eq.s32.totalorder %s24, 0
      %p197 = por %p195, %p196
      %p198 = scmp.ne.s32.totalorder %s184, %s185
      %p199 = scmp.eq.s32.totalorder %s25, 1
      %p200 = por %p198, %p199
      %p202 = scmp.ne.s32.totalorder %s185, %s201
      %p203 = scmp.eq.s32.totalorder %s25, 0
      %p204 = por %p202, %p203
      %s205 = ssub.s32 %s19, %s26
      %p206 = scmp.eq.s32.totalorder %s205, 0
      %s208 = sadd.s32 %s207, 1
      %s209 = scalar_select %p206, %s207, %s208
      %p212 = pneg %p206
      %p213 = scmp.eq.s32.totalorder %s19, 1
      %p214 = por %p212, %p213
      %p215 = scmp.ne.s32.totalorder %s207, %s210
      %p216 = scmp.eq.s32.totalorder %s19, 0
      %p217 = por %p215, %p216
      %p218 = scmp.ne.s32.totalorder %s207, %s210
      %p219 = scmp.eq.s32.totalorder %s24, 1
      %p220 = por %p218, %p219
      %p221 = scmp.ne.s32.totalorder %s210, %s211
      %p222 = scmp.eq.s32.totalorder %s24, 0
      %p223 = por %p221, %p222
      %p224 = scmp.ne.s32.totalorder %s210, %s211
      %p225 = scmp.eq.s32.totalorder %s25, 1
      %p226 = por %p224, %p225
      %p228 = scmp.ne.s32.totalorder %s211, %s227
      %p229 = scmp.eq.s32.totalorder %s25, 0
      %p230 = por %p228, %p229
      %s231 = ssub.s32 %s19, %s26
      %p232 = scmp.eq.s32.totalorder %s231, 0
      %s234 = sadd.s32 %s233, 1
      %s235 = scalar_select %p232, %s233, %s234
      %p238 = pneg %p232
      %p239 = scmp.eq.s32.totalorder %s19, 1
      %p240 = por %p238, %p239
      %p241 = scmp.ne.s32.totalorder %s233, %s236
      %p242 = scmp.eq.s32.totalorder %s19, 0
      %p243 = por %p241, %p242
      %p244 = scmp.ne.s32.totalorder %s233, %s236
      %p245 = scmp.eq.s32.totalorder %s24, 1
      %p246 = por %p244, %p245
      %p247 = scmp.ne.s32.totalorder %s236, %s237
      %p248 = scmp.eq.s32.totalorder %s24, 0
      %p249 = por %p247, %p248
      %p250 = scmp.ne.s32.totalorder %s236, %s237
      %p251 = scmp.eq.s32.totalorder %s25, 1
      %p252 = por %p250, %p251
      %p254 = scmp.ne.s32.totalorder %s237, %s253
      %p255 = scmp.eq.s32.totalorder %s25, 0
      %p256 = por %p254, %p255
      %p257 = scmp.le.s32.totalorder 1, %s19
      %p258 = scmp.lt.s32.totalorder %s19, 3
      %p259 = pnand %p257, %p258
      %p260 = pneg %p259
      // Predicated region
      $region9: #{adapt_forward.7} parent=5 // pred_check
        _
      $region10: #{adapt_forward.7} parent=5 // pred_check_branch
        %262 = sbr.rel (%p259) target = $region12
      $region11: #{adapt_forward.7} parent=5 // pred_region
        %s263 = ssub.s32 %s19, 1
        // Predicated region
        $region13: #{adapt_forward.7} parent=11 // pred_check
          %p264 = pneg %p66
        $region14: #{adapt_forward.7} parent=11 // pred_check_branch
          %266 = sbr.rel (%p264) target = $region16
        $region15: #{adapt_forward.7} parent=11 // pred_region
          _
        $region16: #{adapt_forward.7} parent=11 // pred_fallthru
          _
        // Predicated region
        $region17: #{adapt_forward.7} parent=11 // pred_check
          %p267 = pneg %p87
        $region18: #{adapt_forward.7} parent=11 // pred_check_branch
          %269 = sbr.rel (%p267) target = $region20
        $region19: #{adapt_forward.7} parent=11 // pred_region
          _
        $region20: #{adapt_forward.7} parent=11 // pred_fallthru
          _
        // Predicated region
        $region21: #{adapt_forward.7} parent=11 // pred_check
          %p270 = pneg %p108
        $region22: #{adapt_forward.7} parent=11 // pred_check_branch
          %272 = sbr.rel (%p270) target = $region24
        $region23: #{adapt_forward.7} parent=11 // pred_region
          _
        $region24: #{adapt_forward.7} parent=11 // pred_fallthru
          _
        // Predicated region
        $region25: #{adapt_forward.7} parent=11 // pred_check
          %p273 = pneg %p129
        $region26: #{adapt_forward.7} parent=11 // pred_check_branch
          %275 = sbr.rel (%p273) target = $region28
        $region27: #{adapt_forward.7} parent=11 // pred_region
          _
        $region28: #{adapt_forward.7} parent=11 // pred_fallthru
          _
        // Predicated region
        $region29: #{adapt_forward.7} parent=11 // pred_check
          %p276 = pneg %p150
        $region30: #{adapt_forward.7} parent=11 // pred_check_branch
          %278 = sbr.rel (%p276) target = $region32
        $region31: #{adapt_forward.7} parent=11 // pred_region
          _
        $region32: #{adapt_forward.7} parent=11 // pred_fallthru
          _
        // Predicated region
        $region33: #{adapt_forward.7} parent=11 // pred_check
          %p279 = pneg %p171
        $region34: #{adapt_forward.7} parent=11 // pred_check_branch
          %281 = sbr.rel (%p279) target = $region36
        $region35: #{adapt_forward.7} parent=11 // pred_region
          _
        $region36: #{adapt_forward.7} parent=11 // pred_fallthru
          _
      $region12: #{adapt_forward.7} parent=5 // pred_fallthru
        _
      %p282 = scmp.lt.s32.totalorder %s19, 2
      // Predicated region
      $region37: #{adapt_forward.7} parent=5 // pred_check
        %p283 = pneg %p282
      $region38: #{adapt_forward.7} parent=5 // pred_check_branch
        %285 = sbr.rel (%p283) target = $region40
      $region39: #{adapt_forward.7} parent=5 // pred_region
        // Predicated region
        $region41: #{adapt_forward.7} parent=39 // pred_check
          %p286 = pneg %p39
        $region42: #{adapt_forward.7} parent=39 // pred_check_branch
          %288 = sbr.rel (%p286) target = $region44
        $region43: #{adapt_forward.7} parent=39 // pred_region
          %p289 = scmp.lt.s32.totalorder %s19, 1
          %s290 = scalar_select %p289, %s19, 1
          %s291 = smul.addr %s290, 8
          %s292 = smul.addr %s291, 4
          %s293 = scalar_lea.vmem %s0, %s292
        $region44: #{adapt_forward.7} parent=39 // pred_fallthru
          _
      $region40: #{adapt_forward.7} parent=5 // pred_fallthru
        _
      %p294 = scmp.le.s32.totalorder 1, %s19
      %p295 = scmp.lt.s32.totalorder %s19, 3
      %p296 = pnand %p294, %p295
      %p297 = pneg %p296
      // Predicated region
      $region45: #{adapt_forward.7} parent=5 // pred_check
        _
      $region46: #{adapt_forward.7} parent=5 // pred_check_branch
        %299 = sbr.rel (%p296) target = $region48
      $region47: #{adapt_forward.7} parent=5 // pred_region
        %s300 = ssub.s32 %s19, 1
        %p301 = scmp.lt.s32.totalorder %s24, 1
        %s302 = scalar_select %p301, %s24, 1
        %s303 = smul.addr %s302, 8
        %s304 = smul.addr %s303, 4
        %s305 = scalar_lea.vmem %s0, %s304
        %p306 = pneg %p45
        %p307 = pneg %p42
        %p308 = pneg %p66
        %p309 = pneg %p63
        %p310 = pneg %p87
        %p311 = pneg %p84
        %p312 = pneg %p108
        %p313 = pneg %p105
        %p314 = pneg %p129
        %p315 = pneg %p126
        %p316 = pneg %p150
        %p317 = pneg %p147
        %p318 = pneg %p171
        %p319 = pneg %p168
        %p320 = pneg %p197
        %p321 = pneg %p194
        %s322 = sand.u32 %s184, 1
        %s323 = scalar_lea.sflag [#allocation3], %s322
        %s324 = sand.u32 %s184, 1
        %s325 = smul.addr %s324, 8
        %s326 = scalar_lea.vmem [#allocation2], %s325
        %p327 = pneg %p223
        %p328 = pneg %p220
        %p329 = scmp.lt.s32.totalorder %s24, 1
        %s330 = scalar_select %p329, %s24, 1
        %s331 = smul.addr %s330, 8
        %s332 = scalar_lea.vmem %s8, %s331
        %p333 = pneg %p249
        %p334 = pneg %p246
        %p335 = scmp.lt.s32.totalorder %s24, 1
        %s336 = scalar_select %p335, %s24, 1
        %s337 = smul.addr %s336, 8
        %s338 = scalar_lea.vmem %s9, %s337
        %p339 = scmp.lt.s32.totalorder %s24, 1
        %s340 = scalar_select %p339, %s24, 1
        %s341 = smul.addr %s340, 8
        %s342 = smul.addr %s341, 4
        %s343 = scalar_lea.vmem %s0, %s342
        %p344 = scmp.lt.s32.totalorder %s24, 1
        %s345 = scalar_select %p344, %s24, 1
        %s346 = smul.addr %s345, 8
        %s347 = scalar_lea.vmem %s8, %s346
        %p348 = scmp.lt.s32.totalorder %s24, 1
        %s349 = scalar_select %p348, %s24, 1
        %s350 = smul.addr %s349, 8
        %s351 = scalar_lea.vmem %s9, %s350
        %v353 = vld [vmem:[%s343] sm:$0x1]
        %v354 = vld [vmem:[%s343 + $0x4] sm:$0x1]
        %v355 = vld [vmem:[%s343 + $0x8] sm:$0x1]
        %v356 = vld [vmem:[%s343 + $0xc] sm:$0x1]
        %v357 = vld [vmem:[%s343 + $0x10] sm:$0x1]
        %v358 = vld [vmem:[%s343 + $0x14] sm:$0x1]
        %v359 = vld [vmem:[%s343 + $0x18] sm:$0x1]
        %v360 = vld [vmem:[%s343 + $0x1c] sm:$0x1]
        %v361 = vld [vmem:[%s343 + $0x1] sm:$0x1]
        %v362 = vld [vmem:[%s343 + $0x5] sm:$0x1]
        %v363 = vld [vmem:[%s343 + $0x9] sm:$0x1]
        %v364 = vld [vmem:[%s343 + $0xd] sm:$0x1]
        %v365 = vld [vmem:[%s343 + $0x11] sm:$0x1]
        %v366 = vld [vmem:[%s343 + $0x15] sm:$0x1]
        %v367 = vld [vmem:[%s343 + $0x19] sm:$0x1]
        %v368 = vld [vmem:[%s343 + $0x1d] sm:$0x1]
        %v369 = vld [vmem:[%s343 + $0x2] sm:$0x1]
        %v370 = vld [vmem:[%s343 + $0x6] sm:$0x1]
        %v371 = vld [vmem:[%s343 + $0xa] sm:$0x1]
        %v372 = vld [vmem:[%s343 + $0xe] sm:$0x1]
        %v373 = vld [vmem:[%s343 + $0x12] sm:$0x1]
        %v374 = vld [vmem:[%s343 + $0x16] sm:$0x1]
        %v375 = vld [vmem:[%s343 + $0x1a] sm:$0x1]
        %v376 = vld [vmem:[%s343 + $0x1e] sm:$0x1]
        %v377 = vpack.c.bf16 %v369, %v369
        %v378 = vpack.c.bf16 %v370, %v370
        %v379 = vpack.c.bf16 %v371, %v371
        %v380 = vpack.c.bf16 %v372, %v372
        %v381 = vpack.c.bf16 %v373, %v373
        %v382 = vpack.c.bf16 %v374, %v374
        %v383 = vpack.c.bf16 %v375, %v375
        %v384 = vpack.c.bf16 %v376, %v376
        %v385 = vld [vmem:[%s1] sm:$0xf]
        %v386 = vld [vmem:[%s1 + $0x4] sm:$0xf]
        %v387 = vld [vmem:[%s1 + $0x8] sm:$0xf]
        %v388 = vld [vmem:[%s1 + $0xc] sm:$0xf]
        %v389 = vld [vmem:[%s2] sm:$0x1]
        %v391 = vperm.slane %v389, 0
        %v401 = vunpack.c.l.b16 %v377
        %v402 = vunpack.c.l.b16 %v378
        %v403 = vunpack.c.l.b16 %v379
        %v404 = vunpack.c.l.b16 %v380
        %v405 = vunpack.c.l.b16 %v381
        %v406 = vunpack.c.l.b16 %v382
        %v407 = vunpack.c.l.b16 %v383
        %v408 = vunpack.c.l.b16 %v384
        %v409 = vrot.slane %v402, 7
        %vm410 = vcmask 1041409
        %v411 = vsel %vm410, %v409, %v401
        %v412 = vrot.slane %v403, 6
        %vm413 = vcmask 1042434
        %v414 = vsel %vm413, %v412, %v411
        %v415 = vrot.slane %v404, 5
        %vm416 = vcmask 1043459
        %v417 = vsel %vm416, %v415, %v414
        %v418 = vrot.slane %v405, 4
        %vm419 = vcmask 1044484
        %v420 = vsel %vm419, %v418, %v417
        %v421 = vrot.slane %v406, 3
        %vm422 = vcmask 1045509
        %v423 = vsel %vm422, %v421, %v420
        %v424 = vrot.slane %v407, 2
        %vm425 = vcmask 1046534
        %v426 = vsel %vm425, %v424, %v423
        %v427 = vrot.slane %v408, 1
        %vm428 = vcmask 1047559
        %v429 = vsel %vm428, %v427, %v426
        %v430 = vpack.c.b16 %v429, %v429
        %v435 = vunpack.c.l.b16 %v385
        %v436 = vunpack.c.l.b16 %v386
        %v437 = vunpack.c.l.b16 %v387
        %v438 = vunpack.c.l.b16 %v388
        %v439 = vpack.c.b16 %v436, %v435
        %v440 = vpack.c.b16 %v438, %v437
        %vm443 = vcmask 261120
        %v445 = vsel %vm443, %v430, 0
        %447 = vmatpush.bf16.msra.mxu0 0
        %448 = vmatpush.bf16.msra.mxu0 0
        %449 = vmatpush.bf16.msra.mxu0 0
        %450 = vmatpush.bf16.msra.mxu0 0
        %451 = vmatpush.bf16.msra.mxu0 0
        %452 = vmatpush.bf16.msra.mxu0 0
        %453 = vmatpush.bf16.msra.mxu0 %v440
        %454 = vmatpush.bf16.msra.mxu0 %v439
        %455 = vmatmul.bf16.gmra.mxu0 %v445
        %v456 = vpop.f32.mrf.mxu0
        %v457 = vadd.f32 %v391, %v456
        %v458 = vpop.f32.mrf.mxu0
        %459 = vdwg.mxu0
        %vm460 = vcmask 89088
        %461 = vst.msk [vmem:[%s326] sm:$0xff] %vm460, %v457
        %v462 = vpack.c.bf16 %v361, %v361
        %v463 = vpack.c.bf16 %v362, %v362
        %v464 = vpack.c.bf16 %v363, %v363
        %v465 = vpack.c.bf16 %v364, %v364
        %v466 = vpack.c.bf16 %v365, %v365
        %v467 = vpack.c.bf16 %v366, %v366
        %v468 = vpack.c.bf16 %v367, %v367
        %v469 = vpack.c.bf16 %v368, %v368
        %v470 = vld [vmem:[%s3] sm:$0xf]
        %v471 = vld [vmem:[%s3 + $0x4] sm:$0xf]
        %v472 = vld [vmem:[%s3 + $0x8] sm:$0xf]
        %v473 = vld [vmem:[%s3 + $0xc] sm:$0xf]
        %v474 = vld [vmem:[%s4] sm:$0x1]
        %v476 = vperm.slane %v474, 0
        %v486 = vunpack.c.l.b16 %v462
        %v487 = vunpack.c.l.b16 %v463
        %v488 = vunpack.c.l.b16 %v464
        %v489 = vunpack.c.l.b16 %v465
        %v490 = vunpack.c.l.b16 %v466
        %v491 = vunpack.c.l.b16 %v467
        %v492 = vunpack.c.l.b16 %v468
        %v493 = vunpack.c.l.b16 %v469
        %v494 = vrot.slane %v487, 7
        %v495 = vsel %vm410, %v494, %v486
        %v496 = vrot.slane %v488, 6
        %v497 = vsel %vm413, %v496, %v495
        %v498 = vrot.slane %v489, 5
        %v499 = vsel %vm416, %v498, %v497
        %v500 = vrot.slane %v490, 4
        %v501 = vsel %vm419, %v500, %v499
        %v502 = vrot.slane %v491, 3
        %v503 = vsel %vm422, %v502, %v501
        %v504 = vrot.slane %v492, 2
        %v505 = vsel %vm425, %v504, %v503
        %v506 = vrot.slane %v493, 1
        %v507 = vsel %vm428, %v506, %v505
        %v508 = vpack.c.b16 %v507, %v507
        %v513 = vunpack.c.l.b16 %v470
        %v514 = vunpack.c.l.b16 %v471
        %v515 = vunpack.c.l.b16 %v472
        %v516 = vunpack.c.l.b16 %v473
        %v517 = vpack.c.b16 %v514, %v513
        %v518 = vpack.c.b16 %v516, %v515
        %v522 = vsel %vm443, %v508, 0
        %524 = vmatpush.bf16.msra.mxu0 0
        %525 = vmatpush.bf16.msra.mxu0 0
        %526 = vmatpush.bf16.msra.mxu0 0
        %527 = vmatpush.bf16.msra.mxu0 0
        %528 = vmatpush.bf16.msra.mxu0 0
        %529 = vmatpush.bf16.msra.mxu0 0
        %530 = vmatpush.bf16.msra.mxu0 %v518
        %531 = vmatpush.bf16.msra.mxu0 %v517
        %532 = vmatmul.bf16.gmra.mxu0 %v522
        %v533 = vpop.f32.mrf.mxu0
        %v534 = vadd.f32 %v476, %v533
        %v535 = vpop.f32.mrf.mxu0
        %536 = vdwg.mxu0
        %vm537 = vcmask 23552
        %538 = vst.msk [vmem:[%s347] sm:$0xff] %vm537, %v534
        %v539 = vpack.c.bf16 %v353, %v353
        %v540 = vpack.c.bf16 %v354, %v354
        %v541 = vpack.c.bf16 %v355, %v355
        %v542 = vpack.c.bf16 %v356, %v356
        %v543 = vpack.c.bf16 %v357, %v357
        %v544 = vpack.c.bf16 %v358, %v358
        %v545 = vpack.c.bf16 %v359, %v359
        %v546 = vpack.c.bf16 %v360, %v360
        %v547 = vld [vmem:[%s5] sm:$0xf]
        %v548 = vld [vmem:[%s5 + $0x4] sm:$0xf]
        %v549 = vld [vmem:[%s5 + $0x8] sm:$0xf]
        %v550 = vld [vmem:[%s5 + $0xc] sm:$0xf]
        %v551 = vld [vmem:[%s6] sm:$0x1]
        %v553 = vperm.slane %v551, 0
        %v563 = vunpack.c.l.b16 %v539
        %v564 = vunpack.c.l.b16 %v540
        %v565 = vunpack.c.l.b16 %v541
        %v566 = vunpack.c.l.b16 %v542
        %v567 = vunpack.c.l.b16 %v543
        %v568 = vunpack.c.l.b16 %v544
        %v569 = vunpack.c.l.b16 %v545
        %v570 = vunpack.c.l.b16 %v546
        %v571 = vrot.slane %v564, 7
        %v572 = vsel %vm410, %v571, %v563
        %v573 = vrot.slane %v565, 6
        %v574 = vsel %vm413, %v573, %v572
        %v575 = vrot.slane %v566, 5
        %v576 = vsel %vm416, %v575, %v574
        %v577 = vrot.slane %v567, 4
        %v578 = vsel %vm419, %v577, %v576
        %v579 = vrot.slane %v568, 3
        %v580 = vsel %vm422, %v579, %v578
        %v581 = vrot.slane %v569, 2
        %v582 = vsel %vm425, %v581, %v580
        %v583 = vrot.slane %v570, 1
        %v584 = vsel %vm428, %v583, %v582
        %v585 = vpack.c.b16 %v584, %v584
        %v590 = vunpack.c.l.b16 %v547
        %v591 = vunpack.c.l.b16 %v548
        %v592 = vunpack.c.l.b16 %v549
        %v593 = vunpack.c.l.b16 %v550
        %v594 = vpack.c.b16 %v591, %v590
        %v595 = vpack.c.b16 %v593, %v592
        %v599 = vsel %vm443, %v585, 0
        %601 = vmatpush.bf16.msra.mxu0 0
        %602 = vmatpush.bf16.msra.mxu0 0
        %603 = vmatpush.bf16.msra.mxu0 0
        %604 = vmatpush.bf16.msra.mxu0 0
        %605 = vmatpush.bf16.msra.mxu0 0
        %606 = vmatpush.bf16.msra.mxu0 0
        %607 = vmatpush.bf16.msra.mxu0 %v595
        %608 = vmatpush.bf16.msra.mxu0 %v594
        %609 = vmatmul.bf16.gmra.mxu0 %v599
        %v610 = vpop.f32.mrf.mxu0
        %v611 = vadd.f32 %v553, %v610
        %v612 = vpop.f32.mrf.mxu0
        %613 = vdwg.mxu0
        %vm614 = vcmask 39936
        %615 = vst.msk [vmem:[%s351] sm:$0xff] %vm614, %v611
        %s616 = sand.u32 %s184, 1
        %s617 = scalar_lea.sflag [#allocation3], %s616
        %s618 = sand.u32 %s184, 1
        %s619 = smul.addr %s618, 8
        %s620 = scalar_lea.vmem [#allocation2], %s619
        %p621 = scmp.lt.s32.totalorder %s24, 1
        %s622 = scalar_select %p621, %s24, 1
        %s623 = smul.addr %s622, 8
        %s624 = scalar_lea.vmem %s8, %s623
        %p625 = scmp.lt.s32.totalorder %s24, 1
        %s626 = scalar_select %p625, %s24, 1
        %s627 = smul.addr %s626, 8
        %s628 = scalar_lea.vmem %s9, %s627
        // Predicated region
        $region49: #{adapt_forward.7} parent=47 // pred_check
          %p629 = pneg %p194
        $region50: #{adapt_forward.7} parent=47 // pred_check_branch
          %631 = sbr.rel (%p629) target = $region52
        $region51: #{adapt_forward.7} parent=47 // pred_region
          %633 = vsyncadd %s617, 0
          %s634 = smul.addr %s24, 8
          %s635 = scalar_lea.hbm %s7, %s634
          %s637 = sshll.u32 %s620, 4
          %s638 = int_to_ptr.vmem [resolvable:$true] %s637
          %s639 = sshll.u32 %s635, 4
          %s640 = int_to_ptr.hbm [resolvable:$true] %s639
          %642 = dma.vmem_to_hbm [thread:$0]  %s638, 128, %s640, %s617
        $region52: #{adapt_forward.7} parent=47 // pred_fallthru
          _
        // Predicated region
        $region53: #{adapt_forward.7} parent=47 // pred_check
          %p643 = pneg %p220
        $region54: #{adapt_forward.7} parent=47 // pred_check_branch
          %645 = sbr.rel (%p643) target = $region56
        $region55: #{adapt_forward.7} parent=47 // pred_region
          _
        $region56: #{adapt_forward.7} parent=47 // pred_fallthru
          _
        // Predicated region
        $region57: #{adapt_forward.7} parent=47 // pred_check
          %p646 = pneg %p246
        $region58: #{adapt_forward.7} parent=47 // pred_check_branch
          %648 = sbr.rel (%p646) target = $region60
        $region59: #{adapt_forward.7} parent=47 // pred_region
          _
        $region60: #{adapt_forward.7} parent=47 // pred_fallthru
          _
      $region48: #{adapt_forward.7} parent=5 // pred_fallthru
        _
      %p649 = scmp.le.s32.totalorder 2, %s19
      // Predicated region
      $region61: #{adapt_forward.7} parent=5 // pred_check
        %p650 = pneg %p649
      $region62: #{adapt_forward.7} parent=5 // pred_check_branch
        %652 = sbr.rel (%p650) target = $region64
      $region63: #{adapt_forward.7} parent=5 // pred_region
        %s653 = ssub.s32 %s19, 2
        // Predicated region
        $region65: #{adapt_forward.7} parent=63 // pred_check
          %p654 = pneg %p200
        $region66: #{adapt_forward.7} parent=63 // pred_check_branch
          %656 = sbr.rel (%p654) target = $region68
        $region67: #{adapt_forward.7} parent=63 // pred_region
          %s657 = sand.u32 %s185, 1
          %s658 = scalar_lea.sflag [#allocation3], %s657
          %s659 = sand.u32 %s185, 1
          %s660 = smul.addr %s659, 8
          %s661 = scalar_lea.vmem [#allocation2], %s660
          %663 = dma.done %s658, 128
        $region68: #{adapt_forward.7} parent=63 // pred_fallthru
          _
        // Predicated region
        $region69: #{adapt_forward.7} parent=63 // pred_check
          %p664 = pneg %p226
        $region70: #{adapt_forward.7} parent=63 // pred_check_branch
          %666 = sbr.rel (%p664) target = $region72
        $region71: #{adapt_forward.7} parent=63 // pred_region
          %p667 = scmp.lt.s32.totalorder %s25, 1
          %s668 = scalar_select %p667, %s25, 1
          %s669 = smul.addr %s668, 8
          %s670 = scalar_lea.vmem %s8, %s669
        $region72: #{adapt_forward.7} parent=63 // pred_fallthru
          _
        // Predicated region
        $region73: #{adapt_forward.7} parent=63 // pred_check
          %p671 = pneg %p252
        $region74: #{adapt_forward.7} parent=63 // pred_check_branch
          %673 = sbr.rel (%p671) target = $region76
        $region75: #{adapt_forward.7} parent=63 // pred_region
          %p674 = scmp.lt.s32.totalorder %s25, 1
          %s675 = scalar_select %p674, %s25, 1
          %s676 = smul.addr %s675, 8
          %s677 = scalar_lea.vmem %s9, %s676
        $region76: #{adapt_forward.7} parent=63 // pred_fallthru
          _
      $region64: #{adapt_forward.7} parent=5 // pred_fallthru
        _
    $region6: #{adapt_forward.7} parent=1 // loop_footer
      %s23 = sadd.s32 1, %s19
    $region7: #{adapt_forward.7} parent=1 // loop_footer_branch
      %18 = sbr.rel target = $region3
    $region8: #{adapt_forward.7} parent=1 // loop_exit
      _
    %678 = vsyncpa [#allocation3], 1
    %s679 = scalar_lea.sflag [#allocation3], 1
    %680 = vsyncpa %s679, 1

// kernel: adapt_forward.6
$region0: #{adapt_forward.6}
  #allocation0 [shape = 'u32[]', space=smem, size = 0x4, offset = 0x4, fixed_abs, tag = 'smem constant byte address 0x4 - core index']
  #allocation1 [shape = 'u32[72,128]{1,0:T(1,128)}', space=vmem, size = 0x9000, scoped, tag = 'internal scratch']
  %s0 = inlined_call_operand.vmem [shape: f32[2,24,32], index: 0, kind: input, shape index: {}]
  %s1 = inlined_call_operand.vmem [shape: bf16[32,96], index: 1, kind: input, shape index: {}]
  %s2 = inlined_call_operand.hbm [shape: f32[1,96], index: 2, kind: input, shape index: {}]
  %s3 = inlined_call_operand.vmem [shape: bf16[32,32], index: 3, kind: input, shape index: {}]
  %s4 = inlined_call_operand.hbm [shape: f32[1,32], index: 4, kind: input, shape index: {}]
  %s5 = inlined_call_operand.vmem [shape: f32[1,32], index: 5, kind: input, shape index: {}, may-alias: {5,11}]
  %s6 = inlined_call_operand.vmem [shape: f32[1,32], index: 6, kind: input, shape index: {}, may-alias: {6,12}]
  %s7 = inlined_call_operand.vmem [shape: bf16[32,128], index: 7, kind: input, shape index: {}]
  %s8 = inlined_call_operand.vmem [shape: f32[1,128], index: 8, kind: input, shape index: {}]
  %s9 = inlined_call_operand.vmem [shape: bf16[128,32], index: 9, kind: input, shape index: {}]
  %s10 = inlined_call_operand.vmem [shape: f32[1,32], index: 10, kind: input, shape index: {}]
  %s11 = inlined_call_operand.vmem [shape: f32[1,32], index: 11, kind: input, shape index: {}, may-alias: {5,11}]
  %s12 = inlined_call_operand.vmem [shape: f32[1,32], index: 12, kind: input, shape index: {}, may-alias: {6,12}]
  %s13 = inlined_call_operand.vmem [shape: f32[2,24,32], index: 13, kind: output, shape index: {}]
  %s14 = sld [smem:[#allocation0]]
  $region93: #{adapt_forward.6} parent=0
    _
  %s16 = ssub.s32 1, %s14
  %s17 = scalar_select 0, %s16, %s14
  $region1: #{adapt_forward.6} parent=0
    #allocation2 [shape = 'u8[512]{0}', space=vmem, size = 0x400, scoped, tag = 'input window, operand 2, single buffered']
    #allocation3 [shape = 's32[2]{0}', space=sflag, size = 0x8, scoped, tag = 'scoped memory for adapt_forward.6']
    #allocation4 [shape = 'u8[512]{0}', space=vmem, size = 0x400, scoped, tag = 'input window, operand 4, single buffered']
    #allocation5 [shape = 's32[1]{0}', space=sflag, size = 0x4, scoped, tag = 'scoped memory for adapt_forward.6']
    %18 = vsyncpa [#allocation3], 0
    %19 = vsyncpa [#allocation5], 0
    loop: start=0, step=1, limit=4
    $region2: #{adapt_forward.6} parent=1 // loop_pre_header
      _
    $region3: #{adapt_forward.6} parent=1 // loop_header
      %s21 = sphi 0, %s25
      %p22 = scmp.ge.s32.totalorder %s21, 4
      %s31 = sphi 0, %s33
      %s34 = sphi 0, %s31
      %s35 = sphi 0, %s34
      %s51 = sphi 0, %s35
      %s55 = sphi 0, %s55
      %s57 = sphi 0, %s55
      %s58 = sphi 0, %s57
      %s72 = sphi 0, %s58
      %s76 = sphi 0, %s76
      %s78 = sphi 0, %s76
      %s79 = sphi 0, %s78
      %s93 = sphi 0, %s79
      %s97 = sphi 0, %s97
      %s99 = sphi 0, %s97
      %s100 = sphi 0, %s99
      %s114 = sphi 0, %s100
      %s118 = sphi 0, %s118
      %s120 = sphi 0, %s118
      %s121 = sphi 0, %s120
      %s135 = sphi 0, %s121
      %s139 = sphi 0, %s139
      %s141 = sphi 0, %s139
      %s142 = sphi 0, %s141
      %s156 = sphi 0, %s142
      %s160 = sphi 0, %s160
      %s162 = sphi 0, %s160
      %s163 = sphi 0, %s162
      %s177 = sphi 0, %s163
      %s181 = sphi 0, %s181
      %s183 = sphi 0, %s181
      %s184 = sphi 0, %s183
      %s198 = sphi 0, %s184
      %s202 = sphi 0, %s202
      %s204 = sphi 0, %s202
      %s205 = sphi 0, %s204
      %s219 = sphi 0, %s205
      %s223 = sphi 0, %s223
      %s225 = sphi 0, %s223
      %s226 = sphi 0, %s225
      %s240 = sphi 0, %s226
      %s244 = sphi 0, %s244
      %s246 = sphi 0, %s244
      %s247 = sphi 0, %s246
      %s261 = sphi 0, %s247
      %s265 = sphi 0, %s265
      %s267 = sphi 0, %s265
      %s268 = sphi 0, %s267
      %s282 = sphi 0, %s268
      %s286 = sphi 0, %s286
      %s288 = sphi 0, %s286
      %s289 = sphi 0, %s288
      %s303 = sphi 0, %s289
      %s309 = sphi 0, %s311
      %s312 = sphi 0, %s309
      %s313 = sphi 0, %s312
      %s329 = sphi 0, %s313
    $region4: #{adapt_forward.6} parent=1 // loop_header_branch
      %24 = sbr.rel (%p22) target = $region8
    $region5: #{adapt_forward.6} parent=1 // loop_body
      %s26 = ssub.s32 %s21, 1
      %s27 = ssub.s32 %s21, 2
      %s28 = sadd.s32 %s21, 1
      %s29 = ssub.s32 %s21, %s28
      %p30 = scmp.eq.s32.totalorder %s29, 0
      %s32 = sadd.s32 %s31, 1
      %s33 = scalar_select %p30, %s31, %s32
      %p36 = pneg %p30
      %p37 = scmp.eq.s32.totalorder %s21, 1
      %p38 = por %p36, %p37
      %p39 = scmp.ne.s32.totalorder %s31, %s34
      %p40 = scmp.eq.s32.totalorder %s21, 0
      %p41 = por %p39, %p40
      %p42 = scmp.ne.s32.totalorder %s31, %s34
      %p43 = scmp.eq.s32.totalorder %s26, 1
      %p44 = por %p42, %p43
      %p45 = scmp.ne.s32.totalorder %s34, %s35
      %p46 = scmp.eq.s32.totalorder %s26, 0
      %p47 = por %p45, %p46
      %p48 = scmp.ne.s32.totalorder %s34, %s35
      %p49 = scmp.eq.s32.totalorder %s27, 1
      %p50 = por %p48, %p49
      %p52 = scmp.ne.s32.totalorder %s35, %s51
      %p53 = scmp.eq.s32.totalorder %s27, 0
      %p54 = por %p52, %p53
      %s56 = sadd.s32 %s55, 1
      %p59 = scmp.eq.s32.totalorder %s21, 1
      %p60 = scmp.ne.s32.totalorder %s55, %s57
      %p61 = scmp.eq.s32.totalorder %s21, 0
      %p62 = por %p60, %p61
      %p63 = scmp.ne.s32.totalorder %s55, %s57
      %p64 = scmp.eq.s32.totalorder %s26, 1
      %p65 = por %p63, %p64
      %p66 = scmp.ne.s32.totalorder %s57, %s58
      %p67 = scmp.eq.s32.totalorder %s26, 0
      %p68 = por %p66, %p67
      %p69 = scmp.ne.s32.totalorder %s57, %s58
      %p70 = scmp.eq.s32.totalorder %s27, 1
      %p71 = por %p69, %p70
      %p73 = scmp.ne.s32.totalorder %s58, %s72
      %p74 = scmp.eq.s32.totalorder %s27, 0
      %p75 = por %p73, %p74
      %s77 = sadd.s32 %s76, 1
      %p80 = scmp.eq.s32.totalorder %s21, 1
      %p81 = scmp.ne.s32.totalorder %s76, %s78
      %p82 = scmp.eq.s32.totalorder %s21, 0
      %p83 = por %p81, %p82
      %p84 = scmp.ne.s32.totalorder %s76, %s78
      %p85 = scmp.eq.s32.totalorder %s26, 1
      %p86 = por %p84, %p85
      %p87 = scmp.ne.s32.totalorder %s78, %s79
      %p88 = scmp.eq.s32.totalorder %s26, 0
      %p89 = por %p87, %p88
      %p90 = scmp.ne.s32.totalorder %s78, %s79
      %p91 = scmp.eq.s32.totalorder %s27, 1
      %p92 = por %p90, %p91
      %p94 = scmp.ne.s32.totalorder %s79, %s93
      %p95 = scmp.eq.s32.totalorder %s27, 0
      %p96 = por %p94, %p95
      %s98 = sadd.s32 %s97, 1
      %p101 = scmp.eq.s32.totalorder %s21, 1
      %p102 = scmp.ne.s32.totalorder %s97, %s99
      %p103 = scmp.eq.s32.totalorder %s21, 0
      %p104 = por %p102, %p103
      %p105 = scmp.ne.s32.totalorder %s97, %s99
      %p106 = scmp.eq.s32.totalorder %s26, 1
      %p107 = por %p105, %p106
      %p108 = scmp.ne.s32.totalorder %s99, %s100
      %p109 = scmp.eq.s32.totalorder %s26, 0
      %p110 = por %p108, %p109
      %p111 = scmp.ne.s32.totalorder %s99, %s100
      %p112 = scmp.eq.s32.totalorder %s27, 1
      %p113 = por %p111, %p112
      %p115 = scmp.ne.s32.totalorder %s100, %s114
      %p116 = scmp.eq.s32.totalorder %s27, 0
      %p117 = por %p115, %p116
      %s119 = sadd.s32 %s118, 1
      %p122 = scmp.eq.s32.totalorder %s21, 1
      %p123 = scmp.ne.s32.totalorder %s118, %s120
      %p124 = scmp.eq.s32.totalorder %s21, 0
      %p125 = por %p123, %p124
      %p126 = scmp.ne.s32.totalorder %s118, %s120
      %p127 = scmp.eq.s32.totalorder %s26, 1
      %p128 = por %p126, %p127
      %p129 = scmp.ne.s32.totalorder %s120, %s121
      %p130 = scmp.eq.s32.totalorder %s26, 0
      %p131 = por %p129, %p130
      %p132 = scmp.ne.s32.totalorder %s120, %s121
      %p133 = scmp.eq.s32.totalorder %s27, 1
      %p134 = por %p132, %p133
      %p136 = scmp.ne.s32.totalorder %s121, %s135
      %p137 = scmp.eq.s32.totalorder %s27, 0
      %p138 = por %p136, %p137
      %s140 = sadd.s32 %s139, 1
      %p143 = scmp.eq.s32.totalorder %s21, 1
      %p144 = scmp.ne.s32.totalorder %s139, %s141
      %p145 = scmp.eq.s32.totalorder %s21, 0
      %p146 = por %p144, %p145
      %p147 = scmp.ne.s32.totalorder %s139, %s141
      %p148 = scmp.eq.s32.totalorder %s26, 1
      %p149 = por %p147, %p148
      %p150 = scmp.ne.s32.totalorder %s141, %s142
      %p151 = scmp.eq.s32.totalorder %s26, 0
      %p152 = por %p150, %p151
      %p153 = scmp.ne.s32.totalorder %s141, %s142
      %p154 = scmp.eq.s32.totalorder %s27, 1
      %p155 = por %p153, %p154
      %p157 = scmp.ne.s32.totalorder %s142, %s156
      %p158 = scmp.eq.s32.totalorder %s27, 0
      %p159 = por %p157, %p158
      %s161 = sadd.s32 %s160, 1
      %p164 = scmp.eq.s32.totalorder %s21, 1
      %p165 = scmp.ne.s32.totalorder %s160, %s162
      %p166 = scmp.eq.s32.totalorder %s21, 0
      %p167 = por %p165, %p166
      %p168 = scmp.ne.s32.totalorder %s160, %s162
      %p169 = scmp.eq.s32.totalorder %s26, 1
      %p170 = por %p168, %p169
      %p171 = scmp.ne.s32.totalorder %s162, %s163
      %p172 = scmp.eq.s32.totalorder %s26, 0
      %p173 = por %p171, %p172
      %p174 = scmp.ne.s32.totalorder %s162, %s163
      %p175 = scmp.eq.s32.totalorder %s27, 1
      %p176 = por %p174, %p175
      %p178 = scmp.ne.s32.totalorder %s163, %s177
      %p179 = scmp.eq.s32.totalorder %s27, 0
      %p180 = por %p178, %p179
      %s182 = sadd.s32 %s181, 1
      %p185 = scmp.eq.s32.totalorder %s21, 1
      %p186 = scmp.ne.s32.totalorder %s181, %s183
      %p187 = scmp.eq.s32.totalorder %s21, 0
      %p188 = por %p186, %p187
      %p189 = scmp.ne.s32.totalorder %s181, %s183
      %p190 = scmp.eq.s32.totalorder %s26, 1
      %p191 = por %p189, %p190
      %p192 = scmp.ne.s32.totalorder %s183, %s184
      %p193 = scmp.eq.s32.totalorder %s26, 0
      %p194 = por %p192, %p193
      %p195 = scmp.ne.s32.totalorder %s183, %s184
      %p196 = scmp.eq.s32.totalorder %s27, 1
      %p197 = por %p195, %p196
      %p199 = scmp.ne.s32.totalorder %s184, %s198
      %p200 = scmp.eq.s32.totalorder %s27, 0
      %p201 = por %p199, %p200
      %s203 = sadd.s32 %s202, 1
      %p206 = scmp.eq.s32.totalorder %s21, 1
      %p207 = scmp.ne.s32.totalorder %s202, %s204
      %p208 = scmp.eq.s32.totalorder %s21, 0
      %p209 = por %p207, %p208
      %p210 = scmp.ne.s32.totalorder %s202, %s204
      %p211 = scmp.eq.s32.totalorder %s26, 1
      %p212 = por %p210, %p211
      %p213 = scmp.ne.s32.totalorder %s204, %s205
      %p214 = scmp.eq.s32.totalorder %s26, 0
      %p215 = por %p213, %p214
      %p216 = scmp.ne.s32.totalorder %s204, %s205
      %p217 = scmp.eq.s32.totalorder %s27, 1
      %p218 = por %p216, %p217
      %p220 = scmp.ne.s32.totalorder %s205, %s219
      %p221 = scmp.eq.s32.totalorder %s27, 0
      %p222 = por %p220, %p221
      %s224 = sadd.s32 %s223, 1
      %p227 = scmp.eq.s32.totalorder %s21, 1
      %p228 = scmp.ne.s32.totalorder %s223, %s225
      %p229 = scmp.eq.s32.totalorder %s21, 0
      %p230 = por %p228, %p229
      %p231 = scmp.ne.s32.totalorder %s223, %s225
      %p232 = scmp.eq.s32.totalorder %s26, 1
      %p233 = por %p231, %p232
      %p234 = scmp.ne.s32.totalorder %s225, %s226
      %p235 = scmp.eq.s32.totalorder %s26, 0
      %p236 = por %p234, %p235
      %p237 = scmp.ne.s32.totalorder %s225, %s226
      %p238 = scmp.eq.s32.totalorder %s27, 1
      %p239 = por %p237, %p238
      %p241 = scmp.ne.s32.totalorder %s226, %s240
      %p242 = scmp.eq.s32.totalorder %s27, 0
      %p243 = por %p241, %p242
      %s245 = sadd.s32 %s244, 1
      %p248 = scmp.eq.s32.totalorder %s21, 1
      %p249 = scmp.ne.s32.totalorder %s244, %s246
      %p250 = scmp.eq.s32.totalorder %s21, 0
      %p251 = por %p249, %p250
      %p252 = scmp.ne.s32.totalorder %s244, %s246
      %p253 = scmp.eq.s32.totalorder %s26, 1
      %p254 = por %p252, %p253
      %p255 = scmp.ne.s32.totalorder %s246, %s247
      %p256 = scmp.eq.s32.totalorder %s26, 0
      %p257 = por %p255, %p256
      %p258 = scmp.ne.s32.totalorder %s246, %s247
      %p259 = scmp.eq.s32.totalorder %s27, 1
      %p260 = por %p258, %p259
      %p262 = scmp.ne.s32.totalorder %s247, %s261
      %p263 = scmp.eq.s32.totalorder %s27, 0
      %p264 = por %p262, %p263
      %s266 = sadd.s32 %s265, 1
      %p269 = scmp.eq.s32.totalorder %s21, 1
      %p270 = scmp.ne.s32.totalorder %s265, %s267
      %p271 = scmp.eq.s32.totalorder %s21, 0
      %p272 = por %p270, %p271
      %p273 = scmp.ne.s32.totalorder %s265, %s267
      %p274 = scmp.eq.s32.totalorder %s26, 1
      %p275 = por %p273, %p274
      %p276 = scmp.ne.s32.totalorder %s267, %s268
      %p277 = scmp.eq.s32.totalorder %s26, 0
      %p278 = por %p276, %p277
      %p279 = scmp.ne.s32.totalorder %s267, %s268
      %p280 = scmp.eq.s32.totalorder %s27, 1
      %p281 = por %p279, %p280
      %p283 = scmp.ne.s32.totalorder %s268, %s282
      %p284 = scmp.eq.s32.totalorder %s27, 0
      %p285 = por %p283, %p284
      %s287 = sadd.s32 %s286, 1
      %p290 = scmp.eq.s32.totalorder %s21, 1
      %p291 = scmp.ne.s32.totalorder %s286, %s288
      %p292 = scmp.eq.s32.totalorder %s21, 0
      %p293 = por %p291, %p292
      %p294 = scmp.ne.s32.totalorder %s286, %s288
      %p295 = scmp.eq.s32.totalorder %s26, 1
      %p296 = por %p294, %p295
      %p297 = scmp.ne.s32.totalorder %s288, %s289
      %p298 = scmp.eq.s32.totalorder %s26, 0
      %p299 = por %p297, %p298
      %p300 = scmp.ne.s32.totalorder %s288, %s289
      %p301 = scmp.eq.s32.totalorder %s27, 1
      %p302 = por %p300, %p301
      %p304 = scmp.ne.s32.totalorder %s289, %s303
      %p305 = scmp.eq.s32.totalorder %s27, 0
      %p306 = por %p304, %p305
      %s307 = ssub.s32 %s21, %s28
      %p308 = scmp.eq.s32.totalorder %s307, 0
      %s310 = sadd.s32 %s309, 1
      %s311 = scalar_select %p308, %s309, %s310
      %p314 = pneg %p308
      %p315 = scmp.eq.s32.totalorder %s21, 1
      %p316 = por %p314, %p315
      %p317 = scmp.ne.s32.totalorder %s309, %s312
      %p318 = scmp.eq.s32.totalorder %s21, 0
      %p319 = por %p317, %p318
      %p320 = scmp.ne.s32.totalorder %s309, %s312
      %p321 = scmp.eq.s32.totalorder %s26, 1
      %p322 = por %p320, %p321
      %p323 = scmp.ne.s32.totalorder %s312, %s313
      %p324 = scmp.eq.s32.totalorder %s26, 0
      %p325 = por %p323, %p324
      %p326 = scmp.ne.s32.totalorder %s312, %s313
      %p327 = scmp.eq.s32.totalorder %s27, 1
      %p328 = por %p326, %p327
      %p330 = scmp.ne.s32.totalorder %s313, %s329
      %p331 = scmp.eq.s32.totalorder %s27, 0
      %p332 = por %p330, %p331
      %p333 = scmp.le.s32.totalorder 1, %s21
      %p334 = scmp.lt.s32.totalorder %s21, 3
      %p335 = pnand %p333, %p334
      %p336 = pneg %p335
      // Predicated region
      $region9: #{adapt_forward.6} parent=5 // pred_check
        _
      $region10: #{adapt_forward.6} parent=5 // pred_check_branch
        %338 = sbr.rel (%p335) target = $region12
      $region11: #{adapt_forward.6} parent=5 // pred_region
        %s339 = ssub.s32 %s21, 1
        // Predicated region
        $region13: #{adapt_forward.6} parent=11 // pred_check
          %p340 = pneg %p68
        $region14: #{adapt_forward.6} parent=11 // pred_check_branch
          %342 = sbr.rel (%p340) target = $region16
        $region15: #{adapt_forward.6} parent=11 // pred_region
          _
        $region16: #{adapt_forward.6} parent=11 // pred_fallthru
          _
        // Predicated region
        $region17: #{adapt_forward.6} parent=11 // pred_check
          %p343 = pneg %p89
        $region18: #{adapt_forward.6} parent=11 // pred_check_branch
          %345 = sbr.rel (%p343) target = $region20
        $region19: #{adapt_forward.6} parent=11 // pred_region
          %347 = vsyncadd [#allocation3], 0
          %s349 = sshll.u32 %s2, 4
          %s350 = int_to_ptr.hbm [resolvable:$true] %s349
          %s351 = sshll.u32 [#allocation2], 4
          %s352 = int_to_ptr.vmem [resolvable:$true] %s351
          %354 = dma.hbm_to_vmem [thread:$0]  %s350, 16, %s352, [#allocation3]
        $region20: #{adapt_forward.6} parent=11 // pred_fallthru
          _
        // Predicated region
        $region21: #{adapt_forward.6} parent=11 // pred_check
          %p355 = pneg %p110
        $region22: #{adapt_forward.6} parent=11 // pred_check_branch
          %357 = sbr.rel (%p355) target = $region24
        $region23: #{adapt_forward.6} parent=11 // pred_region
          _
        $region24: #{adapt_forward.6} parent=11 // pred_fallthru
          _
        // Predicated region
        $region25: #{adapt_forward.6} parent=11 // pred_check
          %p358 = pneg %p131
        $region26: #{adapt_forward.6} parent=11 // pred_check_branch
          %360 = sbr.rel (%p358) target = $region28
        $region27: #{adapt_forward.6} parent=11 // pred_region
          %362 = vsyncadd [#allocation5], 0
          %s364 = sshll.u32 %s4, 4
          %s365 = int_to_ptr.hbm [resolvable:$true] %s364
          %s366 = sshll.u32 [#allocation4], 4
          %s367 = int_to_ptr.vmem [resolvable:$true] %s366
          %369 = dma.hbm_to_vmem [thread:$0]  %s365, 16, %s367, [#allocation5]
        $region28: #{adapt_forward.6} parent=11 // pred_fallthru
          _
        // Predicated region
        $region29: #{adapt_forward.6} parent=11 // pred_check
          %p370 = pneg %p152
        $region30: #{adapt_forward.6} parent=11 // pred_check_branch
          %372 = sbr.rel (%p370) target = $region32
        $region31: #{adapt_forward.6} parent=11 // pred_region
          _
        $region32: #{adapt_forward.6} parent=11 // pred_fallthru
          _
        // Predicated region
        $region33: #{adapt_forward.6} parent=11 // pred_check
          %p373 = pneg %p173
        $region34: #{adapt_forward.6} parent=11 // pred_check_branch
          %375 = sbr.rel (%p373) target = $region36
        $region35: #{adapt_forward.6} parent=11 // pred_region
          _
        $region36: #{adapt_forward.6} parent=11 // pred_fallthru
          _
        // Predicated region
        $region37: #{adapt_forward.6} parent=11 // pred_check
          %p376 = pneg %p194
        $region38: #{adapt_forward.6} parent=11 // pred_check_branch
          %378 = sbr.rel (%p376) target = $region40
        $region39: #{adapt_forward.6} parent=11 // pred_region
          _
        $region40: #{adapt_forward.6} parent=11 // pred_fallthru
          _
        // Predicated region
        $region41: #{adapt_forward.6} parent=11 // pred_check
          %p379 = pneg %p215
        $region42: #{adapt_forward.6} parent=11 // pred_check_branch
          %381 = sbr.rel (%p379) target = $region44
        $region43: #{adapt_forward.6} parent=11 // pred_region
          _
        $region44: #{adapt_forward.6} parent=11 // pred_fallthru
          _
        // Predicated region
        $region45: #{adapt_forward.6} parent=11 // pred_check
          %p382 = pneg %p236
        $region46: #{adapt_forward.6} parent=11 // pred_check_branch
          %384 = sbr.rel (%p382) target = $region48
        $region47: #{adapt_forward.6} parent=11 // pred_region
          _
        $region48: #{adapt_forward.6} parent=11 // pred_fallthru
          _
        // Predicated region
        $region49: #{adapt_forward.6} parent=11 // pred_check
          %p385 = pneg %p257
        $region50: #{adapt_forward.6} parent=11 // pred_check_branch
          %387 = sbr.rel (%p385) target = $region52
        $region51: #{adapt_forward.6} parent=11 // pred_region
          _
        $region52: #{adapt_forward.6} parent=11 // pred_fallthru
          _
        // Predicated region
        $region53: #{adapt_forward.6} parent=11 // pred_check
          %p388 = pneg %p278
        $region54: #{adapt_forward.6} parent=11 // pred_check_branch
          %390 = sbr.rel (%p388) target = $region56
        $region55: #{adapt_forward.6} parent=11 // pred_region
          _
        $region56: #{adapt_forward.6} parent=11 // pred_fallthru
          _
        // Predicated region
        $region57: #{adapt_forward.6} parent=11 // pred_check
          %p391 = pneg %p299
        $region58: #{adapt_forward.6} parent=11 // pred_check_branch
          %393 = sbr.rel (%p391) target = $region60
        $region59: #{adapt_forward.6} parent=11 // pred_region
          _
        $region60: #{adapt_forward.6} parent=11 // pred_fallthru
          _
      $region12: #{adapt_forward.6} parent=5 // pred_fallthru
        _
      %p394 = scmp.lt.s32.totalorder %s21, 2
      // Predicated region
      $region61: #{adapt_forward.6} parent=5 // pred_check
        %p395 = pneg %p394
      $region62: #{adapt_forward.6} parent=5 // pred_check_branch
        %397 = sbr.rel (%p395) target = $region64
      $region63: #{adapt_forward.6} parent=5 // pred_region
        // Predicated region
        $region65: #{adapt_forward.6} parent=63 // pred_check
          %p398 = pneg %p41
        $region66: #{adapt_forward.6} parent=63 // pred_check_branch
          %400 = sbr.rel (%p398) target = $region68
        $region67: #{adapt_forward.6} parent=63 // pred_region
          %p401 = scmp.lt.s32.totalorder %s21, 1
          %s402 = scalar_select %p401, %s21, 1
          %s403 = smul.addr %s402, 3
          %s404 = smul.addr %s403, 8
          %s405 = scalar_lea.vmem %s0, %s404
        $region68: #{adapt_forward.6} parent=63 // pred_fallthru
          _
      $region64: #{adapt_forward.6} parent=5 // pred_fallthru
        _
      %p406 = scmp.le.s32.totalorder 1, %s21
      %p407 = scmp.lt.s32.totalorder %s21, 3
      %p408 = pnand %p406, %p407
      %p409 = pneg %p408
      // Predicated region
      $region69: #{adapt_forward.6} parent=5 // pred_check
        _
      $region70: #{adapt_forward.6} parent=5 // pred_check_branch
        %411 = sbr.rel (%p408) target = $region72
      $region71: #{adapt_forward.6} parent=5 // pred_region
        %s412 = ssub.s32 %s21, 1
        // Predicated region
        $region73: #{adapt_forward.6} parent=71 // pred_check
          %p413 = pneg %p89
        $region74: #{adapt_forward.6} parent=71 // pred_check_branch
          %415 = sbr.rel (%p413) target = $region76
        $region75: #{adapt_forward.6} parent=71 // pred_region
          %417 = dma.done [#allocation3], 16
        $region76: #{adapt_forward.6} parent=71 // pred_fallthru
          _
        // Predicated region
        $region77: #{adapt_forward.6} parent=71 // pred_check
          %p418 = pneg %p131
        $region78: #{adapt_forward.6} parent=71 // pred_check_branch
          %420 = sbr.rel (%p418) target = $region80
        $region79: #{adapt_forward.6} parent=71 // pred_region
          %422 = dma.done [#allocation5], 16
        $region80: #{adapt_forward.6} parent=71 // pred_fallthru
          _
        %p423 = scmp.lt.s32.totalorder %s26, 1
        %s424 = scalar_select %p423, %s26, 1
        %s425 = smul.addr %s424, 3
        %s426 = smul.addr %s425, 8
        %s427 = scalar_lea.vmem %s0, %s426
        %p428 = pneg %p47
        %p429 = pneg %p44
        %p430 = pneg %p68
        %p431 = pneg %p65
        %p432 = pneg %p89
        %p433 = pneg %p86
        %p434 = pneg %p110
        %p435 = pneg %p107
        %p436 = pneg %p131
        %p437 = pneg %p128
        %p438 = pneg %p152
        %p439 = pneg %p149
        %p440 = pneg %p173
        %p441 = pneg %p170
        %p442 = pneg %p194
        %p443 = pneg %p191
        %p444 = pneg %p215
        %p445 = pneg %p212
        %p446 = pneg %p236
        %p447 = pneg %p233
        %p448 = pneg %p257
        %p449 = pneg %p254
        %p450 = pneg %p278
        %p451 = pneg %p275
        %p452 = pneg %p299
        %p453 = pneg %p296
        %p454 = pneg %p325
        %p455 = pneg %p322
        %p456 = scmp.lt.s32.totalorder %s26, 1
        %s457 = scalar_select %p456, %s26, 1
        %s458 = smul.addr %s457, 3
        %s459 = smul.addr %s458, 8
        %s460 = scalar_lea.vmem %s13, %s459
        %p461 = scmp.lt.s32.totalorder %s26, 1
        %s462 = scalar_select %p461, %s26, 1
        %s463 = smul.addr %s462, 3
        %s464 = smul.addr %s463, 8
        %s465 = scalar_lea.vmem %s0, %s464
        %p466 = scmp.lt.s32.totalorder %s26, 1
        %s467 = scalar_select %p466, %s26, 1
        %s468 = smul.addr %s467, 3
        %s469 = smul.addr %s468, 8
        %s470 = scalar_lea.vmem %s13, %s469
        %v472 = vld [vmem:[%s465] sm:$0xff]
        %v473 = vld [vmem:[%s465 + $0x8] sm:$0xff]
        %v474 = vld [vmem:[%s465 + $0x10] sm:$0xff]
        %v475 = vpack.c.bf16 %v473, %v472
        %v476 = vpack.c.bf16 %v474, %v474
        %v477 = vld [vmem:[%s1] sm:$0xf]
        %v478 = vld [vmem:[%s1 + $0x4] sm:$0xf]
        %v479 = vld [vmem:[%s1 + $0x8] sm:$0xf]
        %v480 = vld [vmem:[%s1 + $0xc] sm:$0xf]
        %v481 = vld [vmem:[#allocation2] sm:$0x1]
        %v483 = vperm.slane %v481, 0
        %v489 = vunpack.c.l.b16 %v477
        %v490 = vunpack.c.l.b16 %v478
        %v491 = vunpack.c.l.b16 %v479
        %v492 = vunpack.c.l.b16 %v480
        %v493 = vpack.c.b16 %v490, %v489
        %v494 = vpack.c.b16 %v492, %v491
        %vm497 = vcmask 261120
        %v499 = vsel %vm497, %v475, 0
        %v502 = vsel %vm497, %v476, 0
        %504 = vmatpush.bf16.msra.mxu0 0
        %505 = vmatpush.bf16.msra.mxu0 0
        %506 = vmatpush.bf16.msra.mxu0 0
        %507 = vmatpush.bf16.msra.mxu0 0
        %508 = vmatpush.bf16.msra.mxu0 0
        %509 = vmatpush.bf16.msra.mxu0 0
        %510 = vmatpush.bf16.msra.mxu0 %v494
        %511 = vmatpush.bf16.msra.mxu0 %v493
        %512 = vmatmul.bf16.gmra.mxu0 %v499
        %v513 = vpop.f32.mrf.mxu0
        %v514 = vadd.f32 %v483, %v513
        %v515 = vpop.f32.mrf.mxu0
        %v516 = vadd.f32 %v483, %v515
        %517 = vmatmul.bf16.gmra.mxu0 %v502
        %v518 = vpop.f32.mrf.mxu0
        %v519 = vadd.f32 %v483, %v518
        %v520 = vpop.f32.mrf.mxu0
        %521 = vdwg.mxu0
        %v522 = vmul.f32 %v514, 0.25
        %v523 = vmul.f32 %v516, 0.25
        %v524 = vmul.f32 %v519, 0.25
        %v525 = vlaneseq
        %v526 = vshrl.u32 %v525, 7
        %v527 = vadd.s32 %v526, 8
        %v528 = vadd.s32 %v526, 16
        %v529 = vlaneseq
        %v530 = vand.u32 %v529, 127
        %vm531 = vcmp.le.s32.totalorder %v530, %v526
        %vm532 = vcmp.le.s32.totalorder %v530, %v527
        %vm533 = vcmp.le.s32.totalorder %v530, %v528
        %v534 = vpack.c.bf16 %v523, %v522
        %v535 = vpack.c.bf16 %v524, %v524
        %539 = vrot.lane.b32.xlu0 %v514, 96
        %v540 = vpop.permute.xlu0 %539
        %541 = vrot.lane.b32.xlu0 %v516, 96
        %v542 = vpop.permute.xlu0 %541
        %543 = vrot.lane.b32.xlu0 %v519, 96
        %v544 = vpop.permute.xlu0 %543
        %548 = vxpose.xlu0.b32.start [1/16] %v540, 128
        %549 = vxpose.xlu0.b32.cont [2/16] %v542, 128
        %550 = vxpose.xlu0.b32.cont [3/16] %v544, 128
        %551 = vxpose.xlu0.b32.cont [4/16] 0.0, 128
        %552 = vxpose.xlu0.b32.cont [5/16] 0.0, 128
        %553 = vxpose.xlu0.b32.cont [6/16] 0.0, 128
        %554 = vxpose.xlu0.b32.cont [7/16] 0.0, 128
        %555 = vxpose.xlu0.b32.cont [8/16] 0.0, 128
        %556 = vxpose.xlu0.b32.cont [9/16] 0.0, 128
        %557 = vxpose.xlu0.b32.cont [10/16] 0.0, 128
        %558 = vxpose.xlu0.b32.cont [11/16] 0.0, 128
        %559 = vxpose.xlu0.b32.cont [12/16] 0.0, 128
        %560 = vxpose.xlu0.b32.cont [13/16] 0.0, 128
        %561 = vxpose.xlu0.b32.cont [14/16] 0.0, 128
        %562 = vxpose.xlu0.b32.cont [15/16] 0.0, 128
        %563 = vxpose.xlu0.b32.end [16/16] 0.0, 128
        %v564 = vpop.trf.xlu0
        %v565 = vpop.trf.xlu0
        %v566 = vpop.trf.xlu0
        %v567 = vpop.trf.xlu0
        %v568 = vpop.trf.xlu0
        %v569 = vpop.trf.xlu0
        %v570 = vpop.trf.xlu0
        %v571 = vpop.trf.xlu0
        %v572 = vpop.trf.xlu0
        %v573 = vpop.trf.xlu0
        %v574 = vpop.trf.xlu0
        %v575 = vpop.trf.xlu0
        %v576 = vpop.trf.xlu0
        %v577 = vpop.trf.xlu0
        %v578 = vpop.trf.xlu0
        %v579 = vpop.trf.xlu0
        %v580 = vpack.c.bf16 %v565, %v564
        %v581 = vpack.c.bf16 %v516, %v514
        %v582 = vpack.c.bf16 %v519, %v519
        %vm583 = vcmask 130048
        %v585 = vsel %vm583, %v534, 0
        %v588 = vsel %vm583, %v535, 0
        %590 = vmatpush.bf16.msra.mxu0 0
        %591 = vmatpush.bf16.msra.mxu0 0
        %592 = vmatpush.bf16.msra.mxu0 0
        %593 = vmatpush.bf16.msra.mxu0 0
        %594 = vmatpush.bf16.msra.mxu0 0
        %595 = vmatpush.bf16.msra.mxu0 0
        %596 = vmatpush.bf16.msra.mxu0 0
        %597 = vmatpush.bf16.msra.mxu0 %v580
        %598 = vmatmul.bf16.gmra.mxu0 %v585
        %v599 = vpop.f32.mrf.mxu0
        %v600 = vadd.f32 0.0, %v599
        %v601 = vpop.f32.mrf.mxu0
        %v602 = vadd.f32 0.0, %v601
        %603 = vmatmul.bf16.gmra.mxu0 %v588
        %v604 = vpop.f32.mrf.mxu0
        %v605 = vadd.f32 0.0, %v604
        %v606 = vpop.f32.mrf.mxu0
        %607 = vdwg.mxu0
        %v608 = vsel %vm531, %v600, -1e+30
        %v609 = vsel %vm532, %v602, -1e+30
        %v610 = vsel %vm533, %v605, -1e+30
        %vm611 = vcmask 195584
        %v612 = vsel %vm611, %v608, -inf
        %613 = vmax.xlane.f32.xlu0 %v612
        %v614 = vpop.xlane.xlu0 %613
        %v615 = vsel %vm611, %v609, -inf
        %616 = vmax.xlane.f32.xlu0 %v615
        %v617 = vpop.xlane.xlu0 %616
        %v618 = vsel %vm611, %v610, -inf
        %619 = vmax.xlane.f32.xlu0 %v618
        %v620 = vpop.xlane.xlu0 %619
        %v621 = vsub.f32 %v608, %v614
        %v622 = vsub.f32 %v609, %v617
        %v623 = vsub.f32 %v610, %v620
        %v624 = vmul.f32 %v621, 1.442695
        %v625 = vpow.pop %v624
        %v626 = vmul.f32 %v622, 1.442695
        %v627 = vpow.pop %v626
        %v628 = vmul.f32 %v623, 1.442695
        %v629 = vpow.pop %v628
        %v630 = vsel %vm611, %v625, 0.0
        %631 = vadd.xlane.f32.xlu0 %v630
        %v632 = vpop.xlane.xlu0 %631
        %v633 = vsel %vm611, %v627, 0.0
        %634 = vadd.xlane.f32.xlu0 %v633
        %v635 = vpop.xlane.xlu0 %634
        %v636 = vsel %vm611, %v629, 0.0
        %637 = vadd.xlane.f32.xlu0 %v636
        %v638 = vpop.xlane.xlu0 %637
        %v639 = vrcp.pop %v632
        %v640 = vrcp.pop %v635
        %v641 = vrcp.pop %v638
        %v642 = vmul.f32 %v625, %v639
        %v643 = vmul.f32 %v627, %v640
        %v644 = vmul.f32 %v629, %v641
        %v645 = vpack.c.bf16 %v643, %v642
        %v646 = vpack.c.bf16 %v644, %v644
        %649 = vrot.lane.b32.xlu0 %v581, 64
        %v650 = vpop.permute.xlu0 %649
        %651 = vrot.lane.b32.xlu0 %v582, 64
        %v652 = vpop.permute.xlu0 %651
        %v655 = vsel %vm611, %v645, 0
        %v658 = vsel %vm611, %v646, 0
        %vm660 = vcmask 1043456
        %v662 = vsel %vm660, %v652, 0
        %664 = vmatpush.bf16.msra.mxu0 0
        %665 = vmatpush.bf16.msra.mxu0 0
        %666 = vmatpush.bf16.msra.mxu0 0
        %667 = vmatpush.bf16.msra.mxu0 0
        %668 = vmatpush.bf16.msra.mxu0 0
        %669 = vmatpush.bf16.msra.mxu0 0
        %670 = vmatpush.bf16.msra.mxu0 %v662
        %671 = vmatpush.bf16.msra.mxu0 %v650
        %672 = vmatmul.bf16.gmra.mxu0 %v655
        %v673 = vpop.f32.mrf.mxu0
        %v674 = vadd.f32 0.0, %v673
        %v675 = vpop.f32.mrf.mxu0
        %v676 = vadd.f32 0.0, %v675
        %677 = vmatmul.bf16.gmra.mxu0 %v658
        %v678 = vpop.f32.mrf.mxu0
        %v679 = vadd.f32 0.0, %v678
        %v680 = vpop.f32.mrf.mxu0
        %681 = vdwg.mxu0
        %682 = vrot.lane.b32.xlu0 %v514, 80
        %v683 = vpop.permute.xlu0 %682
        %684 = vrot.lane.b32.xlu0 %v516, 80
        %v685 = vpop.permute.xlu0 %684
        %686 = vrot.lane.b32.xlu0 %v519, 80
        %v687 = vpop.permute.xlu0 %686
        %691 = vxpose.xlu0.b32.start [1/16] %v683, 128
        %692 = vxpose.xlu0.b32.cont [2/16] %v685, 128
        %693 = vxpose.xlu0.b32.cont [3/16] %v687, 128
        %694 = vxpose.xlu0.b32.cont [4/16] 0.0, 128
        %695 = vxpose.xlu0.b32.cont [5/16] 0.0, 128
        %696 = vxpose.xlu0.b32.cont [6/16] 0.0, 128
        %697 = vxpose.xlu0.b32.cont [7/16] 0.0, 128
        %698 = vxpose.xlu0.b32.cont [8/16] 0.0, 128
        %699 = vxpose.xlu0.b32.cont [9/16] 0.0, 128
        %700 = vxpose.xlu0.b32.cont [10/16] 0.0, 128
        %701 = vxpose.xlu0.b32.cont [11/16] 0.0, 128
        %702 = vxpose.xlu0.b32.cont [12/16] 0.0, 128
        %703 = vxpose.xlu0.b32.cont [13/16] 0.0, 128
        %704 = vxpose.xlu0.b32.cont [14/16] 0.0, 128
        %705 = vxpose.xlu0.b32.cont [15/16] 0.0, 128
        %706 = vxpose.xlu0.b32.end [16/16] 0.0, 128
        %v707 = vpop.trf.xlu0
        %v708 = vpop.trf.xlu0
        %v709 = vpop.trf.xlu0
        %v710 = vpop.trf.xlu0
        %v711 = vpop.trf.xlu0
        %v712 = vpop.trf.xlu0
        %v713 = vpop.trf.xlu0
        %v714 = vpop.trf.xlu0
        %v715 = vpop.trf.xlu0
        %v716 = vpop.trf.xlu0
        %v717 = vpop.trf.xlu0
        %v718 = vpop.trf.xlu0
        %v719 = vpop.trf.xlu0
        %v720 = vpop.trf.xlu0
        %v721 = vpop.trf.xlu0
        %v722 = vpop.trf.xlu0
        %v723 = vpack.c.bf16 %v708, %v707
        %726 = vrot.lane.b32.xlu0 %v534, 112
        %v727 = vpop.permute.xlu0 %726
        %728 = vrot.lane.b32.xlu0 %v535, 112
        %v729 = vpop.permute.xlu0 %728
        %v731 = vsel %vm583, %v727, 0
        %v734 = vsel %vm583, %v729, 0
        %736 = vmatpush.bf16.msra.mxu0 0
        %737 = vmatpush.bf16.msra.mxu0 0
        %738 = vmatpush.bf16.msra.mxu0 0
        %739 = vmatpush.bf16.msra.mxu0 0
        %740 = vmatpush.bf16.msra.mxu0 0
        %741 = vmatpush.bf16.msra.mxu0 0
        %742 = vmatpush.bf16.msra.mxu0 0
        %743 = vmatpush.bf16.msra.mxu0 %v723
        %744 = vmatmul.bf16.gmra.mxu0 %v731
        %v745 = vpop.f32.mrf.mxu0
        %v746 = vadd.f32 0.0, %v745
        %v747 = vpop.f32.mrf.mxu0
        %v748 = vadd.f32 0.0, %v747
        %749 = vmatmul.bf16.gmra.mxu0 %v734
        %v750 = vpop.f32.mrf.mxu0
        %v751 = vadd.f32 0.0, %v750
        %v752 = vpop.f32.mrf.mxu0
        %753 = vdwg.mxu0
        %v754 = vsel %vm531, %v746, -1e+30
        %v755 = vsel %vm532, %v748, -1e+30
        %v756 = vsel %vm533, %v751, -1e+30
        %v757 = vsel %vm611, %v754, -inf
        %758 = vmax.xlane.f32.xlu0 %v757
        %v759 = vpop.xlane.xlu0 %758
        %v760 = vsel %vm611, %v755, -inf
        %761 = vmax.xlane.f32.xlu0 %v760
        %v762 = vpop.xlane.xlu0 %761
        %v763 = vsel %vm611, %v756, -inf
        %764 = vmax.xlane.f32.xlu0 %v763
        %v765 = vpop.xlane.xlu0 %764
        %v766 = vsub.f32 %v754, %v759
        %v767 = vsub.f32 %v755, %v762
        %v768 = vsub.f32 %v756, %v765
        %v769 = vmul.f32 %v766, 1.442695
        %v770 = vpow.pop %v769
        %v771 = vmul.f32 %v767, 1.442695
        %v772 = vpow.pop %v771
        %v773 = vmul.f32 %v768, 1.442695
        %v774 = vpow.pop %v773
        %v775 = vsel %vm611, %v770, 0.0
        %776 = vadd.xlane.f32.xlu0 %v775
        %v777 = vpop.xlane.xlu0 %776
        %v778 = vsel %vm611, %v772, 0.0
        %779 = vadd.xlane.f32.xlu0 %v778
        %v780 = vpop.xlane.xlu0 %779
        %v781 = vsel %vm611, %v774, 0.0
        %782 = vadd.xlane.f32.xlu0 %v781
        %v783 = vpop.xlane.xlu0 %782
        %v784 = vrcp.pop %v777
        %v785 = vrcp.pop %v780
        %v786 = vrcp.pop %v783
        %v787 = vmul.f32 %v770, %v784
        %v788 = vmul.f32 %v772, %v785
        %v789 = vmul.f32 %v774, %v786
        %v790 = vpack.c.bf16 %v788, %v787
        %v791 = vpack.c.bf16 %v789, %v789
        %792 = vrot.lane.b32.xlu0 %v581, 48
        %v793 = vpop.permute.xlu0 %792
        %794 = vrot.lane.b32.xlu0 %v582, 48
        %v795 = vpop.permute.xlu0 %794
        %v798 = vsel %vm611, %v790, 0
        %v801 = vsel %vm611, %v791, 0
        %v804 = vsel %vm660, %v795, 0
        %806 = vmatpush.bf16.msra.mxu0 0
        %807 = vmatpush.bf16.msra.mxu0 0
        %808 = vmatpush.bf16.msra.mxu0 0
        %809 = vmatpush.bf16.msra.mxu0 0
        %810 = vmatpush.bf16.msra.mxu0 0
        %811 = vmatpush.bf16.msra.mxu0 0
        %812 = vmatpush.bf16.msra.mxu0 %v804
        %813 = vmatpush.bf16.msra.mxu0 %v793
        %814 = vmatmul.bf16.gmra.mxu0 %v798
        %v815 = vpop.f32.mrf.mxu0
        %v816 = vadd.f32 0.0, %v815
        %v817 = vpop.f32.mrf.mxu0
        %v818 = vadd.f32 0.0, %v817
        %819 = vmatmul.bf16.gmra.mxu0 %v801
        %v820 = vpop.f32.mrf.mxu0
        %v821 = vadd.f32 0.0, %v820
        %v822 = vpop.f32.mrf.mxu0
        %823 = vdwg.mxu0
        %827 = vrot.lane.b32.xlu0 %v816, 16
        %v828 = vpop.permute.xlu0 %827
        %829 = vrot.lane.b32.xlu0 %v818, 16
        %v830 = vpop.permute.xlu0 %829
        %831 = vrot.lane.b32.xlu0 %v821, 16
        %v832 = vpop.permute.xlu0 %831
        %v836 = vsel %vm583, %v674, %v828
        %v837 = vsel %vm583, %v676, %v830
        %v838 = vsel %vm583, %v679, %v832
        %v839 = vpack.c.bf16 %v837, %v836
        %v840 = vpack.c.bf16 %v838, %v838
        %v841 = vld [vmem:[%s3] sm:$0xf]
        %v842 = vld [vmem:[%s3 + $0x4] sm:$0xf]
        %v843 = vld [vmem:[%s3 + $0x8] sm:$0xf]
        %v844 = vld [vmem:[%s3 + $0xc] sm:$0xf]
        %v849 = vunpack.c.l.b16 %v841
        %v850 = vunpack.c.l.b16 %v842
        %v851 = vunpack.c.l.b16 %v843
        %v852 = vunpack.c.l.b16 %v844
        %v853 = vpack.c.b16 %v850, %v849
        %v854 = vpack.c.b16 %v852, %v851
        %v858 = vsel %vm497, %v839, 0
        %v861 = vsel %vm497, %v840, 0
        %863 = vmatpush.bf16.msra.mxu0 0
        %864 = vmatpush.bf16.msra.mxu0 0
        %865 = vmatpush.bf16.msra.mxu0 0
        %866 = vmatpush.bf16.msra.mxu0 0
        %867 = vmatpush.bf16.msra.mxu0 0
        %868 = vmatpush.bf16.msra.mxu0 0
        %869 = vmatpush.bf16.msra.mxu0 %v854
        %870 = vmatpush.bf16.msra.mxu0 %v853
        %871 = vmatmul.bf16.gmra.mxu0 %v858
        %v872 = vpop.f32.mrf.mxu0
        %v873 = vadd.f32 0.0, %v872
        %v874 = vpop.f32.mrf.mxu0
        %v875 = vadd.f32 0.0, %v874
        %876 = vmatmul.bf16.gmra.mxu0 %v861
        %v877 = vpop.f32.mrf.mxu0
        %v878 = vadd.f32 0.0, %v877
        %v879 = vpop.f32.mrf.mxu0
        %880 = vdwg.mxu0
        %v881 = vadd.f32 %v472, %v873
        %v882 = vadd.f32 %v473, %v875
        %v883 = vadd.f32 %v474, %v878
        %v884 = vld [vmem:[#allocation4] sm:$0x1]
        %v886 = vperm.slane %v884, 0
        %v888 = vadd.f32 %v881, %v886
        %v889 = vadd.f32 %v882, %v886
        %v890 = vadd.f32 %v883, %v886
        %v891 = vld [vmem:[%s5] sm:$0x1]
        %v892 = vld [vmem:[%s6] sm:$0x1]
        %v893 = vsel %vm497, %v888, 0.0
        %894 = vadd.xlane.f32.xlu0 %v893
        %v895 = vpop.xlane.xlu0 %894
        %v896 = vsel %vm497, %v889, 0.0
        %897 = vadd.xlane.f32.xlu0 %v896
        %v898 = vpop.xlane.xlu0 %897
        %v899 = vsel %vm497, %v890, 0.0
        %900 = vadd.xlane.f32.xlu0 %v899
        %v901 = vpop.xlane.xlu0 %900
        %v902 = vrcp.pop 32.0
        %v903 = vmul.f32 32.0, %v902
        %v904 = vsub.f32 1.0, %v903
        %v905 = vmul.f32 %v902, %v904
        %v906 = vadd.f32 %v902, %v905
        %vm907 = vweird.f32 %v902
        %v908 = vsel %vm907, %v902, %v906
        %v909 = vmul.f32 %v895, %v908
        %v910 = vmul.f32 %v898, %v908
        %v911 = vmul.f32 %v901, %v908
        %v912 = vsub.f32 %v888, %v909
        %v913 = vsub.f32 %v889, %v910
        %v914 = vsub.f32 %v890, %v911
        %v915 = vmul.f32 %v912, %v912
        %v916 = vmul.f32 %v913, %v913
        %v917 = vmul.f32 %v914, %v914
        %v918 = vsel %vm497, %v915, 0.0
        %919 = vadd.xlane.f32.xlu0 %v918
        %v920 = vpop.xlane.xlu0 %919
        %v921 = vsel %vm497, %v916, 0.0
        %922 = vadd.xlane.f32.xlu0 %v921
        %v923 = vpop.xlane.xlu0 %922
        %v924 = vsel %vm497, %v917, 0.0
        %925 = vadd.xlane.f32.xlu0 %v924
        %v926 = vpop.xlane.xlu0 %925
        %v927 = vmul.f32 %v920, %v908
        %v928 = vmul.f32 %v923, %v908
        %v929 = vmul.f32 %v926, %v908
        %v930 = vadd.f32 %v927, 1e-05
        %v931 = vadd.f32 %v928, 1e-05
        %v932 = vadd.f32 %v929, 1e-05
        %v933 = vrsqrt.pop %v930
        %v934 = vmul.f32 %v933, %v930
        %v935 = vmul.f32 %v934, %v933
        %v936 = vmul.f32 0.5, %v935
        %v937 = vsub.f32 1.5, %v936
        %v938 = vmul.f32 %v933, %v937
        %vm939 = vweird.f32 %v930
        %vm940 = vweird.f32 %v933
        %vm941 = vmor %vm939, %vm940
        %v942 = vsel %vm941, %v933, %v938
        %v943 = vrsqrt.pop %v931
        %v944 = vmul.f32 %v943, %v931
        %v945 = vmul.f32 %v944, %v943
        %v946 = vmul.f32 0.5, %v945
        %v947 = vsub.f32 1.5, %v946
        %v948 = vmul.f32 %v943, %v947
        %vm949 = vweird.f32 %v931
        %vm950 = vweird.f32 %v943
        %vm951 = vmor %vm949, %vm950
        %v952 = vsel %vm951, %v943, %v948
        %v953 = vrsqrt.pop %v932
        %v954 = vmul.f32 %v953, %v932
        %v955 = vmul.f32 %v954, %v953
        %v956 = vmul.f32 0.5, %v955
        %v957 = vsub.f32 1.5, %v956
        %v958 = vmul.f32 %v953, %v957
        %vm959 = vweird.f32 %v932
        %vm960 = vweird.f32 %v953
        %vm961 = vmor %vm959, %vm960
        %v962 = vsel %vm961, %v953, %v958
        %v963 = vmul.f32 %v912, %v942
        %v964 = vmul.f32 %v913, %v952
        %v965 = vmul.f32 %v914, %v962
        %v967 = vperm.slane %v891, 0
        %v969 = vmul.f32 %v963, %v967
        %v970 = vmul.f32 %v964, %v967
        %v971 = vmul.f32 %v965, %v967
        %v973 = vperm.slane %v892, 0
        %v975 = vadd.f32 %v969, %v973
        %v976 = vadd.f32 %v970, %v973
        %v977 = vadd.f32 %v971, %v973
        %v978 = vpack.c.bf16 %v976, %v975
        %v979 = vpack.c.bf16 %v977, %v977
        %v980 = vld [vmem:[%s7] sm:$0xf]
        %v981 = vld [vmem:[%s7 + $0x4] sm:$0xf]
        %v982 = vld [vmem:[%s7 + $0x8] sm:$0xf]
        %v983 = vld [vmem:[%s7 + $0xc] sm:$0xf]
        %v984 = vld [vmem:[%s8] sm:$0x1]
        %v986 = vperm.slane %v984, 0
        %v992 = vunpack.c.l.b16 %v980
        %v993 = vunpack.c.l.b16 %v981
        %v994 = vunpack.c.l.b16 %v982
        %v995 = vunpack.c.l.b16 %v983
        %v996 = vpack.c.b16 %v993, %v992
        %v997 = vpack.c.b16 %v995, %v994
        %v1001 = vsel %vm497, %v978, 0
        %v1004 = vsel %vm497, %v979, 0
        %1006 = vmatpush.bf16.msra.mxu0 0
        %1007 = vmatpush.bf16.msra.mxu0 0
        %1008 = vmatpush.bf16.msra.mxu0 0
        %1009 = vmatpush.bf16.msra.mxu0 0
        %1010 = vmatpush.bf16.msra.mxu0 0
        %1011 = vmatpush.bf16.msra.mxu0 0
        %1012 = vmatpush.bf16.msra.mxu0 %v997
        %1013 = vmatpush.bf16.msra.mxu0 %v996
        %1014 = vmatmul.bf16.gmra.mxu0 %v1001
        %v1015 = vpop.f32.mrf.mxu0
        %v1016 = vadd.f32 %v986, %v1015
        %v1017 = vpop.f32.mrf.mxu0
        %v1018 = vadd.f32 %v986, %v1017
        %1019 = vmatmul.bf16.gmra.mxu0 %v1004
        %v1020 = vpop.f32.mrf.mxu0
        %v1021 = vadd.f32 %v986, %v1020
        %v1022 = vpop.f32.mrf.mxu0
        %1023 = vdwg.mxu0
        %v1024 = vmul.f32 %v1016, 0.5
        %v1025 = vmul.f32 %v1018, 0.5
        %v1026 = vmul.f32 %v1021, 0.5
        %v1027 = vmul.f32 %v1016, 0.70710677
        %v1028 = vmul.f32 %v1018, 0.70710677
        %v1029 = vmul.f32 %v1021, 0.70710677
        %v1030 = vmul.f32 %v1027, %v1027
        %v1031 = vmin.f32 16.0, %v1030
        %v1032 = vmul.f32 %v1031, 2.1237322e-06
        %v1033 = vadd.f32 %v1032, 0.00028619796
        %v1034 = vmul.f32 %v1031, %v1033
        %v1035 = vadd.f32 %v1034, 0.0036580483
        %v1036 = vmul.f32 %v1031, %v1035
        %v1037 = vadd.f32 %v1036, 0.05243302
        %v1038 = vmul.f32 %v1031, %v1037
        %v1039 = vadd.f32 %v1038, 0.18741608
        %v1040 = vmul.f32 %v1031, %v1039
        %v1041 = vadd.f32 %v1040, 1.1283791
        %v1042 = vmul.f32 %v1027, %v1041
        %v1043 = vmul.f32 %v1031, 3.8918573e-05
        %v1044 = vadd.f32 %v1043, 0.001143296
        %v1045 = vmul.f32 %v1031, %v1044
        %v1046 = vadd.f32 %v1045, 0.014752088
        %v1047 = vmul.f32 %v1031, %v1046
        %v1048 = vadd.f32 %v1047, 0.112945676
        %v1049 = vmul.f32 %v1031, %v1048
        %v1050 = vadd.f32 %v1049, 0.4994258
        %v1051 = vmul.f32 %v1031, %v1050
        %v1052 = vadd.f32 %v1051, 1.0
        %v1053 = vrcp.pop %v1052
        %v1054 = vmul.f32 %v1052, %v1053
        %v1055 = vsub.f32 1.0, %v1054
        %v1056 = vmul.f32 %v1053, %v1055
        %v1057 = vadd.f32 %v1053, %v1056
        %vm1058 = vweird.f32 %v1052
        %vm1059 = vweird.f32 %v1053
        %vm1060 = vmor %vm1058, %vm1059
        %v1061 = vsel %vm1060, %v1053, %v1057
        %v1062 = vand.u32 2147483647, %v1052
        %vm1063 = vcmp.eq.f32.partialorder %v1062, 8.507059e+37
        %v1064 = vand.u32 %v1052, 2147483648
        %v1065 = vor.u32 1.1754944e-38, %v1064
        %v1066 = vsel %vm1063, %v1065, %v1061
        %v1067 = vmul.f32 %v1042, %v1066
        %v1068 = vmin.f32 %v1067, 1.0
        %v1069 = vmax.f32 %v1068, -1.0
        %v1070 = vmul.f32 %v1028, %v1028
        %v1071 = vmin.f32 16.0, %v1070
        %v1072 = vmul.f32 %v1071, 2.1237322e-06
        %v1073 = vadd.f32 %v1072, 0.00028619796
        %v1074 = vmul.f32 %v1071, %v1073
        %v1075 = vadd.f32 %v1074, 0.0036580483
        %v1076 = vmul.f32 %v1071, %v1075
        %v1077 = vadd.f32 %v1076, 0.05243302
        %v1078 = vmul.f32 %v1071, %v1077
        %v1079 = vadd.f32 %v1078, 0.18741608
        %v1080 = vmul.f32 %v1071, %v1079
        %v1081 = vadd.f32 %v1080, 1.1283791
        %v1082 = vmul.f32 %v1028, %v1081
        %v1083 = vmul.f32 %v1071, 3.8918573e-05
        %v1084 = vadd.f32 %v1083, 0.001143296
        %v1085 = vmul.f32 %v1071, %v1084
        %v1086 = vadd.f32 %v1085, 0.014752088
        %v1087 = vmul.f32 %v1071, %v1086
        %v1088 = vadd.f32 %v1087, 0.112945676
        %v1089 = vmul.f32 %v1071, %v1088
        %v1090 = vadd.f32 %v1089, 0.4994258
        %v1091 = vmul.f32 %v1071, %v1090
        %v1092 = vadd.f32 %v1091, 1.0
        %v1093 = vrcp.pop %v1092
        %v1094 = vmul.f32 %v1092, %v1093
        %v1095 = vsub.f32 1.0, %v1094
        %v1096 = vmul.f32 %v1093, %v1095
        %v1097 = vadd.f32 %v1093, %v1096
        %vm1098 = vweird.f32 %v1092
        %vm1099 = vweird.f32 %v1093
        %vm1100 = vmor %vm1098, %vm1099
        %v1101 = vsel %vm1100, %v1093, %v1097
        %v1102 = vand.u32 2147483647, %v1092
        %vm1103 = vcmp.eq.f32.partialorder %v1102, 8.507059e+37
        %v1104 = vand.u32 %v1092, 2147483648
        %v1105 = vor.u32 1.1754944e-38, %v1104
        %v1106 = vsel %vm1103, %v1105, %v1101
        %v1107 = vmul.f32 %v1082, %v1106
        %v1108 = vmin.f32 %v1107, 1.0
        %v1109 = vmax.f32 %v1108, -1.0
        %v1110 = vmul.f32 %v1029, %v1029
        %v1111 = vmin.f32 16.0, %v1110
        %v1112 = vmul.f32 %v1111, 2.1237322e-06
        %v1113 = vadd.f32 %v1112, 0.00028619796
        %v1114 = vmul.f32 %v1111, %v1113
        %v1115 = vadd.f32 %v1114, 0.0036580483
        %v1116 = vmul.f32 %v1111, %v1115
        %v1117 = vadd.f32 %v1116, 0.05243302
        %v1118 = vmul.f32 %v1111, %v1117
        %v1119 = vadd.f32 %v1118, 0.18741608
        %v1120 = vmul.f32 %v1111, %v1119
        %v1121 = vadd.f32 %v1120, 1.1283791
        %v1122 = vmul.f32 %v1029, %v1121
        %v1123 = vmul.f32 %v1111, 3.8918573e-05
        %v1124 = vadd.f32 %v1123, 0.001143296
        %v1125 = vmul.f32 %v1111, %v1124
        %v1126 = vadd.f32 %v1125, 0.014752088
        %v1127 = vmul.f32 %v1111, %v1126
        %v1128 = vadd.f32 %v1127, 0.112945676
        %v1129 = vmul.f32 %v1111, %v1128
        %v1130 = vadd.f32 %v1129, 0.4994258
        %v1131 = vmul.f32 %v1111, %v1130
        %v1132 = vadd.f32 %v1131, 1.0
        %v1133 = vrcp.pop %v1132
        %v1134 = vmul.f32 %v1132, %v1133
        %v1135 = vsub.f32 1.0, %v1134
        %v1136 = vmul.f32 %v1133, %v1135
        %v1137 = vadd.f32 %v1133, %v1136
        %vm1138 = vweird.f32 %v1132
        %vm1139 = vweird.f32 %v1133
        %vm1140 = vmor %vm1138, %vm1139
        %v1141 = vsel %vm1140, %v1133, %v1137
        %v1142 = vand.u32 2147483647, %v1132
        %vm1143 = vcmp.eq.f32.partialorder %v1142, 8.507059e+37
        %v1144 = vand.u32 %v1132, 2147483648
        %v1145 = vor.u32 1.1754944e-38, %v1144
        %v1146 = vsel %vm1143, %v1145, %v1141
        %v1147 = vmul.f32 %v1122, %v1146
        %v1148 = vmin.f32 %v1147, 1.0
        %v1149 = vmax.f32 %v1148, -1.0
        %v1150 = vadd.f32 %v1069, 1.0
        %v1151 = vadd.f32 %v1109, 1.0
        %v1152 = vadd.f32 %v1149, 1.0
        %v1153 = vmul.f32 %v1024, %v1150
        %v1154 = vmul.f32 %v1025, %v1151
        %v1155 = vmul.f32 %v1026, %v1152
        %v1156 = vpack.c.bf16 %v1154, %v1153
        %v1157 = vpack.c.bf16 %v1155, %v1155
        %v1158 = vld [vmem:[%s9] sm:$0xf]
        %v1159 = vld [vmem:[%s9 + $0x4] sm:$0xf]
        %v1160 = vld [vmem:[%s9 + $0x8] sm:$0xf]
        %v1161 = vld [vmem:[%s9 + $0xc] sm:$0xf]
        %v1162 = vld [vmem:[%s9 + $0x10] sm:$0xf]
        %v1163 = vld [vmem:[%s9 + $0x14] sm:$0xf]
        %v1164 = vld [vmem:[%s9 + $0x18] sm:$0xf]
        %v1165 = vld [vmem:[%s9 + $0x1c] sm:$0xf]
        %v1166 = vld [vmem:[%s9 + $0x20] sm:$0xf]
        %v1167 = vld [vmem:[%s9 + $0x24] sm:$0xf]
        %v1168 = vld [vmem:[%s9 + $0x28] sm:$0xf]
        %v1169 = vld [vmem:[%s9 + $0x2c] sm:$0xf]
        %v1170 = vld [vmem:[%s9 + $0x30] sm:$0xf]
        %v1171 = vld [vmem:[%s9 + $0x34] sm:$0xf]
        %v1172 = vld [vmem:[%s9 + $0x38] sm:$0xf]
        %v1173 = vld [vmem:[%s9 + $0x3c] sm:$0xf]
        %v1190 = vunpack.c.l.b16 %v1158
        %v1191 = vunpack.c.l.b16 %v1159
        %v1192 = vunpack.c.l.b16 %v1160
        %v1193 = vunpack.c.l.b16 %v1161
        %v1194 = vunpack.c.l.b16 %v1162
        %v1195 = vunpack.c.l.b16 %v1163
        %v1196 = vunpack.c.l.b16 %v1164
        %v1197 = vunpack.c.l.b16 %v1165
        %v1198 = vunpack.c.l.b16 %v1166
        %v1199 = vunpack.c.l.b16 %v1167
        %v1200 = vunpack.c.l.b16 %v1168
        %v1201 = vunpack.c.l.b16 %v1169
        %v1202 = vunpack.c.l.b16 %v1170
        %v1203 = vunpack.c.l.b16 %v1171
        %v1204 = vunpack.c.l.b16 %v1172
        %v1205 = vunpack.c.l.b16 %v1173
        %v1206 = vpack.c.b16 %v1191, %v1190
        %v1207 = vpack.c.b16 %v1193, %v1192
        %v1208 = vpack.c.b16 %v1195, %v1194
        %v1209 = vpack.c.b16 %v1197, %v1196
        %v1210 = vpack.c.b16 %v1199, %v1198
        %v1211 = vpack.c.b16 %v1201, %v1200
        %v1212 = vpack.c.b16 %v1203, %v1202
        %v1213 = vpack.c.b16 %v1205, %v1204
        %1222 = vmatpush.bf16.msra.mxu0 %v1213
        %1223 = vmatpush.bf16.msra.mxu0 %v1212
        %1224 = vmatpush.bf16.msra.mxu0 %v1211
        %1225 = vmatpush.bf16.msra.mxu0 %v1210
        %1226 = vmatpush.bf16.msra.mxu0 %v1209
        %1227 = vmatpush.bf16.msra.mxu0 %v1208
        %1228 = vmatpush.bf16.msra.mxu0 %v1207
        %1229 = vmatpush.bf16.msra.mxu0 %v1206
        %1230 = vmatmul.bf16.gmra.mxu0 %v1156
        %v1231 = vpop.f32.mrf.mxu0
        %v1232 = vadd.f32 0.0, %v1231
        %v1233 = vpop.f32.mrf.mxu0
        %v1234 = vadd.f32 0.0, %v1233
        %1235 = vmatmul.bf16.gmra.mxu0 %v1157
        %v1236 = vpop.f32.mrf.mxu0
        %v1237 = vadd.f32 0.0, %v1236
        %v1238 = vpop.f32.mrf.mxu0
        %1239 = vdwg.mxu0
        %v1240 = vadd.f32 %v975, %v1232
        %v1241 = vadd.f32 %v976, %v1234
        %v1242 = vadd.f32 %v977, %v1237
        %v1243 = vld [vmem:[%s10] sm:$0x1]
        %v1245 = vperm.slane %v1243, 0
        %v1247 = vadd.f32 %v1240, %v1245
        %v1248 = vadd.f32 %v1241, %v1245
        %v1249 = vadd.f32 %v1242, %v1245
        %v1250 = vld [vmem:[%s11] sm:$0x1]
        %v1251 = vld [vmem:[%s12] sm:$0x1]
        %v1252 = vsel %vm497, %v1247, 0.0
        %1253 = vadd.xlane.f32.xlu0 %v1252
        %v1254 = vpop.xlane.xlu0 %1253
        %v1255 = vsel %vm497, %v1248, 0.0
        %1256 = vadd.xlane.f32.xlu0 %v1255
        %v1257 = vpop.xlane.xlu0 %1256
        %v1258 = vsel %vm497, %v1249, 0.0
        %1259 = vadd.xlane.f32.xlu0 %v1258
        %v1260 = vpop.xlane.xlu0 %1259
        %v1261 = vmul.f32 %v1254, %v908
        %v1262 = vmul.f32 %v1257, %v908
        %v1263 = vmul.f32 %v1260, %v908
        %v1264 = vsub.f32 %v1247, %v1261
        %v1265 = vsub.f32 %v1248, %v1262
        %v1266 = vsub.f32 %v1249, %v1263
        %v1267 = vmul.f32 %v1264, %v1264
        %v1268 = vmul.f32 %v1265, %v1265
        %v1269 = vmul.f32 %v1266, %v1266
        %v1270 = vsel %vm497, %v1267, 0.0
        %1271 = vadd.xlane.f32.xlu0 %v1270
        %v1272 = vpop.xlane.xlu0 %1271
        %v1273 = vsel %vm497, %v1268, 0.0
        %1274 = vadd.xlane.f32.xlu0 %v1273
        %v1275 = vpop.xlane.xlu0 %1274
        %v1276 = vsel %vm497, %v1269, 0.0
        %1277 = vadd.xlane.f32.xlu0 %v1276
        %v1278 = vpop.xlane.xlu0 %1277
        %v1279 = vmul.f32 %v1272, %v908
        %v1280 = vmul.f32 %v1275, %v908
        %v1281 = vmul.f32 %v1278, %v908
        %v1282 = vadd.f32 %v1279, 1e-05
        %v1283 = vadd.f32 %v1280, 1e-05
        %v1284 = vadd.f32 %v1281, 1e-05
        %v1285 = vrsqrt.pop %v1282
        %v1286 = vmul.f32 %v1285, %v1282
        %v1287 = vmul.f32 %v1286, %v1285
        %v1288 = vmul.f32 0.5, %v1287
        %v1289 = vsub.f32 1.5, %v1288
        %v1290 = vmul.f32 %v1285, %v1289
        %vm1291 = vweird.f32 %v1282
        %vm1292 = vweird.f32 %v1285
        %vm1293 = vmor %vm1291, %vm1292
        %v1294 = vsel %vm1293, %v1285, %v1290
        %v1295 = vrsqrt.pop %v1283
        %v1296 = vmul.f32 %v1295, %v1283
        %v1297 = vmul.f32 %v1296, %v1295
        %v1298 = vmul.f32 0.5, %v1297
        %v1299 = vsub.f32 1.5, %v1298
        %v1300 = vmul.f32 %v1295, %v1299
        %vm1301 = vweird.f32 %v1283
        %vm1302 = vweird.f32 %v1295
        %vm1303 = vmor %vm1301, %vm1302
        %v1304 = vsel %vm1303, %v1295, %v1300
        %v1305 = vrsqrt.pop %v1284
        %v1306 = vmul.f32 %v1305, %v1284
        %v1307 = vmul.f32 %v1306, %v1305
        %v1308 = vmul.f32 0.5, %v1307
        %v1309 = vsub.f32 1.5, %v1308
        %v1310 = vmul.f32 %v1305, %v1309
        %vm1311 = vweird.f32 %v1284
        %vm1312 = vweird.f32 %v1305
        %vm1313 = vmor %vm1311, %vm1312
        %v1314 = vsel %vm1313, %v1305, %v1310
        %v1315 = vmul.f32 %v1264, %v1294
        %v1316 = vmul.f32 %v1265, %v1304
        %v1317 = vmul.f32 %v1266, %v1314
        %v1319 = vperm.slane %v1250, 0
        %v1321 = vmul.f32 %v1315, %v1319
        %v1322 = vmul.f32 %v1316, %v1319
        %v1323 = vmul.f32 %v1317, %v1319
        %v1325 = vperm.slane %v1251, 0
        %v1327 = vadd.f32 %v1321, %v1325
        %v1328 = vadd.f32 %v1322, %v1325
        %v1329 = vadd.f32 %v1323, %v1325
        %1330 = vst.msk [vmem:[%s470] sm:$0xff] %vm497, %v1327
        %1331 = vst.msk [vmem:[%s470 + $0x8] sm:$0xff] %vm497, %v1328
        %1332 = vst.msk [vmem:[%s470 + $0x10] sm:$0xff] %vm497, %v1329
        %p1333 = scmp.lt.s32.totalorder %s26, 1
        %s1334 = scalar_select %p1333, %s26, 1
        %s1335 = smul.addr %s1334, 3
        %s1336 = smul.addr %s1335, 8
        %s1337 = scalar_lea.vmem %s13, %s1336
        // Predicated region
        $region81: #{adapt_forward.6} parent=71 // pred_check
          %p1338 = pneg %p322
        $region82: #{adapt_forward.6} parent=71 // pred_check_branch
          %1340 = sbr.rel (%p1338) target = $region84
        $region83: #{adapt_forward.6} parent=71 // pred_region
          _
        $region84: #{adapt_forward.6} parent=71 // pred_fallthru
          _
      $region72: #{adapt_forward.6} parent=5 // pred_fallthru
        _
      %p1341 = scmp.le.s32.totalorder 2, %s21
      // Predicated region
      $region85: #{adapt_forward.6} parent=5 // pred_check
        %p1342 = pneg %p1341
      $region86: #{adapt_forward.6} parent=5 // pred_check_branch
        %1344 = sbr.rel (%p1342) target = $region88
      $region87: #{adapt_forward.6} parent=5 // pred_region
        %s1345 = ssub.s32 %s21, 2
        // Predicated region
        $region89: #{adapt_forward.6} parent=87 // pred_check
          %p1346 = pneg %p328
        $region90: #{adapt_forward.6} parent=87 // pred_check_branch
          %1348 = sbr.rel (%p1346) target = $region92
        $region91: #{adapt_forward.6} parent=87 // pred_region
          %p1349 = scmp.lt.s32.totalorder %s27, 1
          %s1350 = scalar_select %p1349, %s27, 1
          %s1351 = smul.addr %s1350, 3
          %s1352 = smul.addr %s1351, 8
          %s1353 = scalar_lea.vmem %s13, %s1352
        $region92: #{adapt_forward.6} parent=87 // pred_fallthru
          _
      $region88: #{adapt_forward.6} parent=5 // pred_fallthru
        _
    $region6: #{adapt_forward.6} parent=1 // loop_footer
      %s25 = sadd.s32 1, %s21
    $region7: #{adapt_forward.6} parent=1 // loop_footer_branch
      %20 = sbr.rel target = $region3
    $region8: #{adapt_forward.6} parent=1 // loop_exit
      _
    %1354 = vsyncpa [#allocation3], 1
    %s1355 = scalar_lea.sflag [#allocation3], 1
    %1356 = vsyncpa %s1355, 1
    %1357 = vsyncpa [#allocation5], 1

</llo_original>
